<compile_context>
chip_gen: v6e
topology: v6e:2x2x1
jax: 0.10.0
libtpu: 0.0.40
codegen_flags: <defaults>
</compile_context>

<pallas_src>
import math
import jax
import jax.numpy as jnp
from jax.experimental import pallas as pl
from jax.experimental.pallas import tpu as pltpu

# ---- small model hyper-parameters (consistent with the module's structure) ----
B, S = 2, 8            # batch, sequence length
E = 32                 # emb_dim
H = 4                  # attn_heads
DH = E // H            # head_dim
FF = 2                 # ff_expansion
HID = E * FF
DEPTH = 2              # stack_depth
VOCAB = 100
NUM_CLASSES = 2
LN_EPS = 1e-5

VMEM = pl.BlockSpec(memory_space=pltpu.MemorySpace.VMEM)


# ----------------------------- kernel -----------------------------

def _layernorm(x, gamma, beta):
    # x: (B*S, E), gamma/beta: (1, E) — biased variance + eps inside rsqrt,
    # matching torch.nn.LayerNorm.
    mu = jnp.mean(x, axis=-1, keepdims=True)
    var = jnp.mean((x - mu) ** 2, axis=-1, keepdims=True)
    return (x - mu) * jax.lax.rsqrt(var + LN_EPS) * gamma + beta


def fused_forward_kernel(x_ref, pos_ref,
                         wqkv_ref, bqkv_ref, wo_ref, bo_ref,
                         ln1_g_ref, ln1_b_ref,
                         w1_ref, b1_ref, w2_ref, b2_ref,
                         ln2_g_ref, ln2_b_ref,
                         wout_ref, bout_ref,
                         out_ref):
    # x: (B*S, E) token embeddings; pos: (B*S, E) pre-tiled positional encoding.
    x = x_ref[...] + pos_ref[...]

    scale = 1.0 / math.sqrt(DH)

    def split_heads(m):
        # (B*S, E) -> (H*B, S, DH): static lane slices per head, stacked on a
        # leading axis so attention is a single batched einsum over all heads.
        return jnp.stack(
            [m[:, h * DH:(h + 1) * DH].reshape(B, S, DH) for h in range(H)],
            axis=0).reshape(H * B, S, DH)

    for d in range(DEPTH):                    # static unroll over encoder blocks
        # ---------------- multi-head self-attention ----------------
        qkv = jnp.dot(x, wqkv_ref[d],
                      preferred_element_type=jnp.float32) + bqkv_ref[d]  # (B*S, 3E)

        q = split_heads(qkv[:, :E] * scale)          # scale folded into q
        k = split_heads(qkv[:, E:2 * E])
        v = split_heads(qkv[:, 2 * E:])

        energy = jnp.einsum('bqd,bkd->bqk', q, k,
                            preferred_element_type=jnp.float32)   # (H*B, S, S)
        m_ = jnp.max(energy, axis=-1, keepdims=True)
        p = jnp.exp(energy - m_)
        attn = p * pl.reciprocal(jnp.sum(p, axis=-1, keepdims=True), approx=True)
        ctx = jnp.einsum('bqk,bkd->bqd', attn, v,
                         preferred_element_type=jnp.float32)      # (H*B, S, DH)

        # "concat heads" on the lane axis, then one output-projection matmul.
        ctx = ctx.reshape(H, B, S, DH)
        ctx2 = jnp.concatenate(
            [ctx[h].reshape(B * S, DH) for h in range(H)], axis=1)  # (B*S, E)
        attn_out = jnp.dot(ctx2, wo_ref[d],
                           preferred_element_type=jnp.float32) + bo_ref[d]

        h1 = _layernorm(x + attn_out, ln1_g_ref[d], ln1_b_ref[d])   # (B*S, E)

        # ---------------- feed-forward ----------------
        f = jnp.maximum(
            jnp.dot(h1, w1_ref[d], preferred_element_type=jnp.float32)
            + b1_ref[d], 0.0)
        ff = jnp.dot(f, w2_ref[d],
                     preferred_element_type=jnp.float32) + b2_ref[d]
        x = _layernorm(h1 + ff, ln2_g_ref[d], ln2_b_ref[d])

    # ---------------- mean pool over sequence + classifier ----------------
    pooled = jnp.sum(x.reshape(B, S, E), axis=1) * (1.0 / S)        # (B, E)
    out_ref[...] = (jnp.dot(pooled, wout_ref[...],
                            preferred_element_type=jnp.float32) + bout_ref[...])


# ----------------------------- wrapper -----------------------------

@jax.jit
def emotion_model_forward(token_ids, params):
    # Embedding lookup (gather) is glue, done in plain JAX outside the kernel.
    emb = params['embedding'][token_ids].reshape(B * S, E)   # (B*S, E)
    args = (emb, params['pos_bc'],
            params['wqkv'], params['bqkv'], params['wo'], params['bo'],
            params['ln1_g'], params['ln1_b'],
            params['w1'], params['b1'], params['w2'], params['b2'],
            params['ln2_g'], params['ln2_b'],
            params['w_out'], params['b_out'])
    return pl.pallas_call(
        fused_forward_kernel,
        out_shape=jax.ShapeDtypeStruct((B, NUM_CLASSES), jnp.float32),
        in_specs=[VMEM] * len(args),
        out_specs=VMEM,
    )(*args)


# ----------------------------- parameter init -----------------------------

def init_linear(key, fan_in, fan_out):
    # torch nn.Linear default: U(-1/sqrt(fan_in), 1/sqrt(fan_in)); weights are
    # stored pre-transposed to (in_features, out_features) so kernels compute
    # y = x @ W + b (== torch's x @ W.T + b).
    kw, kb = jax.random.split(key)
    bound = 1.0 / math.sqrt(fan_in)
    w = jax.random.uniform(kw, (fan_in, fan_out), jnp.float32, -bound, bound)
    b = jax.random.uniform(kb, (1, fan_out), jnp.float32, -bound, bound)
    return w, b


def init_params(key):
    k_emb, k_blocks, k_out = jax.random.split(key, 3)
    params = {}
    # torch nn.Embedding default: N(0, 1)
    params['embedding'] = jax.random.normal(k_emb, (VOCAB, E), jnp.float32)

    # sinusoidal positional encoding (same formula as SequencePositionEncoder),
    # pre-tiled to (B*S, E) so the kernel does a plain lane-dense add.
    pos = jnp.arange(S, dtype=jnp.float32)[:, None]
    scaling = jnp.exp(jnp.arange(0, E, 2, dtype=jnp.float32)
                      * (-math.log(10000.0) / E))
    pe = jnp.zeros((S, E), jnp.float32)
    pe = pe.at[:, 0::2].set(jnp.sin(pos * scaling))
    pe = pe.at[:, 1::2].set(jnp.cos(pos * scaling))
    params['pos_bc'] = jnp.tile(pe, (B, 1))

    wqkv, bqkv, wo, bo = [], [], [], []
    ln1_g, ln1_b, w1, b1, w2, b2, ln2_g, ln2_b = ([] for _ in range(8))
    for bk in jax.random.split(k_blocks, DEPTH):
        ks = jax.random.split(bk, 6)
        wq_, bq_ = init_linear(ks[0], E, E)
        wk_, bk_ = init_linear(ks[1], E, E)
        wv_, bv_ = init_linear(ks[2], E, E)
        wo_, bo_ = init_linear(ks[3], E, E)
        w1_, b1_ = init_linear(ks[4], E, HID)
        w2_, b2_ = init_linear(ks[5], HID, E)
        wqkv.append(jnp.concatenate([wq_, wk_, wv_], axis=1))   # (E, 3E) fused QKV
        bqkv.append(jnp.concatenate([bq_, bk_, bv_], axis=1))   # (1, 3E)
        wo.append(wo_); bo.append(bo_)
        ln1_g.append(jnp.ones((1, E), jnp.float32))
        ln1_b.append(jnp.zeros((1, E), jnp.float32))
        w1.append(w1_); b1.append(b1_); w2.append(w2_); b2.append(b2_)
        ln2_g.append(jnp.ones((1, E), jnp.float32))
        ln2_b.append(jnp.zeros((1, E), jnp.float32))

    # stack all per-block weights along a leading DEPTH axis
    params.update(
        wqkv=jnp.stack(wqkv), bqkv=jnp.stack(bqkv),
        wo=jnp.stack(wo), bo=jnp.stack(bo),
        ln1_g=jnp.stack(ln1_g), ln1_b=jnp.stack(ln1_b),
        w1=jnp.stack(w1), b1=jnp.stack(b1),
        w2=jnp.stack(w2), b2=jnp.stack(b2),
        ln2_g=jnp.stack(ln2_g), ln2_b=jnp.stack(ln2_b))

    w_out, b_out = init_linear(k_out, E, NUM_CLASSES)
    params['w_out'] = w_out
    params['b_out'] = b_out
    return params


if __name__ == "__main__":
    key = jax.random.PRNGKey(0)
    k_tok, k_params = jax.random.split(key)
    token_ids = jax.random.randint(k_tok, (B, S), 0, VOCAB, dtype=jnp.int32)
    params = init_params(k_params)

    logits = emotion_model_forward(token_ids, params)
    jax.block_until_ready(logits)
    assert logits.shape == (B, NUM_CLASSES)
    assert bool(jnp.all(jnp.isfinite(logits)))
    print("KERNEL_OK")
</pallas_src>

<mosaic_0001>
module attributes {stable_mosaic.version = 11 : i64} {
  func.func @fused_forward_kernel(%arg0: memref<16x32xf32, #tpu.memory_space<vmem>>, %arg1: memref<16x32xf32, #tpu.memory_space<vmem>>, %arg2: memref<2x32x96xf32, #tpu.memory_space<vmem>>, %arg3: memref<2x1x96xf32, #tpu.memory_space<vmem>>, %arg4: memref<2x32x32xf32, #tpu.memory_space<vmem>>, %arg5: memref<2x1x32xf32, #tpu.memory_space<vmem>>, %arg6: memref<2x1x32xf32, #tpu.memory_space<vmem>>, %arg7: memref<2x1x32xf32, #tpu.memory_space<vmem>>, %arg8: memref<2x32x64xf32, #tpu.memory_space<vmem>>, %arg9: memref<2x1x64xf32, #tpu.memory_space<vmem>>, %arg10: memref<2x64x32xf32, #tpu.memory_space<vmem>>, %arg11: memref<2x1x32xf32, #tpu.memory_space<vmem>>, %arg12: memref<2x1x32xf32, #tpu.memory_space<vmem>>, %arg13: memref<2x1x32xf32, #tpu.memory_space<vmem>>, %arg14: memref<32x2xf32, #tpu.memory_space<vmem>>, %arg15: memref<1x2xf32, #tpu.memory_space<vmem>>, %arg16: memref<2x2xf32, #tpu.memory_space<vmem>>) attributes {dimension_semantics = [], scalar_prefetch = 0 : i64, scratch_operands = 0 : i64, tpu.core_type = #tpu.core_type<tc>} {
    %c0 = arith.constant 0 : index
    %c0_0 = arith.constant 0 : index
    %0 = vector.load %arg0[%c0, %c0_0] : memref<16x32xf32, #tpu.memory_space<vmem>>, vector<16x32xf32>
    %c0_1 = arith.constant 0 : index
    %c0_2 = arith.constant 0 : index
    %1 = vector.load %arg1[%c0_1, %c0_2] : memref<16x32xf32, #tpu.memory_space<vmem>>, vector<16x32xf32>
    %2 = arith.addf %0, %1 : vector<16x32xf32>
    %c0_3 = arith.constant 0 : index
    %c0_4 = arith.constant 0 : index
    %c0_5 = arith.constant 0 : index
    %3 = vector.load %arg2[%c0_3, %c0_4, %c0_5] : memref<2x32x96xf32, #tpu.memory_space<vmem>>, vector<1x32x96xf32>
    %4 = vector.shape_cast %3 : vector<1x32x96xf32> to vector<32x96xf32>
    %cst = arith.constant dense<0.000000e+00> : vector<16x96xf32>
    %5 = tpu.matmul %2, %4, %cst {dimension_numbers = #tpu.dot_dimension_numbers<[1], [0], [0], [1], [0, 0, 1, 1], [], []>} : vector<16x32xf32>, vector<32x96xf32>, vector<16x96xf32> -> vector<16x96xf32>
    %c0_6 = arith.constant 0 : index
    %c0_7 = arith.constant 0 : index
    %c0_8 = arith.constant 0 : index
    %6 = vector.load %arg3[%c0_6, %c0_7, %c0_8] : memref<2x1x96xf32, #tpu.memory_space<vmem>>, vector<1x1x96xf32>
    %7 = vector.shape_cast %6 : vector<1x1x96xf32> to vector<1x96xf32>
    %8 = vector.broadcast %7 : vector<1x96xf32> to vector<16x96xf32>
    %9 = arith.addf %5, %8 : vector<16x96xf32>
    %10 = vector.extract_strided_slice %9 {offsets = [0, 0], sizes = [16, 32], strides = [1, 1]} : vector<16x96xf32> to vector<16x32xf32>
    %cst_9 = arith.constant 0.353553385 : f32
    %11 = vector.broadcast %cst_9 : f32 to vector<16x32xf32>
    %12 = arith.mulf %10, %11 : vector<16x32xf32>
    %13 = vector.extract_strided_slice %12 {offsets = [0, 0], sizes = [16, 8], strides = [1, 1]} : vector<16x32xf32> to vector<16x8xf32>
    %14 = vector.shape_cast %13 : vector<16x8xf32> to vector<2x8x8xf32>
    %15 = vector.extract_strided_slice %12 {offsets = [0, 8], sizes = [16, 8], strides = [1, 1]} : vector<16x32xf32> to vector<16x8xf32>
    %16 = vector.shape_cast %15 : vector<16x8xf32> to vector<2x8x8xf32>
    %17 = vector.extract_strided_slice %12 {offsets = [0, 16], sizes = [16, 8], strides = [1, 1]} : vector<16x32xf32> to vector<16x8xf32>
    %18 = vector.shape_cast %17 : vector<16x8xf32> to vector<2x8x8xf32>
    %19 = vector.extract_strided_slice %12 {offsets = [0, 24], sizes = [16, 8], strides = [1, 1]} : vector<16x32xf32> to vector<16x8xf32>
    %20 = vector.shape_cast %19 : vector<16x8xf32> to vector<2x8x8xf32>
    %21 = vector.shape_cast %14 : vector<2x8x8xf32> to vector<1x2x8x8xf32>
    %22 = vector.shape_cast %16 : vector<2x8x8xf32> to vector<1x2x8x8xf32>
    %23 = vector.shape_cast %18 : vector<2x8x8xf32> to vector<1x2x8x8xf32>
    %24 = vector.shape_cast %20 : vector<2x8x8xf32> to vector<1x2x8x8xf32>
    %25 = tpu.concatenate %21, %22, %23, %24 in 0 : vector<1x2x8x8xf32>, vector<1x2x8x8xf32>, vector<1x2x8x8xf32>, vector<1x2x8x8xf32> -> vector<4x2x8x8xf32>
    %26 = vector.shape_cast %25 : vector<4x2x8x8xf32> to vector<8x8x8xf32>
    %27 = vector.extract_strided_slice %9 {offsets = [0, 32], sizes = [16, 32], strides = [1, 1]} : vector<16x96xf32> to vector<16x32xf32>
    %28 = vector.extract_strided_slice %27 {offsets = [0, 0], sizes = [16, 8], strides = [1, 1]} : vector<16x32xf32> to vector<16x8xf32>
    %29 = vector.shape_cast %28 : vector<16x8xf32> to vector<2x8x8xf32>
    %30 = vector.extract_strided_slice %27 {offsets = [0, 8], sizes = [16, 8], strides = [1, 1]} : vector<16x32xf32> to vector<16x8xf32>
    %31 = vector.shape_cast %30 : vector<16x8xf32> to vector<2x8x8xf32>
    %32 = vector.extract_strided_slice %27 {offsets = [0, 16], sizes = [16, 8], strides = [1, 1]} : vector<16x32xf32> to vector<16x8xf32>
    %33 = vector.shape_cast %32 : vector<16x8xf32> to vector<2x8x8xf32>
    %34 = vector.extract_strided_slice %27 {offsets = [0, 24], sizes = [16, 8], strides = [1, 1]} : vector<16x32xf32> to vector<16x8xf32>
    %35 = vector.shape_cast %34 : vector<16x8xf32> to vector<2x8x8xf32>
    %36 = vector.shape_cast %29 : vector<2x8x8xf32> to vector<1x2x8x8xf32>
    %37 = vector.shape_cast %31 : vector<2x8x8xf32> to vector<1x2x8x8xf32>
    %38 = vector.shape_cast %33 : vector<2x8x8xf32> to vector<1x2x8x8xf32>
    %39 = vector.shape_cast %35 : vector<2x8x8xf32> to vector<1x2x8x8xf32>
    %40 = tpu.concatenate %36, %37, %38, %39 in 0 : vector<1x2x8x8xf32>, vector<1x2x8x8xf32>, vector<1x2x8x8xf32>, vector<1x2x8x8xf32> -> vector<4x2x8x8xf32>
    %41 = vector.shape_cast %40 : vector<4x2x8x8xf32> to vector<8x8x8xf32>
    %42 = vector.extract_strided_slice %9 {offsets = [0, 64], sizes = [16, 32], strides = [1, 1]} : vector<16x96xf32> to vector<16x32xf32>
    %43 = vector.extract_strided_slice %42 {offsets = [0, 0], sizes = [16, 8], strides = [1, 1]} : vector<16x32xf32> to vector<16x8xf32>
    %44 = vector.shape_cast %43 : vector<16x8xf32> to vector<2x8x8xf32>
    %45 = vector.extract_strided_slice %42 {offsets = [0, 8], sizes = [16, 8], strides = [1, 1]} : vector<16x32xf32> to vector<16x8xf32>
    %46 = vector.shape_cast %45 : vector<16x8xf32> to vector<2x8x8xf32>
    %47 = vector.extract_strided_slice %42 {offsets = [0, 16], sizes = [16, 8], strides = [1, 1]} : vector<16x32xf32> to vector<16x8xf32>
    %48 = vector.shape_cast %47 : vector<16x8xf32> to vector<2x8x8xf32>
    %49 = vector.extract_strided_slice %42 {offsets = [0, 24], sizes = [16, 8], strides = [1, 1]} : vector<16x32xf32> to vector<16x8xf32>
    %50 = vector.shape_cast %49 : vector<16x8xf32> to vector<2x8x8xf32>
    %51 = vector.shape_cast %44 : vector<2x8x8xf32> to vector<1x2x8x8xf32>
    %52 = vector.shape_cast %46 : vector<2x8x8xf32> to vector<1x2x8x8xf32>
    %53 = vector.shape_cast %48 : vector<2x8x8xf32> to vector<1x2x8x8xf32>
    %54 = vector.shape_cast %50 : vector<2x8x8xf32> to vector<1x2x8x8xf32>
    %55 = tpu.concatenate %51, %52, %53, %54 in 0 : vector<1x2x8x8xf32>, vector<1x2x8x8xf32>, vector<1x2x8x8xf32>, vector<1x2x8x8xf32> -> vector<4x2x8x8xf32>
    %56 = vector.shape_cast %55 : vector<4x2x8x8xf32> to vector<8x8x8xf32>
    "tpu.trace_start"() <{level = 10 : i32, message = "bqd,bkd->bqk"}> : () -> ()
    %cst_10 = arith.constant dense<0.000000e+00> : vector<8x8x8xf32>
    %57 = tpu.matmul %26, %41, %cst_10 {dimension_numbers = #tpu.dot_dimension_numbers<[2], [2], [1], [1], [0, 0, 0, 1, 1, 1], [0], [0]>} : vector<8x8x8xf32>, vector<8x8x8xf32>, vector<8x8x8xf32> -> vector<8x8x8xf32>
    "tpu.trace_stop"() : () -> ()
    %cst_11 = arith.constant dense<0xFF800000> : vector<8x8xf32>
    %58 = vector.multi_reduction <maximumf>, %57, %cst_11 [2] : vector<8x8x8xf32> to vector<8x8xf32>
    %59 = vector.shape_cast %58 : vector<8x8xf32> to vector<8x8x1xf32>
    %60 = vector.broadcast %59 : vector<8x8x1xf32> to vector<8x8x8xf32>
    %61 = arith.subf %57, %60 : vector<8x8x8xf32>
    %62 = math.exp %61 : vector<8x8x8xf32>
    %cst_12 = arith.constant dense<0.000000e+00> : vector<8x8xf32>
    %63 = vector.multi_reduction <add>, %62, %cst_12 [2] : vector<8x8x8xf32> to vector<8x8xf32>
    %64 = vector.shape_cast %63 : vector<8x8xf32> to vector<8x8x1xf32>
    %65 = tpu.reciprocal %64 {approx = true} : vector<8x8x1xf32> -> vector<8x8x1xf32>
    %66 = vector.broadcast %65 : vector<8x8x1xf32> to vector<8x8x8xf32>
    %67 = arith.mulf %62, %66 : vector<8x8x8xf32>
    "tpu.trace_start"() <{level = 10 : i32, message = "bqk,bkd->bqd"}> : () -> ()
    %cst_13 = arith.constant dense<0.000000e+00> : vector<8x8x8xf32>
    %68 = tpu.matmul %67, %56, %cst_13 {dimension_numbers = #tpu.dot_dimension_numbers<[2], [1], [1], [2], [0, 0, 0, 1, 1, 2], [0], [0]>} : vector<8x8x8xf32>, vector<8x8x8xf32>, vector<8x8x8xf32> -> vector<8x8x8xf32>
    "tpu.trace_stop"() : () -> ()
    %69 = vector.shape_cast %68 : vector<8x8x8xf32> to vector<4x2x8x8xf32>
    %70 = vector.extract_strided_slice %69 {offsets = [0, 0, 0, 0], sizes = [1, 2, 8, 8], strides = [1, 1, 1, 1]} : vector<4x2x8x8xf32> to vector<1x2x8x8xf32>
    %71 = vector.shape_cast %70 : vector<1x2x8x8xf32> to vector<2x8x8xf32>
    %72 = vector.shape_cast %71 : vector<2x8x8xf32> to vector<16x8xf32>
    %73 = vector.extract_strided_slice %69 {offsets = [1, 0, 0, 0], sizes = [1, 2, 8, 8], strides = [1, 1, 1, 1]} : vector<4x2x8x8xf32> to vector<1x2x8x8xf32>
    %74 = vector.shape_cast %73 : vector<1x2x8x8xf32> to vector<2x8x8xf32>
    %75 = vector.shape_cast %74 : vector<2x8x8xf32> to vector<16x8xf32>
    %76 = vector.extract_strided_slice %69 {offsets = [2, 0, 0, 0], sizes = [1, 2, 8, 8], strides = [1, 1, 1, 1]} : vector<4x2x8x8xf32> to vector<1x2x8x8xf32>
    %77 = vector.shape_cast %76 : vector<1x2x8x8xf32> to vector<2x8x8xf32>
    %78 = vector.shape_cast %77 : vector<2x8x8xf32> to vector<16x8xf32>
    %79 = vector.extract_strided_slice %69 {offsets = [3, 0, 0, 0], sizes = [1, 2, 8, 8], strides = [1, 1, 1, 1]} : vector<4x2x8x8xf32> to vector<1x2x8x8xf32>
    %80 = vector.shape_cast %79 : vector<1x2x8x8xf32> to vector<2x8x8xf32>
    %81 = vector.shape_cast %80 : vector<2x8x8xf32> to vector<16x8xf32>
    %82 = tpu.concatenate %72, %75, %78, %81 in 1 : vector<16x8xf32>, vector<16x8xf32>, vector<16x8xf32>, vector<16x8xf32> -> vector<16x32xf32>
    %c0_14 = arith.constant 0 : index
    %c0_15 = arith.constant 0 : index
    %c0_16 = arith.constant 0 : index
    %83 = vector.load %arg4[%c0_14, %c0_15, %c0_16] : memref<2x32x32xf32, #tpu.memory_space<vmem>>, vector<1x32x32xf32>
    %84 = vector.shape_cast %83 : vector<1x32x32xf32> to vector<32x32xf32>
    %cst_17 = arith.constant dense<0.000000e+00> : vector<16x32xf32>
    %85 = tpu.matmul %82, %84, %cst_17 {dimension_numbers = #tpu.dot_dimension_numbers<[1], [0], [0], [1], [0, 0, 1, 1], [], []>} : vector<16x32xf32>, vector<32x32xf32>, vector<16x32xf32> -> vector<16x32xf32>
    %c0_18 = arith.constant 0 : index
    %c0_19 = arith.constant 0 : index
    %c0_20 = arith.constant 0 : index
    %86 = vector.load %arg5[%c0_18, %c0_19, %c0_20] : memref<2x1x32xf32, #tpu.memory_space<vmem>>, vector<1x1x32xf32>
    %87 = vector.shape_cast %86 : vector<1x1x32xf32> to vector<1x32xf32>
    %88 = vector.broadcast %87 : vector<1x32xf32> to vector<16x32xf32>
    %89 = arith.addf %85, %88 : vector<16x32xf32>
    %90 = arith.addf %2, %89 : vector<16x32xf32>
    %c0_21 = arith.constant 0 : index
    %c0_22 = arith.constant 0 : index
    %c0_23 = arith.constant 0 : index
    %91 = vector.load %arg6[%c0_21, %c0_22, %c0_23] : memref<2x1x32xf32, #tpu.memory_space<vmem>>, vector<1x1x32xf32>
    %92 = vector.shape_cast %91 : vector<1x1x32xf32> to vector<1x32xf32>
    %c0_24 = arith.constant 0 : index
    %c0_25 = arith.constant 0 : index
    %c0_26 = arith.constant 0 : index
    %93 = vector.load %arg7[%c0_24, %c0_25, %c0_26] : memref<2x1x32xf32, #tpu.memory_space<vmem>>, vector<1x1x32xf32>
    %94 = vector.shape_cast %93 : vector<1x1x32xf32> to vector<1x32xf32>
    %cst_27 = arith.constant dense<0.000000e+00> : vector<16xf32>
    %95 = vector.multi_reduction <add>, %90, %cst_27 [1] : vector<16x32xf32> to vector<16xf32>
    %96 = vector.shape_cast %95 : vector<16xf32> to vector<16x1xf32>
    %cst_28 = arith.constant 3.200000e+01 : f32
    %97 = vector.broadcast %cst_28 : f32 to vector<16x1xf32>
    %98 = arith.divf %96, %97 : vector<16x1xf32>
    %99 = vector.broadcast %98 : vector<16x1xf32> to vector<16x32xf32>
    %100 = arith.subf %90, %99 : vector<16x32xf32>
    %101 = arith.mulf %100, %100 : vector<16x32xf32>
    %cst_29 = arith.constant dense<0.000000e+00> : vector<16xf32>
    %102 = vector.multi_reduction <add>, %101, %cst_29 [1] : vector<16x32xf32> to vector<16xf32>
    %103 = vector.shape_cast %102 : vector<16xf32> to vector<16x1xf32>
    %cst_30 = arith.constant 3.200000e+01 : f32
    %104 = vector.broadcast %cst_30 : f32 to vector<16x1xf32>
    %105 = arith.divf %103, %104 : vector<16x1xf32>
    %106 = vector.broadcast %98 : vector<16x1xf32> to vector<16x32xf32>
    %107 = arith.subf %90, %106 : vector<16x32xf32>
    %cst_31 = arith.constant 9.99999974E-6 : f32
    %108 = vector.broadcast %cst_31 : f32 to vector<16x1xf32>
    %109 = arith.addf %105, %108 : vector<16x1xf32>
    %110 = math.rsqrt %109 : vector<16x1xf32>
    %111 = vector.broadcast %110 : vector<16x1xf32> to vector<16x32xf32>
    %112 = arith.mulf %107, %111 : vector<16x32xf32>
    %113 = vector.broadcast %92 : vector<1x32xf32> to vector<16x32xf32>
    %114 = arith.mulf %112, %113 : vector<16x32xf32>
    %115 = vector.broadcast %94 : vector<1x32xf32> to vector<16x32xf32>
    %116 = arith.addf %114, %115 : vector<16x32xf32>
    %c0_32 = arith.constant 0 : index
    %c0_33 = arith.constant 0 : index
    %c0_34 = arith.constant 0 : index
    %117 = vector.load %arg8[%c0_32, %c0_33, %c0_34] : memref<2x32x64xf32, #tpu.memory_space<vmem>>, vector<1x32x64xf32>
    %118 = vector.shape_cast %117 : vector<1x32x64xf32> to vector<32x64xf32>
    %cst_35 = arith.constant dense<0.000000e+00> : vector<16x64xf32>
    %119 = tpu.matmul %116, %118, %cst_35 {dimension_numbers = #tpu.dot_dimension_numbers<[1], [0], [0], [1], [0, 0, 1, 1], [], []>} : vector<16x32xf32>, vector<32x64xf32>, vector<16x64xf32> -> vector<16x64xf32>
    %c0_36 = arith.constant 0 : index
    %c0_37 = arith.constant 0 : index
    %c0_38 = arith.constant 0 : index
    %120 = vector.load %arg9[%c0_36, %c0_37, %c0_38] : memref<2x1x64xf32, #tpu.memory_space<vmem>>, vector<1x1x64xf32>
    %121 = vector.shape_cast %120 : vector<1x1x64xf32> to vector<1x64xf32>
    %122 = vector.broadcast %121 : vector<1x64xf32> to vector<16x64xf32>
    %123 = arith.addf %119, %122 : vector<16x64xf32>
    %cst_39 = arith.constant 0.000000e+00 : f32
    %124 = vector.broadcast %cst_39 : f32 to vector<16x64xf32>
    %125 = arith.maximumf %123, %124 : vector<16x64xf32>
    %c0_40 = arith.constant 0 : index
    %c0_41 = arith.constant 0 : index
    %c0_42 = arith.constant 0 : index
    %126 = vector.load %arg10[%c0_40, %c0_41, %c0_42] : memref<2x64x32xf32, #tpu.memory_space<vmem>>, vector<1x64x32xf32>
    %127 = vector.shape_cast %126 : vector<1x64x32xf32> to vector<64x32xf32>
    %cst_43 = arith.constant dense<0.000000e+00> : vector<16x32xf32>
    %128 = tpu.matmul %125, %127, %cst_43 {dimension_numbers = #tpu.dot_dimension_numbers<[1], [0], [0], [1], [0, 0, 1, 1], [], []>} : vector<16x64xf32>, vector<64x32xf32>, vector<16x32xf32> -> vector<16x32xf32>
    %c0_44 = arith.constant 0 : index
    %c0_45 = arith.constant 0 : index
    %c0_46 = arith.constant 0 : index
    %129 = vector.load %arg11[%c0_44, %c0_45, %c0_46] : memref<2x1x32xf32, #tpu.memory_space<vmem>>, vector<1x1x32xf32>
    %130 = vector.shape_cast %129 : vector<1x1x32xf32> to vector<1x32xf32>
    %131 = vector.broadcast %130 : vector<1x32xf32> to vector<16x32xf32>
    %132 = arith.addf %128, %131 : vector<16x32xf32>
    %133 = arith.addf %116, %132 : vector<16x32xf32>
    %c0_47 = arith.constant 0 : index
    %c0_48 = arith.constant 0 : index
    %c0_49 = arith.constant 0 : index
    %134 = vector.load %arg12[%c0_47, %c0_48, %c0_49] : memref<2x1x32xf32, #tpu.memory_space<vmem>>, vector<1x1x32xf32>
    %135 = vector.shape_cast %134 : vector<1x1x32xf32> to vector<1x32xf32>
    %c0_50 = arith.constant 0 : index
    %c0_51 = arith.constant 0 : index
    %c0_52 = arith.constant 0 : index
    %136 = vector.load %arg13[%c0_50, %c0_51, %c0_52] : memref<2x1x32xf32, #tpu.memory_space<vmem>>, vector<1x1x32xf32>
    %137 = vector.shape_cast %136 : vector<1x1x32xf32> to vector<1x32xf32>
    %cst_53 = arith.constant dense<0.000000e+00> : vector<16xf32>
    %138 = vector.multi_reduction <add>, %133, %cst_53 [1] : vector<16x32xf32> to vector<16xf32>
    %139 = vector.shape_cast %138 : vector<16xf32> to vector<16x1xf32>
    %cst_54 = arith.constant 3.200000e+01 : f32
    %140 = vector.broadcast %cst_54 : f32 to vector<16x1xf32>
    %141 = arith.divf %139, %140 : vector<16x1xf32>
    %142 = vector.broadcast %141 : vector<16x1xf32> to vector<16x32xf32>
    %143 = arith.subf %133, %142 : vector<16x32xf32>
    %144 = arith.mulf %143, %143 : vector<16x32xf32>
    %cst_55 = arith.constant dense<0.000000e+00> : vector<16xf32>
    %145 = vector.multi_reduction <add>, %144, %cst_55 [1] : vector<16x32xf32> to vector<16xf32>
    %146 = vector.shape_cast %145 : vector<16xf32> to vector<16x1xf32>
    %cst_56 = arith.constant 3.200000e+01 : f32
    %147 = vector.broadcast %cst_56 : f32 to vector<16x1xf32>
    %148 = arith.divf %146, %147 : vector<16x1xf32>
    %149 = vector.broadcast %141 : vector<16x1xf32> to vector<16x32xf32>
    %150 = arith.subf %133, %149 : vector<16x32xf32>
    %cst_57 = arith.constant 9.99999974E-6 : f32
    %151 = vector.broadcast %cst_57 : f32 to vector<16x1xf32>
    %152 = arith.addf %148, %151 : vector<16x1xf32>
    %153 = math.rsqrt %152 : vector<16x1xf32>
    %154 = vector.broadcast %153 : vector<16x1xf32> to vector<16x32xf32>
    %155 = arith.mulf %150, %154 : vector<16x32xf32>
    %156 = vector.broadcast %135 : vector<1x32xf32> to vector<16x32xf32>
    %157 = arith.mulf %155, %156 : vector<16x32xf32>
    %158 = vector.broadcast %137 : vector<1x32xf32> to vector<16x32xf32>
    %159 = arith.addf %157, %158 : vector<16x32xf32>
    %c1 = arith.constant 1 : index
    %c0_58 = arith.constant 0 : index
    %c0_59 = arith.constant 0 : index
    %160 = vector.load %arg2[%c1, %c0_58, %c0_59] : memref<2x32x96xf32, #tpu.memory_space<vmem>>, vector<1x32x96xf32>
    %161 = vector.shape_cast %160 : vector<1x32x96xf32> to vector<32x96xf32>
    %cst_60 = arith.constant dense<0.000000e+00> : vector<16x96xf32>
    %162 = tpu.matmul %159, %161, %cst_60 {dimension_numbers = #tpu.dot_dimension_numbers<[1], [0], [0], [1], [0, 0, 1, 1], [], []>} : vector<16x32xf32>, vector<32x96xf32>, vector<16x96xf32> -> vector<16x96xf32>
    %c1_61 = arith.constant 1 : index
    %c0_62 = arith.constant 0 : index
    %c0_63 = arith.constant 0 : index
    %163 = vector.load %arg3[%c1_61, %c0_62, %c0_63] : memref<2x1x96xf32, #tpu.memory_space<vmem>>, vector<1x1x96xf32>
    %164 = vector.shape_cast %163 : vector<1x1x96xf32> to vector<1x96xf32>
    %165 = vector.broadcast %164 : vector<1x96xf32> to vector<16x96xf32>
    %166 = arith.addf %162, %165 : vector<16x96xf32>
    %167 = vector.extract_strided_slice %166 {offsets = [0, 0], sizes = [16, 32], strides = [1, 1]} : vector<16x96xf32> to vector<16x32xf32>
    %cst_64 = arith.constant 0.353553385 : f32
    %168 = vector.broadcast %cst_64 : f32 to vector<16x32xf32>
    %169 = arith.mulf %167, %168 : vector<16x32xf32>
    %170 = vector.extract_strided_slice %169 {offsets = [0, 0], sizes = [16, 8], strides = [1, 1]} : vector<16x32xf32> to vector<16x8xf32>
    %171 = vector.shape_cast %170 : vector<16x8xf32> to vector<2x8x8xf32>
    %172 = vector.extract_strided_slice %169 {offsets = [0, 8], sizes = [16, 8], strides = [1, 1]} : vector<16x32xf32> to vector<16x8xf32>
    %173 = vector.shape_cast %172 : vector<16x8xf32> to vector<2x8x8xf32>
    %174 = vector.extract_strided_slice %169 {offsets = [0, 16], sizes = [16, 8], strides = [1, 1]} : vector<16x32xf32> to vector<16x8xf32>
    %175 = vector.shape_cast %174 : vector<16x8xf32> to vector<2x8x8xf32>
    %176 = vector.extract_strided_slice %169 {offsets = [0, 24], sizes = [16, 8], strides = [1, 1]} : vector<16x32xf32> to vector<16x8xf32>
    %177 = vector.shape_cast %176 : vector<16x8xf32> to vector<2x8x8xf32>
    %178 = vector.shape_cast %171 : vector<2x8x8xf32> to vector<1x2x8x8xf32>
    %179 = vector.shape_cast %173 : vector<2x8x8xf32> to vector<1x2x8x8xf32>
    %180 = vector.shape_cast %175 : vector<2x8x8xf32> to vector<1x2x8x8xf32>
    %181 = vector.shape_cast %177 : vector<2x8x8xf32> to vector<1x2x8x8xf32>
    %182 = tpu.concatenate %178, %179, %180, %181 in 0 : vector<1x2x8x8xf32>, vector<1x2x8x8xf32>, vector<1x2x8x8xf32>, vector<1x2x8x8xf32> -> vector<4x2x8x8xf32>
    %183 = vector.shape_cast %182 : vector<4x2x8x8xf32> to vector<8x8x8xf32>
    %184 = vector.extract_strided_slice %166 {offsets = [0, 32], sizes = [16, 32], strides = [1, 1]} : vector<16x96xf32> to vector<16x32xf32>
    %185 = vector.extract_strided_slice %184 {offsets = [0, 0], sizes = [16, 8], strides = [1, 1]} : vector<16x32xf32> to vector<16x8xf32>
    %186 = vector.shape_cast %185 : vector<16x8xf32> to vector<2x8x8xf32>
    %187 = vector.extract_strided_slice %184 {offsets = [0, 8], sizes = [16, 8], strides = [1, 1]} : vector<16x32xf32> to vector<16x8xf32>
    %188 = vector.shape_cast %187 : vector<16x8xf32> to vector<2x8x8xf32>
    %189 = vector.extract_strided_slice %184 {offsets = [0, 16], sizes = [16, 8], strides = [1, 1]} : vector<16x32xf32> to vector<16x8xf32>
    %190 = vector.shape_cast %189 : vector<16x8xf32> to vector<2x8x8xf32>
    %191 = vector.extract_strided_slice %184 {offsets = [0, 24], sizes = [16, 8], strides = [1, 1]} : vector<16x32xf32> to vector<16x8xf32>
    %192 = vector.shape_cast %191 : vector<16x8xf32> to vector<2x8x8xf32>
    %193 = vector.shape_cast %186 : vector<2x8x8xf32> to vector<1x2x8x8xf32>
    %194 = vector.shape_cast %188 : vector<2x8x8xf32> to vector<1x2x8x8xf32>
    %195 = vector.shape_cast %190 : vector<2x8x8xf32> to vector<1x2x8x8xf32>
    %196 = vector.shape_cast %192 : vector<2x8x8xf32> to vector<1x2x8x8xf32>
    %197 = tpu.concatenate %193, %194, %195, %196 in 0 : vector<1x2x8x8xf32>, vector<1x2x8x8xf32>, vector<1x2x8x8xf32>, vector<1x2x8x8xf32> -> vector<4x2x8x8xf32>
    %198 = vector.shape_cast %197 : vector<4x2x8x8xf32> to vector<8x8x8xf32>
    %199 = vector.extract_strided_slice %166 {offsets = [0, 64], sizes = [16, 32], strides = [1, 1]} : vector<16x96xf32> to vector<16x32xf32>
    %200 = vector.extract_strided_slice %199 {offsets = [0, 0], sizes = [16, 8], strides = [1, 1]} : vector<16x32xf32> to vector<16x8xf32>
    %201 = vector.shape_cast %200 : vector<16x8xf32> to vector<2x8x8xf32>
    %202 = vector.extract_strided_slice %199 {offsets = [0, 8], sizes = [16, 8], strides = [1, 1]} : vector<16x32xf32> to vector<16x8xf32>
    %203 = vector.shape_cast %202 : vector<16x8xf32> to vector<2x8x8xf32>
    %204 = vector.extract_strided_slice %199 {offsets = [0, 16], sizes = [16, 8], strides = [1, 1]} : vector<16x32xf32> to vector<16x8xf32>
    %205 = vector.shape_cast %204 : vector<16x8xf32> to vector<2x8x8xf32>
    %206 = vector.extract_strided_slice %199 {offsets = [0, 24], sizes = [16, 8], strides = [1, 1]} : vector<16x32xf32> to vector<16x8xf32>
    %207 = vector.shape_cast %206 : vector<16x8xf32> to vector<2x8x8xf32>
    %208 = vector.shape_cast %201 : vector<2x8x8xf32> to vector<1x2x8x8xf32>
    %209 = vector.shape_cast %203 : vector<2x8x8xf32> to vector<1x2x8x8xf32>
    %210 = vector.shape_cast %205 : vector<2x8x8xf32> to vector<1x2x8x8xf32>
    %211 = vector.shape_cast %207 : vector<2x8x8xf32> to vector<1x2x8x8xf32>
    %212 = tpu.concatenate %208, %209, %210, %211 in 0 : vector<1x2x8x8xf32>, vector<1x2x8x8xf32>, vector<1x2x8x8xf32>, vector<1x2x8x8xf32> -> vector<4x2x8x8xf32>
    %213 = vector.shape_cast %212 : vector<4x2x8x8xf32> to vector<8x8x8xf32>
    "tpu.trace_start"() <{level = 10 : i32, message = "bqd,bkd->bqk"}> : () -> ()
    %cst_65 = arith.constant dense<0.000000e+00> : vector<8x8x8xf32>
    %214 = tpu.matmul %183, %198, %cst_65 {dimension_numbers = #tpu.dot_dimension_numbers<[2], [2], [1], [1], [0, 0, 0, 1, 1, 1], [0], [0]>} : vector<8x8x8xf32>, vector<8x8x8xf32>, vector<8x8x8xf32> -> vector<8x8x8xf32>
    "tpu.trace_stop"() : () -> ()
    %cst_66 = arith.constant dense<0xFF800000> : vector<8x8xf32>
    %215 = vector.multi_reduction <maximumf>, %214, %cst_66 [2] : vector<8x8x8xf32> to vector<8x8xf32>
    %216 = vector.shape_cast %215 : vector<8x8xf32> to vector<8x8x1xf32>
    %217 = vector.broadcast %216 : vector<8x8x1xf32> to vector<8x8x8xf32>
    %218 = arith.subf %214, %217 : vector<8x8x8xf32>
    %219 = math.exp %218 : vector<8x8x8xf32>
    %cst_67 = arith.constant dense<0.000000e+00> : vector<8x8xf32>
    %220 = vector.multi_reduction <add>, %219, %cst_67 [2] : vector<8x8x8xf32> to vector<8x8xf32>
    %221 = vector.shape_cast %220 : vector<8x8xf32> to vector<8x8x1xf32>
    %222 = tpu.reciprocal %221 {approx = true} : vector<8x8x1xf32> -> vector<8x8x1xf32>
    %223 = vector.broadcast %222 : vector<8x8x1xf32> to vector<8x8x8xf32>
    %224 = arith.mulf %219, %223 : vector<8x8x8xf32>
    "tpu.trace_start"() <{level = 10 : i32, message = "bqk,bkd->bqd"}> : () -> ()
    %cst_68 = arith.constant dense<0.000000e+00> : vector<8x8x8xf32>
    %225 = tpu.matmul %224, %213, %cst_68 {dimension_numbers = #tpu.dot_dimension_numbers<[2], [1], [1], [2], [0, 0, 0, 1, 1, 2], [0], [0]>} : vector<8x8x8xf32>, vector<8x8x8xf32>, vector<8x8x8xf32> -> vector<8x8x8xf32>
    "tpu.trace_stop"() : () -> ()
    %226 = vector.shape_cast %225 : vector<8x8x8xf32> to vector<4x2x8x8xf32>
    %227 = vector.extract_strided_slice %226 {offsets = [0, 0, 0, 0], sizes = [1, 2, 8, 8], strides = [1, 1, 1, 1]} : vector<4x2x8x8xf32> to vector<1x2x8x8xf32>
    %228 = vector.shape_cast %227 : vector<1x2x8x8xf32> to vector<2x8x8xf32>
    %229 = vector.shape_cast %228 : vector<2x8x8xf32> to vector<16x8xf32>
    %230 = vector.extract_strided_slice %226 {offsets = [1, 0, 0, 0], sizes = [1, 2, 8, 8], strides = [1, 1, 1, 1]} : vector<4x2x8x8xf32> to vector<1x2x8x8xf32>
    %231 = vector.shape_cast %230 : vector<1x2x8x8xf32> to vector<2x8x8xf32>
    %232 = vector.shape_cast %231 : vector<2x8x8xf32> to vector<16x8xf32>
    %233 = vector.extract_strided_slice %226 {offsets = [2, 0, 0, 0], sizes = [1, 2, 8, 8], strides = [1, 1, 1, 1]} : vector<4x2x8x8xf32> to vector<1x2x8x8xf32>
    %234 = vector.shape_cast %233 : vector<1x2x8x8xf32> to vector<2x8x8xf32>
    %235 = vector.shape_cast %234 : vector<2x8x8xf32> to vector<16x8xf32>
    %236 = vector.extract_strided_slice %226 {offsets = [3, 0, 0, 0], sizes = [1, 2, 8, 8], strides = [1, 1, 1, 1]} : vector<4x2x8x8xf32> to vector<1x2x8x8xf32>
    %237 = vector.shape_cast %236 : vector<1x2x8x8xf32> to vector<2x8x8xf32>
    %238 = vector.shape_cast %237 : vector<2x8x8xf32> to vector<16x8xf32>
    %239 = tpu.concatenate %229, %232, %235, %238 in 1 : vector<16x8xf32>, vector<16x8xf32>, vector<16x8xf32>, vector<16x8xf32> -> vector<16x32xf32>
    %c1_69 = arith.constant 1 : index
    %c0_70 = arith.constant 0 : index
    %c0_71 = arith.constant 0 : index
    %240 = vector.load %arg4[%c1_69, %c0_70, %c0_71] : memref<2x32x32xf32, #tpu.memory_space<vmem>>, vector<1x32x32xf32>
    %241 = vector.shape_cast %240 : vector<1x32x32xf32> to vector<32x32xf32>
    %cst_72 = arith.constant dense<0.000000e+00> : vector<16x32xf32>
    %242 = tpu.matmul %239, %241, %cst_72 {dimension_numbers = #tpu.dot_dimension_numbers<[1], [0], [0], [1], [0, 0, 1, 1], [], []>} : vector<16x32xf32>, vector<32x32xf32>, vector<16x32xf32> -> vector<16x32xf32>
    %c1_73 = arith.constant 1 : index
    %c0_74 = arith.constant 0 : index
    %c0_75 = arith.constant 0 : index
    %243 = vector.load %arg5[%c1_73, %c0_74, %c0_75] : memref<2x1x32xf32, #tpu.memory_space<vmem>>, vector<1x1x32xf32>
    %244 = vector.shape_cast %243 : vector<1x1x32xf32> to vector<1x32xf32>
    %245 = vector.broadcast %244 : vector<1x32xf32> to vector<16x32xf32>
    %246 = arith.addf %242, %245 : vector<16x32xf32>
    %247 = arith.addf %159, %246 : vector<16x32xf32>
    %c1_76 = arith.constant 1 : index
    %c0_77 = arith.constant 0 : index
    %c0_78 = arith.constant 0 : index
    %248 = vector.load %arg6[%c1_76, %c0_77, %c0_78] : memref<2x1x32xf32, #tpu.memory_space<vmem>>, vector<1x1x32xf32>
    %249 = vector.shape_cast %248 : vector<1x1x32xf32> to vector<1x32xf32>
    %c1_79 = arith.constant 1 : index
    %c0_80 = arith.constant 0 : index
    %c0_81 = arith.constant 0 : index
    %250 = vector.load %arg7[%c1_79, %c0_80, %c0_81] : memref<2x1x32xf32, #tpu.memory_space<vmem>>, vector<1x1x32xf32>
    %251 = vector.shape_cast %250 : vector<1x1x32xf32> to vector<1x32xf32>
    %cst_82 = arith.constant dense<0.000000e+00> : vector<16xf32>
    %252 = vector.multi_reduction <add>, %247, %cst_82 [1] : vector<16x32xf32> to vector<16xf32>
    %253 = vector.shape_cast %252 : vector<16xf32> to vector<16x1xf32>
    %cst_83 = arith.constant 3.200000e+01 : f32
    %254 = vector.broadcast %cst_83 : f32 to vector<16x1xf32>
    %255 = arith.divf %253, %254 : vector<16x1xf32>
    %256 = vector.broadcast %255 : vector<16x1xf32> to vector<16x32xf32>
    %257 = arith.subf %247, %256 : vector<16x32xf32>
    %258 = arith.mulf %257, %257 : vector<16x32xf32>
    %cst_84 = arith.constant dense<0.000000e+00> : vector<16xf32>
    %259 = vector.multi_reduction <add>, %258, %cst_84 [1] : vector<16x32xf32> to vector<16xf32>
    %260 = vector.shape_cast %259 : vector<16xf32> to vector<16x1xf32>
    %cst_85 = arith.constant 3.200000e+01 : f32
    %261 = vector.broadcast %cst_85 : f32 to vector<16x1xf32>
    %262 = arith.divf %260, %261 : vector<16x1xf32>
    %263 = vector.broadcast %255 : vector<16x1xf32> to vector<16x32xf32>
    %264 = arith.subf %247, %263 : vector<16x32xf32>
    %cst_86 = arith.constant 9.99999974E-6 : f32
    %265 = vector.broadcast %cst_86 : f32 to vector<16x1xf32>
    %266 = arith.addf %262, %265 : vector<16x1xf32>
    %267 = math.rsqrt %266 : vector<16x1xf32>
    %268 = vector.broadcast %267 : vector<16x1xf32> to vector<16x32xf32>
    %269 = arith.mulf %264, %268 : vector<16x32xf32>
    %270 = vector.broadcast %249 : vector<1x32xf32> to vector<16x32xf32>
    %271 = arith.mulf %269, %270 : vector<16x32xf32>
    %272 = vector.broadcast %251 : vector<1x32xf32> to vector<16x32xf32>
    %273 = arith.addf %271, %272 : vector<16x32xf32>
    %c1_87 = arith.constant 1 : index
    %c0_88 = arith.constant 0 : index
    %c0_89 = arith.constant 0 : index
    %274 = vector.load %arg8[%c1_87, %c0_88, %c0_89] : memref<2x32x64xf32, #tpu.memory_space<vmem>>, vector<1x32x64xf32>
    %275 = vector.shape_cast %274 : vector<1x32x64xf32> to vector<32x64xf32>
    %cst_90 = arith.constant dense<0.000000e+00> : vector<16x64xf32>
    %276 = tpu.matmul %273, %275, %cst_90 {dimension_numbers = #tpu.dot_dimension_numbers<[1], [0], [0], [1], [0, 0, 1, 1], [], []>} : vector<16x32xf32>, vector<32x64xf32>, vector<16x64xf32> -> vector<16x64xf32>
    %c1_91 = arith.constant 1 : index
    %c0_92 = arith.constant 0 : index
    %c0_93 = arith.constant 0 : index
    %277 = vector.load %arg9[%c1_91, %c0_92, %c0_93] : memref<2x1x64xf32, #tpu.memory_space<vmem>>, vector<1x1x64xf32>
    %278 = vector.shape_cast %277 : vector<1x1x64xf32> to vector<1x64xf32>
    %279 = vector.broadcast %278 : vector<1x64xf32> to vector<16x64xf32>
    %280 = arith.addf %276, %279 : vector<16x64xf32>
    %cst_94 = arith.constant 0.000000e+00 : f32
    %281 = vector.broadcast %cst_94 : f32 to vector<16x64xf32>
    %282 = arith.maximumf %280, %281 : vector<16x64xf32>
    %c1_95 = arith.constant 1 : index
    %c0_96 = arith.constant 0 : index
    %c0_97 = arith.constant 0 : index
    %283 = vector.load %arg10[%c1_95, %c0_96, %c0_97] : memref<2x64x32xf32, #tpu.memory_space<vmem>>, vector<1x64x32xf32>
    %284 = vector.shape_cast %283 : vector<1x64x32xf32> to vector<64x32xf32>
    %cst_98 = arith.constant dense<0.000000e+00> : vector<16x32xf32>
    %285 = tpu.matmul %282, %284, %cst_98 {dimension_numbers = #tpu.dot_dimension_numbers<[1], [0], [0], [1], [0, 0, 1, 1], [], []>} : vector<16x64xf32>, vector<64x32xf32>, vector<16x32xf32> -> vector<16x32xf32>
    %c1_99 = arith.constant 1 : index
    %c0_100 = arith.constant 0 : index
    %c0_101 = arith.constant 0 : index
    %286 = vector.load %arg11[%c1_99, %c0_100, %c0_101] : memref<2x1x32xf32, #tpu.memory_space<vmem>>, vector<1x1x32xf32>
    %287 = vector.shape_cast %286 : vector<1x1x32xf32> to vector<1x32xf32>
    %288 = vector.broadcast %287 : vector<1x32xf32> to vector<16x32xf32>
    %289 = arith.addf %285, %288 : vector<16x32xf32>
    %290 = arith.addf %273, %289 : vector<16x32xf32>
    %c1_102 = arith.constant 1 : index
    %c0_103 = arith.constant 0 : index
    %c0_104 = arith.constant 0 : index
    %291 = vector.load %arg12[%c1_102, %c0_103, %c0_104] : memref<2x1x32xf32, #tpu.memory_space<vmem>>, vector<1x1x32xf32>
    %292 = vector.shape_cast %291 : vector<1x1x32xf32> to vector<1x32xf32>
    %c1_105 = arith.constant 1 : index
    %c0_106 = arith.constant 0 : index
    %c0_107 = arith.constant 0 : index
    %293 = vector.load %arg13[%c1_105, %c0_106, %c0_107] : memref<2x1x32xf32, #tpu.memory_space<vmem>>, vector<1x1x32xf32>
    %294 = vector.shape_cast %293 : vector<1x1x32xf32> to vector<1x32xf32>
    %cst_108 = arith.constant dense<0.000000e+00> : vector<16xf32>
    %295 = vector.multi_reduction <add>, %290, %cst_108 [1] : vector<16x32xf32> to vector<16xf32>
    %296 = vector.shape_cast %295 : vector<16xf32> to vector<16x1xf32>
    %cst_109 = arith.constant 3.200000e+01 : f32
    %297 = vector.broadcast %cst_109 : f32 to vector<16x1xf32>
    %298 = arith.divf %296, %297 : vector<16x1xf32>
    %299 = vector.broadcast %298 : vector<16x1xf32> to vector<16x32xf32>
    %300 = arith.subf %290, %299 : vector<16x32xf32>
    %301 = arith.mulf %300, %300 : vector<16x32xf32>
    %cst_110 = arith.constant dense<0.000000e+00> : vector<16xf32>
    %302 = vector.multi_reduction <add>, %301, %cst_110 [1] : vector<16x32xf32> to vector<16xf32>
    %303 = vector.shape_cast %302 : vector<16xf32> to vector<16x1xf32>
    %cst_111 = arith.constant 3.200000e+01 : f32
    %304 = vector.broadcast %cst_111 : f32 to vector<16x1xf32>
    %305 = arith.divf %303, %304 : vector<16x1xf32>
    %306 = vector.broadcast %298 : vector<16x1xf32> to vector<16x32xf32>
    %307 = arith.subf %290, %306 : vector<16x32xf32>
    %cst_112 = arith.constant 9.99999974E-6 : f32
    %308 = vector.broadcast %cst_112 : f32 to vector<16x1xf32>
    %309 = arith.addf %305, %308 : vector<16x1xf32>
    %310 = math.rsqrt %309 : vector<16x1xf32>
    %311 = vector.broadcast %310 : vector<16x1xf32> to vector<16x32xf32>
    %312 = arith.mulf %307, %311 : vector<16x32xf32>
    %313 = vector.broadcast %292 : vector<1x32xf32> to vector<16x32xf32>
    %314 = arith.mulf %312, %313 : vector<16x32xf32>
    %315 = vector.broadcast %294 : vector<1x32xf32> to vector<16x32xf32>
    %316 = arith.addf %314, %315 : vector<16x32xf32>
    %317 = vector.shape_cast %316 : vector<16x32xf32> to vector<2x8x32xf32>
    %cst_113 = arith.constant dense<0.000000e+00> : vector<2x32xf32>
    %318 = vector.multi_reduction <add>, %317, %cst_113 [1] : vector<2x8x32xf32> to vector<2x32xf32>
    %cst_114 = arith.constant 1.250000e-01 : f32
    %319 = vector.broadcast %cst_114 : f32 to vector<2x32xf32>
    %320 = arith.mulf %318, %319 : vector<2x32xf32>
    %c0_115 = arith.constant 0 : index
    %c0_116 = arith.constant 0 : index
    %321 = vector.load %arg14[%c0_115, %c0_116] : memref<32x2xf32, #tpu.memory_space<vmem>>, vector<32x2xf32>
    %cst_117 = arith.constant dense<0.000000e+00> : vector<2x2xf32>
    %322 = tpu.matmul %320, %321, %cst_117 {dimension_numbers = #tpu.dot_dimension_numbers<[1], [0], [0], [1], [0, 0, 1, 1], [], []>} : vector<2x32xf32>, vector<32x2xf32>, vector<2x2xf32> -> vector<2x2xf32>
    %c0_118 = arith.constant 0 : index
    %c0_119 = arith.constant 0 : index
    %323 = vector.load %arg15[%c0_118, %c0_119] : memref<1x2xf32, #tpu.memory_space<vmem>>, vector<1x2xf32>
    %324 = vector.broadcast %323 : vector<1x2xf32> to vector<2x2xf32>
    %325 = arith.addf %322, %324 : vector<2x2xf32>
    %c0_120 = arith.constant 0 : index
    %c0_121 = arith.constant 0 : index
    %326 = vector.load %arg16[%c0_120, %c0_121] : memref<2x2xf32, #tpu.memory_space<vmem>>, vector<2x2xf32>
    tpu.vector_store %arg16[%c0_120, %c0_121], %325 {strides = array<i32>} : memref<2x2xf32, #tpu.memory_space<vmem>>, vector<2x2xf32>,
    return
  }
}

</mosaic_0001>

<llo_original>
// kernel: emotion_model_forward.1
$region0: #{emotion_model_forward.1}
  #allocation0 [shape = 'u32[]', space=smem, size = 0x4, offset = 0x4, fixed_abs, tag = 'smem constant byte address 0x4 - core index']
  #allocation1 [shape = 'u32[144,128]{1,0:T(1,128)}', space=vmem, size = 0x12000, scoped, tag = 'internal scratch']
  %s0 = inlined_call_operand.vmem [shape: f32[16,32], index: 0, kind: input, shape index: {}]
  %s1 = inlined_call_operand.vmem [shape: f32[16,32], index: 1, kind: input, shape index: {}]
  %s2 = inlined_call_operand.vmem [shape: f32[2,32,96], index: 2, kind: input, shape index: {}]
  %s3 = inlined_call_operand.vmem [shape: f32[2,1,96], index: 3, kind: input, shape index: {}]
  %s4 = inlined_call_operand.vmem [shape: f32[2,32,32], index: 4, kind: input, shape index: {}]
  %s5 = inlined_call_operand.vmem [shape: f32[2,1,32], index: 5, kind: input, shape index: {}]
  %s6 = inlined_call_operand.vmem [shape: f32[2,1,32], index: 6, kind: input, shape index: {}]
  %s7 = inlined_call_operand.vmem [shape: f32[2,1,32], index: 7, kind: input, shape index: {}]
  %s8 = inlined_call_operand.vmem [shape: f32[2,32,64], index: 8, kind: input, shape index: {}]
  %s9 = inlined_call_operand.vmem [shape: f32[2,1,64], index: 9, kind: input, shape index: {}]
  %s10 = inlined_call_operand.vmem [shape: f32[2,64,32], index: 10, kind: input, shape index: {}]
  %s11 = inlined_call_operand.vmem [shape: f32[2,1,32], index: 11, kind: input, shape index: {}]
  %s12 = inlined_call_operand.vmem [shape: f32[2,1,32], index: 12, kind: input, shape index: {}]
  %s13 = inlined_call_operand.vmem [shape: f32[2,1,32], index: 13, kind: input, shape index: {}]
  %s14 = inlined_call_operand.vmem [shape: f32[32,2], index: 14, kind: input, shape index: {}]
  %s15 = inlined_call_operand.vmem [shape: f32[1,2], index: 15, kind: input, shape index: {}]
  %s16 = inlined_call_operand.hbm [shape: f32[2,2], index: 16, kind: output, shape index: {}]
  %s17 = sld [smem:[#allocation0]]
  $region74: #{emotion_model_forward.1} parent=0
    _
  %s19 = ssub.s32 1, %s17
  %s20 = scalar_select 0, %s19, %s17
  $region1: #{emotion_model_forward.1} parent=0
    #allocation2 [shape = 'u8[1024]{0}', space=vmem, size = 0x400, scoped, tag = 'output window, operand 0, single buffered']
    #allocation3 [shape = 's32[1]{0}', space=sflag, size = 0x4, scoped, tag = 'scoped memory for emotion_model_forward.1']
    %21 = vsyncpa [#allocation3], 0
    // Predicated region
    $region2: #{emotion_model_forward.1} parent=1 // pred_check
      _
    $region3: #{emotion_model_forward.1} parent=1 // pred_check_branch
      %23 = sbr.rel (0) target = $region5
    $region4: #{emotion_model_forward.1} parent=1 // pred_region
      _
    $region5: #{emotion_model_forward.1} parent=1 // pred_fallthru
      _
    // Predicated region
    $region6: #{emotion_model_forward.1} parent=1 // pred_check
      _
    $region7: #{emotion_model_forward.1} parent=1 // pred_check_branch
      %25 = sbr.rel (0) target = $region9
    $region8: #{emotion_model_forward.1} parent=1 // pred_region
      _
    $region9: #{emotion_model_forward.1} parent=1 // pred_fallthru
      _
    // Predicated region
    $region10: #{emotion_model_forward.1} parent=1 // pred_check
      _
    $region11: #{emotion_model_forward.1} parent=1 // pred_check_branch
      %27 = sbr.rel (0) target = $region13
    $region12: #{emotion_model_forward.1} parent=1 // pred_region
      _
    $region13: #{emotion_model_forward.1} parent=1 // pred_fallthru
      _
    // Predicated region
    $region14: #{emotion_model_forward.1} parent=1 // pred_check
      _
    $region15: #{emotion_model_forward.1} parent=1 // pred_check_branch
      %29 = sbr.rel (0) target = $region17
    $region16: #{emotion_model_forward.1} parent=1 // pred_region
      _
    $region17: #{emotion_model_forward.1} parent=1 // pred_fallthru
      _
    // Predicated region
    $region18: #{emotion_model_forward.1} parent=1 // pred_check
      _
    $region19: #{emotion_model_forward.1} parent=1 // pred_check_branch
      %31 = sbr.rel (0) target = $region21
    $region20: #{emotion_model_forward.1} parent=1 // pred_region
      _
    $region21: #{emotion_model_forward.1} parent=1 // pred_fallthru
      _
    // Predicated region
    $region22: #{emotion_model_forward.1} parent=1 // pred_check
      _
    $region23: #{emotion_model_forward.1} parent=1 // pred_check_branch
      %33 = sbr.rel (0) target = $region25
    $region24: #{emotion_model_forward.1} parent=1 // pred_region
      _
    $region25: #{emotion_model_forward.1} parent=1 // pred_fallthru
      _
    // Predicated region
    $region26: #{emotion_model_forward.1} parent=1 // pred_check
      _
    $region27: #{emotion_model_forward.1} parent=1 // pred_check_branch
      %35 = sbr.rel (0) target = $region29
    $region28: #{emotion_model_forward.1} parent=1 // pred_region
      _
    $region29: #{emotion_model_forward.1} parent=1 // pred_fallthru
      _
    // Predicated region
    $region30: #{emotion_model_forward.1} parent=1 // pred_check
      _
    $region31: #{emotion_model_forward.1} parent=1 // pred_check_branch
      %37 = sbr.rel (0) target = $region33
    $region32: #{emotion_model_forward.1} parent=1 // pred_region
      _
    $region33: #{emotion_model_forward.1} parent=1 // pred_fallthru
      _
    // Predicated region
    $region34: #{emotion_model_forward.1} parent=1 // pred_check
      _
    $region35: #{emotion_model_forward.1} parent=1 // pred_check_branch
      %39 = sbr.rel (0) target = $region37
    $region36: #{emotion_model_forward.1} parent=1 // pred_region
      _
    $region37: #{emotion_model_forward.1} parent=1 // pred_fallthru
      _
    // Predicated region
    $region38: #{emotion_model_forward.1} parent=1 // pred_check
      _
    $region39: #{emotion_model_forward.1} parent=1 // pred_check_branch
      %41 = sbr.rel (0) target = $region41
    $region40: #{emotion_model_forward.1} parent=1 // pred_region
      _
    $region41: #{emotion_model_forward.1} parent=1 // pred_fallthru
      _
    // Predicated region
    $region42: #{emotion_model_forward.1} parent=1 // pred_check
      _
    $region43: #{emotion_model_forward.1} parent=1 // pred_check_branch
      %43 = sbr.rel (0) target = $region45
    $region44: #{emotion_model_forward.1} parent=1 // pred_region
      _
    $region45: #{emotion_model_forward.1} parent=1 // pred_fallthru
      _
    // Predicated region
    $region46: #{emotion_model_forward.1} parent=1 // pred_check
      _
    $region47: #{emotion_model_forward.1} parent=1 // pred_check_branch
      %45 = sbr.rel (0) target = $region49
    $region48: #{emotion_model_forward.1} parent=1 // pred_region
      _
    $region49: #{emotion_model_forward.1} parent=1 // pred_fallthru
      _
    // Predicated region
    $region50: #{emotion_model_forward.1} parent=1 // pred_check
      _
    $region51: #{emotion_model_forward.1} parent=1 // pred_check_branch
      %47 = sbr.rel (0) target = $region53
    $region52: #{emotion_model_forward.1} parent=1 // pred_region
      _
    $region53: #{emotion_model_forward.1} parent=1 // pred_fallthru
      _
    // Predicated region
    $region54: #{emotion_model_forward.1} parent=1 // pred_check
      _
    $region55: #{emotion_model_forward.1} parent=1 // pred_check_branch
      %49 = sbr.rel (0) target = $region57
    $region56: #{emotion_model_forward.1} parent=1 // pred_region
      _
    $region57: #{emotion_model_forward.1} parent=1 // pred_fallthru
      _
    // Predicated region
    $region58: #{emotion_model_forward.1} parent=1 // pred_check
      _
    $region59: #{emotion_model_forward.1} parent=1 // pred_check_branch
      %51 = sbr.rel (0) target = $region61
    $region60: #{emotion_model_forward.1} parent=1 // pred_region
      _
    $region61: #{emotion_model_forward.1} parent=1 // pred_fallthru
      _
    // Predicated region
    $region62: #{emotion_model_forward.1} parent=1 // pred_check
      _
    $region63: #{emotion_model_forward.1} parent=1 // pred_check_branch
      %53 = sbr.rel (0) target = $region65
    $region64: #{emotion_model_forward.1} parent=1 // pred_region
      _
    $region65: #{emotion_model_forward.1} parent=1 // pred_fallthru
      _
    %v54 = vld [vmem:[%s0] sm:$0xff]
    %v55 = vld [vmem:[%s0 + $0x8] sm:$0xff]
    %v56 = vld [vmem:[%s1] sm:$0xff]
    %v57 = vld [vmem:[%s1 + $0x8] sm:$0xff]
    %v58 = vadd.f32 %v54, %v56
    %v59 = vadd.f32 %v55, %v57
    %v60 = vld [vmem:[%s2] sm:$0xff]
    %v61 = vld [vmem:[%s2 + $0x8] sm:$0xff]
    %v62 = vld [vmem:[%s2 + $0x10] sm:$0xff]
    %v63 = vld [vmem:[%s2 + $0x18] sm:$0xff]
    %v64 = vld [vmem:[%s3] sm:$0x1]
    %v66 = vlaneseq
    %v67 = vshrl.u32 %v66, 7
    %v68 = vsub.s32 0, %v67
    %v69 = vrot.slane %v64, %v68
    %vm71 = vcmask 261120
    %v73 = vsel %vm71, %v58, 0
    %v76 = vsel %vm71, %v59, 0
    %78 = vmatprep.subr.mxu0 0.0
    %79 = vmatpush1.msra.mxu0 0.0
    %80 = vmatprep.subr.mxu0 0.0
    %81 = vmatpush1.msra.mxu0 0.0
    %82 = vmatprep.subr.mxu0 0.0
    %83 = vmatpush1.msra.mxu0 0.0
    %84 = vmatprep.subr.mxu0 0.0
    %85 = vmatpush1.msra.mxu0 0.0
    %86 = vmatprep.subr.mxu0 0.0
    %87 = vmatpush1.msra.mxu0 0.0
    %88 = vmatprep.subr.mxu0 0.0
    %89 = vmatpush1.msra.mxu0 0.0
    %90 = vmatprep.subr.mxu0 0.0
    %91 = vmatpush1.msra.mxu0 0.0
    %92 = vmatprep.subr.mxu0 0.0
    %93 = vmatpush1.msra.mxu0 0.0
    %94 = vmatprep.subr.mxu0 0.0
    %95 = vmatpush1.msra.mxu0 0.0
    %96 = vmatprep.subr.mxu0 0.0
    %97 = vmatpush1.msra.mxu0 0.0
    %98 = vmatprep.subr.mxu0 0.0
    %99 = vmatpush1.msra.mxu0 0.0
    %100 = vmatprep.subr.mxu0 0.0
    %101 = vmatpush1.msra.mxu0 0.0
    %102 = vmatprep.subr.mxu0 0.0
    %103 = vmatpush1.msra.mxu0 %v63
    %104 = vmatprep.subr.mxu0 0.0
    %105 = vmatpush1.msra.mxu0 %v62
    %106 = vmatprep.subr.mxu0 0.0
    %107 = vmatpush1.msra.mxu0 %v61
    %108 = vmatprep.subr.mxu0 0.0
    %109 = vmatpush1.msra.mxu0 %v60
    %110 = vmatprep.subr.mxu0 0.0
    %111 = vmatpush2.msra.mxu0 0.0
    %112 = vmatprep.subr.mxu0 0.0
    %113 = vmatpush2.msra.mxu0 0.0
    %114 = vmatprep.subr.mxu0 0.0
    %115 = vmatpush2.msra.mxu0 0.0
    %116 = vmatprep.subr.mxu0 0.0
    %117 = vmatpush2.msra.mxu0 0.0
    %118 = vmatprep.subr.mxu0 0.0
    %119 = vmatpush2.msra.mxu0 0.0
    %120 = vmatprep.subr.mxu0 0.0
    %121 = vmatpush2.msra.mxu0 0.0
    %122 = vmatprep.subr.mxu0 0.0
    %123 = vmatpush2.msra.mxu0 0.0
    %124 = vmatprep.subr.mxu0 0.0
    %125 = vmatpush2.msra.mxu0 0.0
    %126 = vmatprep.subr.mxu0 0.0
    %127 = vmatpush2.msra.mxu0 0.0
    %128 = vmatprep.subr.mxu0 0.0
    %129 = vmatpush2.msra.mxu0 0.0
    %130 = vmatprep.subr.mxu0 0.0
    %131 = vmatpush2.msra.mxu0 0.0
    %132 = vmatprep.subr.mxu0 0.0
    %133 = vmatpush2.msra.mxu0 0.0
    %134 = vmatprep.subr.mxu0 0.0
    %135 = vmatpush2.msra.mxu0 0.0
    %136 = vmatprep.subr.mxu0 0.0
    %137 = vmatpush2.msra.mxu0 0.0
    %138 = vmatprep.subr.mxu0 0.0
    %139 = vmatpush2.msra.mxu0 0.0
    %140 = vmatprep.subr.mxu0 0.0
    %141 = vmatpush2.msra.mxu0 0.0
    %142 = vmatprep.mubr.f32.mxu0 0.0
    %143 = vmatmul.mubr.f32.gmra.mxu0 %v73
    %v144 = vpop.f32.mrf.mxu0
    %v145 = vadd.f32 %v69, %v144
    %v146 = vpop.f32.mrf.mxu0
    %147 = vmatprep.mubr.f32.mxu0 0.0
    %148 = vmatmul.mubr.f32.gmra.mxu0 %v76
    %v149 = vpop.f32.mrf.mxu0
    %v150 = vadd.f32 %v69, %v149
    %v151 = vpop.f32.mrf.mxu0
    %152 = vdwg.mxu0
    %v153 = vmul.f32 %v145, 0.35355338
    %v154 = vmul.f32 %v150, 0.35355338
    %157 = vrot.lane.b32.xlu0 %v153, 120
    %v158 = vpop.permute.xlu0 %157
    %159 = vrot.lane.b32.xlu0 %v154, 120
    %v160 = vpop.permute.xlu0 %159
    %161 = vrot.lane.b32.xlu0 %v153, 112
    %v162 = vpop.permute.xlu0 %161
    %163 = vrot.lane.b32.xlu0 %v154, 112
    %v164 = vpop.permute.xlu0 %163
    %165 = vrot.lane.b32.xlu0 %v153, 104
    %v166 = vpop.permute.xlu0 %165
    %167 = vrot.lane.b32.xlu0 %v154, 104
    %v168 = vpop.permute.xlu0 %167
    %171 = vrot.lane.b32.xlu0 %v145, 120
    %v172 = vpop.permute.xlu0 %171
    %173 = vrot.lane.b32.xlu0 %v150, 120
    %v174 = vpop.permute.xlu0 %173
    %175 = vrot.lane.b32.xlu0 %v145, 112
    %v176 = vpop.permute.xlu0 %175
    %177 = vrot.lane.b32.xlu0 %v150, 112
    %v178 = vpop.permute.xlu0 %177
    %179 = vrot.lane.b32.xlu0 %v145, 104
    %v180 = vpop.permute.xlu0 %179
    %181 = vrot.lane.b32.xlu0 %v150, 104
    %v182 = vpop.permute.xlu0 %181
    %183 = vrot.lane.b32.xlu0 %v145, 96
    %v184 = vpop.permute.xlu0 %183
    %vm185 = vcmask 64512
    %v186 = vsel %vm185, %v153, 0
    %v188 = vsel %vm185, %v184, 0
    %190 = vmatprep.subr.mxu0 0.0
    %191 = vmatpush1.xpose.msra.mxu0 0.0
    %192 = vmatprep.subr.mxu0 0.0
    %193 = vmatpush1.xpose.msra.mxu0 0.0
    %194 = vmatprep.subr.mxu0 0.0
    %195 = vmatpush1.xpose.msra.mxu0 0.0
    %196 = vmatprep.subr.mxu0 0.0
    %197 = vmatpush1.xpose.msra.mxu0 0.0
    %198 = vmatprep.subr.mxu0 0.0
    %199 = vmatpush1.xpose.msra.mxu0 0.0
    %200 = vmatprep.subr.mxu0 0.0
    %201 = vmatpush1.xpose.msra.mxu0 0.0
    %202 = vmatprep.subr.mxu0 0.0
    %203 = vmatpush1.xpose.msra.mxu0 0.0
    %204 = vmatprep.subr.mxu0 0.0
    %205 = vmatpush1.xpose.msra.mxu0 0.0
    %206 = vmatprep.subr.mxu0 0.0
    %207 = vmatpush1.xpose.msra.mxu0 0.0
    %208 = vmatprep.subr.mxu0 0.0
    %209 = vmatpush1.xpose.msra.mxu0 0.0
    %210 = vmatprep.subr.mxu0 0.0
    %211 = vmatpush1.xpose.msra.mxu0 0.0
    %212 = vmatprep.subr.mxu0 0.0
    %213 = vmatpush1.xpose.msra.mxu0 0.0
    %214 = vmatprep.subr.mxu0 0.0
    %215 = vmatpush1.xpose.msra.mxu0 0.0
    %216 = vmatprep.subr.mxu0 0.0
    %217 = vmatpush1.xpose.msra.mxu0 0.0
    %218 = vmatprep.subr.mxu0 0.0
    %219 = vmatpush1.xpose.msra.mxu0 0.0
    %220 = vmatprep.subr.mxu0 0.0
    %221 = vmatpush1.xpose.msra.mxu0 %v188
    %222 = vmatprep.subr.mxu0 0.0
    %223 = vmatpush2.xpose.msra.mxu0 0.0
    %224 = vmatprep.subr.mxu0 0.0
    %225 = vmatpush2.xpose.msra.mxu0 0.0
    %226 = vmatprep.subr.mxu0 0.0
    %227 = vmatpush2.xpose.msra.mxu0 0.0
    %228 = vmatprep.subr.mxu0 0.0
    %229 = vmatpush2.xpose.msra.mxu0 0.0
    %230 = vmatprep.subr.mxu0 0.0
    %231 = vmatpush2.xpose.msra.mxu0 0.0
    %232 = vmatprep.subr.mxu0 0.0
    %233 = vmatpush2.xpose.msra.mxu0 0.0
    %234 = vmatprep.subr.mxu0 0.0
    %235 = vmatpush2.xpose.msra.mxu0 0.0
    %236 = vmatprep.subr.mxu0 0.0
    %237 = vmatpush2.xpose.msra.mxu0 0.0
    %238 = vmatprep.subr.mxu0 0.0
    %239 = vmatpush2.xpose.msra.mxu0 0.0
    %240 = vmatprep.subr.mxu0 0.0
    %241 = vmatpush2.xpose.msra.mxu0 0.0
    %242 = vmatprep.subr.mxu0 0.0
    %243 = vmatpush2.xpose.msra.mxu0 0.0
    %244 = vmatprep.subr.mxu0 0.0
    %245 = vmatpush2.xpose.msra.mxu0 0.0
    %246 = vmatprep.subr.mxu0 0.0
    %247 = vmatpush2.xpose.msra.mxu0 0.0
    %248 = vmatprep.subr.mxu0 0.0
    %249 = vmatpush2.xpose.msra.mxu0 0.0
    %250 = vmatprep.subr.mxu0 0.0
    %251 = vmatpush2.xpose.msra.mxu0 0.0
    %252 = vmatprep.subr.mxu0 0.0
    %253 = vmatpush2.xpose.msra.mxu0 0.0
    %254 = vmatprep.mubr.f32.mxu0 0.0
    %255 = vmatmul.mubr.f32.gmra.mxu0 %v186
    %v256 = vpop.f32.mrf.mxu0
    %v257 = vadd.f32 0.0, %v256
    %v258 = vpop.f32.mrf.mxu0
    %259 = vdwg.mxu0
    %260 = vrot.lane.b32.xlu0 %v150, 96
    %v261 = vpop.permute.xlu0 %260
    %v262 = vsel %vm185, %v154, 0
    %v264 = vsel %vm185, %v261, 0
    %266 = vmatprep.subr.mxu0 0.0
    %267 = vmatpush1.xpose.msra.mxu0 0.0
    %268 = vmatprep.subr.mxu0 0.0
    %269 = vmatpush1.xpose.msra.mxu0 0.0
    %270 = vmatprep.subr.mxu0 0.0
    %271 = vmatpush1.xpose.msra.mxu0 0.0
    %272 = vmatprep.subr.mxu0 0.0
    %273 = vmatpush1.xpose.msra.mxu0 0.0
    %274 = vmatprep.subr.mxu0 0.0
    %275 = vmatpush1.xpose.msra.mxu0 0.0
    %276 = vmatprep.subr.mxu0 0.0
    %277 = vmatpush1.xpose.msra.mxu0 0.0
    %278 = vmatprep.subr.mxu0 0.0
    %279 = vmatpush1.xpose.msra.mxu0 0.0
    %280 = vmatprep.subr.mxu0 0.0
    %281 = vmatpush1.xpose.msra.mxu0 0.0
    %282 = vmatprep.subr.mxu0 0.0
    %283 = vmatpush1.xpose.msra.mxu0 0.0
    %284 = vmatprep.subr.mxu0 0.0
    %285 = vmatpush1.xpose.msra.mxu0 0.0
    %286 = vmatprep.subr.mxu0 0.0
    %287 = vmatpush1.xpose.msra.mxu0 0.0
    %288 = vmatprep.subr.mxu0 0.0
    %289 = vmatpush1.xpose.msra.mxu0 0.0
    %290 = vmatprep.subr.mxu0 0.0
    %291 = vmatpush1.xpose.msra.mxu0 0.0
    %292 = vmatprep.subr.mxu0 0.0
    %293 = vmatpush1.xpose.msra.mxu0 0.0
    %294 = vmatprep.subr.mxu0 0.0
    %295 = vmatpush1.xpose.msra.mxu0 0.0
    %296 = vmatprep.subr.mxu0 0.0
    %297 = vmatpush1.xpose.msra.mxu0 %v264
    %298 = vmatprep.subr.mxu0 0.0
    %299 = vmatpush2.xpose.msra.mxu0 0.0
    %300 = vmatprep.subr.mxu0 0.0
    %301 = vmatpush2.xpose.msra.mxu0 0.0
    %302 = vmatprep.subr.mxu0 0.0
    %303 = vmatpush2.xpose.msra.mxu0 0.0
    %304 = vmatprep.subr.mxu0 0.0
    %305 = vmatpush2.xpose.msra.mxu0 0.0
    %306 = vmatprep.subr.mxu0 0.0
    %307 = vmatpush2.xpose.msra.mxu0 0.0
    %308 = vmatprep.subr.mxu0 0.0
    %309 = vmatpush2.xpose.msra.mxu0 0.0
    %310 = vmatprep.subr.mxu0 0.0
    %311 = vmatpush2.xpose.msra.mxu0 0.0
    %312 = vmatprep.subr.mxu0 0.0
    %313 = vmatpush2.xpose.msra.mxu0 0.0
    %314 = vmatprep.subr.mxu0 0.0
    %315 = vmatpush2.xpose.msra.mxu0 0.0
    %316 = vmatprep.subr.mxu0 0.0
    %317 = vmatpush2.xpose.msra.mxu0 0.0
    %318 = vmatprep.subr.mxu0 0.0
    %319 = vmatpush2.xpose.msra.mxu0 0.0
    %320 = vmatprep.subr.mxu0 0.0
    %321 = vmatpush2.xpose.msra.mxu0 0.0
    %322 = vmatprep.subr.mxu0 0.0
    %323 = vmatpush2.xpose.msra.mxu0 0.0
    %324 = vmatprep.subr.mxu0 0.0
    %325 = vmatpush2.xpose.msra.mxu0 0.0
    %326 = vmatprep.subr.mxu0 0.0
    %327 = vmatpush2.xpose.msra.mxu0 0.0
    %328 = vmatprep.subr.mxu0 0.0
    %329 = vmatpush2.xpose.msra.mxu0 0.0
    %330 = vmatprep.mubr.f32.mxu0 0.0
    %331 = vmatmul.mubr.f32.gmra.mxu0 %v262
    %v332 = vpop.f32.mrf.mxu0
    %v333 = vadd.f32 0.0, %v332
    %v334 = vpop.f32.mrf.mxu0
    %335 = vdwg.mxu0
    %336 = vrot.lane.b32.xlu0 %v172, 96
    %v337 = vpop.permute.xlu0 %336
    %v338 = vsel %vm185, %v158, 0
    %v340 = vsel %vm185, %v337, 0
    %342 = vmatprep.subr.mxu0 0.0
    %343 = vmatpush1.xpose.msra.mxu0 0.0
    %344 = vmatprep.subr.mxu0 0.0
    %345 = vmatpush1.xpose.msra.mxu0 0.0
    %346 = vmatprep.subr.mxu0 0.0
    %347 = vmatpush1.xpose.msra.mxu0 0.0
    %348 = vmatprep.subr.mxu0 0.0
    %349 = vmatpush1.xpose.msra.mxu0 0.0
    %350 = vmatprep.subr.mxu0 0.0
    %351 = vmatpush1.xpose.msra.mxu0 0.0
    %352 = vmatprep.subr.mxu0 0.0
    %353 = vmatpush1.xpose.msra.mxu0 0.0
    %354 = vmatprep.subr.mxu0 0.0
    %355 = vmatpush1.xpose.msra.mxu0 0.0
    %356 = vmatprep.subr.mxu0 0.0
    %357 = vmatpush1.xpose.msra.mxu0 0.0
    %358 = vmatprep.subr.mxu0 0.0
    %359 = vmatpush1.xpose.msra.mxu0 0.0
    %360 = vmatprep.subr.mxu0 0.0
    %361 = vmatpush1.xpose.msra.mxu0 0.0
    %362 = vmatprep.subr.mxu0 0.0
    %363 = vmatpush1.xpose.msra.mxu0 0.0
    %364 = vmatprep.subr.mxu0 0.0
    %365 = vmatpush1.xpose.msra.mxu0 0.0
    %366 = vmatprep.subr.mxu0 0.0
    %367 = vmatpush1.xpose.msra.mxu0 0.0
    %368 = vmatprep.subr.mxu0 0.0
    %369 = vmatpush1.xpose.msra.mxu0 0.0
    %370 = vmatprep.subr.mxu0 0.0
    %371 = vmatpush1.xpose.msra.mxu0 0.0
    %372 = vmatprep.subr.mxu0 0.0
    %373 = vmatpush1.xpose.msra.mxu0 %v340
    %374 = vmatprep.subr.mxu0 0.0
    %375 = vmatpush2.xpose.msra.mxu0 0.0
    %376 = vmatprep.subr.mxu0 0.0
    %377 = vmatpush2.xpose.msra.mxu0 0.0
    %378 = vmatprep.subr.mxu0 0.0
    %379 = vmatpush2.xpose.msra.mxu0 0.0
    %380 = vmatprep.subr.mxu0 0.0
    %381 = vmatpush2.xpose.msra.mxu0 0.0
    %382 = vmatprep.subr.mxu0 0.0
    %383 = vmatpush2.xpose.msra.mxu0 0.0
    %384 = vmatprep.subr.mxu0 0.0
    %385 = vmatpush2.xpose.msra.mxu0 0.0
    %386 = vmatprep.subr.mxu0 0.0
    %387 = vmatpush2.xpose.msra.mxu0 0.0
    %388 = vmatprep.subr.mxu0 0.0
    %389 = vmatpush2.xpose.msra.mxu0 0.0
    %390 = vmatprep.subr.mxu0 0.0
    %391 = vmatpush2.xpose.msra.mxu0 0.0
    %392 = vmatprep.subr.mxu0 0.0
    %393 = vmatpush2.xpose.msra.mxu0 0.0
    %394 = vmatprep.subr.mxu0 0.0
    %395 = vmatpush2.xpose.msra.mxu0 0.0
    %396 = vmatprep.subr.mxu0 0.0
    %397 = vmatpush2.xpose.msra.mxu0 0.0
    %398 = vmatprep.subr.mxu0 0.0
    %399 = vmatpush2.xpose.msra.mxu0 0.0
    %400 = vmatprep.subr.mxu0 0.0
    %401 = vmatpush2.xpose.msra.mxu0 0.0
    %402 = vmatprep.subr.mxu0 0.0
    %403 = vmatpush2.xpose.msra.mxu0 0.0
    %404 = vmatprep.subr.mxu0 0.0
    %405 = vmatpush2.xpose.msra.mxu0 0.0
    %406 = vmatprep.mubr.f32.mxu0 0.0
    %407 = vmatmul.mubr.f32.gmra.mxu0 %v338
    %v408 = vpop.f32.mrf.mxu0
    %v409 = vadd.f32 0.0, %v408
    %v410 = vpop.f32.mrf.mxu0
    %411 = vdwg.mxu0
    %412 = vrot.lane.b32.xlu0 %v174, 96
    %v413 = vpop.permute.xlu0 %412
    %v414 = vsel %vm185, %v160, 0
    %v416 = vsel %vm185, %v413, 0
    %418 = vmatprep.subr.mxu0 0.0
    %419 = vmatpush1.xpose.msra.mxu0 0.0
    %420 = vmatprep.subr.mxu0 0.0
    %421 = vmatpush1.xpose.msra.mxu0 0.0
    %422 = vmatprep.subr.mxu0 0.0
    %423 = vmatpush1.xpose.msra.mxu0 0.0
    %424 = vmatprep.subr.mxu0 0.0
    %425 = vmatpush1.xpose.msra.mxu0 0.0
    %426 = vmatprep.subr.mxu0 0.0
    %427 = vmatpush1.xpose.msra.mxu0 0.0
    %428 = vmatprep.subr.mxu0 0.0
    %429 = vmatpush1.xpose.msra.mxu0 0.0
    %430 = vmatprep.subr.mxu0 0.0
    %431 = vmatpush1.xpose.msra.mxu0 0.0
    %432 = vmatprep.subr.mxu0 0.0
    %433 = vmatpush1.xpose.msra.mxu0 0.0
    %434 = vmatprep.subr.mxu0 0.0
    %435 = vmatpush1.xpose.msra.mxu0 0.0
    %436 = vmatprep.subr.mxu0 0.0
    %437 = vmatpush1.xpose.msra.mxu0 0.0
    %438 = vmatprep.subr.mxu0 0.0
    %439 = vmatpush1.xpose.msra.mxu0 0.0
    %440 = vmatprep.subr.mxu0 0.0
    %441 = vmatpush1.xpose.msra.mxu0 0.0
    %442 = vmatprep.subr.mxu0 0.0
    %443 = vmatpush1.xpose.msra.mxu0 0.0
    %444 = vmatprep.subr.mxu0 0.0
    %445 = vmatpush1.xpose.msra.mxu0 0.0
    %446 = vmatprep.subr.mxu0 0.0
    %447 = vmatpush1.xpose.msra.mxu0 0.0
    %448 = vmatprep.subr.mxu0 0.0
    %449 = vmatpush1.xpose.msra.mxu0 %v416
    %450 = vmatprep.subr.mxu0 0.0
    %451 = vmatpush2.xpose.msra.mxu0 0.0
    %452 = vmatprep.subr.mxu0 0.0
    %453 = vmatpush2.xpose.msra.mxu0 0.0
    %454 = vmatprep.subr.mxu0 0.0
    %455 = vmatpush2.xpose.msra.mxu0 0.0
    %456 = vmatprep.subr.mxu0 0.0
    %457 = vmatpush2.xpose.msra.mxu0 0.0
    %458 = vmatprep.subr.mxu0 0.0
    %459 = vmatpush2.xpose.msra.mxu0 0.0
    %460 = vmatprep.subr.mxu0 0.0
    %461 = vmatpush2.xpose.msra.mxu0 0.0
    %462 = vmatprep.subr.mxu0 0.0
    %463 = vmatpush2.xpose.msra.mxu0 0.0
    %464 = vmatprep.subr.mxu0 0.0
    %465 = vmatpush2.xpose.msra.mxu0 0.0
    %466 = vmatprep.subr.mxu0 0.0
    %467 = vmatpush2.xpose.msra.mxu0 0.0
    %468 = vmatprep.subr.mxu0 0.0
    %469 = vmatpush2.xpose.msra.mxu0 0.0
    %470 = vmatprep.subr.mxu0 0.0
    %471 = vmatpush2.xpose.msra.mxu0 0.0
    %472 = vmatprep.subr.mxu0 0.0
    %473 = vmatpush2.xpose.msra.mxu0 0.0
    %474 = vmatprep.subr.mxu0 0.0
    %475 = vmatpush2.xpose.msra.mxu0 0.0
    %476 = vmatprep.subr.mxu0 0.0
    %477 = vmatpush2.xpose.msra.mxu0 0.0
    %478 = vmatprep.subr.mxu0 0.0
    %479 = vmatpush2.xpose.msra.mxu0 0.0
    %480 = vmatprep.subr.mxu0 0.0
    %481 = vmatpush2.xpose.msra.mxu0 0.0
    %482 = vmatprep.mubr.f32.mxu0 0.0
    %483 = vmatmul.mubr.f32.gmra.mxu0 %v414
    %v484 = vpop.f32.mrf.mxu0
    %v485 = vadd.f32 0.0, %v484
    %v486 = vpop.f32.mrf.mxu0
    %487 = vdwg.mxu0
    %488 = vrot.lane.b32.xlu0 %v176, 96
    %v489 = vpop.permute.xlu0 %488
    %v490 = vsel %vm185, %v162, 0
    %v492 = vsel %vm185, %v489, 0
    %494 = vmatprep.subr.mxu0 0.0
    %495 = vmatpush1.xpose.msra.mxu0 0.0
    %496 = vmatprep.subr.mxu0 0.0
    %497 = vmatpush1.xpose.msra.mxu0 0.0
    %498 = vmatprep.subr.mxu0 0.0
    %499 = vmatpush1.xpose.msra.mxu0 0.0
    %500 = vmatprep.subr.mxu0 0.0
    %501 = vmatpush1.xpose.msra.mxu0 0.0
    %502 = vmatprep.subr.mxu0 0.0
    %503 = vmatpush1.xpose.msra.mxu0 0.0
    %504 = vmatprep.subr.mxu0 0.0
    %505 = vmatpush1.xpose.msra.mxu0 0.0
    %506 = vmatprep.subr.mxu0 0.0
    %507 = vmatpush1.xpose.msra.mxu0 0.0
    %508 = vmatprep.subr.mxu0 0.0
    %509 = vmatpush1.xpose.msra.mxu0 0.0
    %510 = vmatprep.subr.mxu0 0.0
    %511 = vmatpush1.xpose.msra.mxu0 0.0
    %512 = vmatprep.subr.mxu0 0.0
    %513 = vmatpush1.xpose.msra.mxu0 0.0
    %514 = vmatprep.subr.mxu0 0.0
    %515 = vmatpush1.xpose.msra.mxu0 0.0
    %516 = vmatprep.subr.mxu0 0.0
    %517 = vmatpush1.xpose.msra.mxu0 0.0
    %518 = vmatprep.subr.mxu0 0.0
    %519 = vmatpush1.xpose.msra.mxu0 0.0
    %520 = vmatprep.subr.mxu0 0.0
    %521 = vmatpush1.xpose.msra.mxu0 0.0
    %522 = vmatprep.subr.mxu0 0.0
    %523 = vmatpush1.xpose.msra.mxu0 0.0
    %524 = vmatprep.subr.mxu0 0.0
    %525 = vmatpush1.xpose.msra.mxu0 %v492
    %526 = vmatprep.subr.mxu0 0.0
    %527 = vmatpush2.xpose.msra.mxu0 0.0
    %528 = vmatprep.subr.mxu0 0.0
    %529 = vmatpush2.xpose.msra.mxu0 0.0
    %530 = vmatprep.subr.mxu0 0.0
    %531 = vmatpush2.xpose.msra.mxu0 0.0
    %532 = vmatprep.subr.mxu0 0.0
    %533 = vmatpush2.xpose.msra.mxu0 0.0
    %534 = vmatprep.subr.mxu0 0.0
    %535 = vmatpush2.xpose.msra.mxu0 0.0
    %536 = vmatprep.subr.mxu0 0.0
    %537 = vmatpush2.xpose.msra.mxu0 0.0
    %538 = vmatprep.subr.mxu0 0.0
    %539 = vmatpush2.xpose.msra.mxu0 0.0
    %540 = vmatprep.subr.mxu0 0.0
    %541 = vmatpush2.xpose.msra.mxu0 0.0
    %542 = vmatprep.subr.mxu0 0.0
    %543 = vmatpush2.xpose.msra.mxu0 0.0
    %544 = vmatprep.subr.mxu0 0.0
    %545 = vmatpush2.xpose.msra.mxu0 0.0
    %546 = vmatprep.subr.mxu0 0.0
    %547 = vmatpush2.xpose.msra.mxu0 0.0
    %548 = vmatprep.subr.mxu0 0.0
    %549 = vmatpush2.xpose.msra.mxu0 0.0
    %550 = vmatprep.subr.mxu0 0.0
    %551 = vmatpush2.xpose.msra.mxu0 0.0
    %552 = vmatprep.subr.mxu0 0.0
    %553 = vmatpush2.xpose.msra.mxu0 0.0
    %554 = vmatprep.subr.mxu0 0.0
    %555 = vmatpush2.xpose.msra.mxu0 0.0
    %556 = vmatprep.subr.mxu0 0.0
    %557 = vmatpush2.xpose.msra.mxu0 0.0
    %558 = vmatprep.mubr.f32.mxu0 0.0
    %559 = vmatmul.mubr.f32.gmra.mxu0 %v490
    %v560 = vpop.f32.mrf.mxu0
    %v561 = vadd.f32 0.0, %v560
    %v562 = vpop.f32.mrf.mxu0
    %563 = vdwg.mxu0
    %564 = vrot.lane.b32.xlu0 %v178, 96
    %v565 = vpop.permute.xlu0 %564
    %v566 = vsel %vm185, %v164, 0
    %v568 = vsel %vm185, %v565, 0
    %570 = vmatprep.subr.mxu0 0.0
    %571 = vmatpush1.xpose.msra.mxu0 0.0
    %572 = vmatprep.subr.mxu0 0.0
    %573 = vmatpush1.xpose.msra.mxu0 0.0
    %574 = vmatprep.subr.mxu0 0.0
    %575 = vmatpush1.xpose.msra.mxu0 0.0
    %576 = vmatprep.subr.mxu0 0.0
    %577 = vmatpush1.xpose.msra.mxu0 0.0
    %578 = vmatprep.subr.mxu0 0.0
    %579 = vmatpush1.xpose.msra.mxu0 0.0
    %580 = vmatprep.subr.mxu0 0.0
    %581 = vmatpush1.xpose.msra.mxu0 0.0
    %582 = vmatprep.subr.mxu0 0.0
    %583 = vmatpush1.xpose.msra.mxu0 0.0
    %584 = vmatprep.subr.mxu0 0.0
    %585 = vmatpush1.xpose.msra.mxu0 0.0
    %586 = vmatprep.subr.mxu0 0.0
    %587 = vmatpush1.xpose.msra.mxu0 0.0
    %588 = vmatprep.subr.mxu0 0.0
    %589 = vmatpush1.xpose.msra.mxu0 0.0
    %590 = vmatprep.subr.mxu0 0.0
    %591 = vmatpush1.xpose.msra.mxu0 0.0
    %592 = vmatprep.subr.mxu0 0.0
    %593 = vmatpush1.xpose.msra.mxu0 0.0
    %594 = vmatprep.subr.mxu0 0.0
    %595 = vmatpush1.xpose.msra.mxu0 0.0
    %596 = vmatprep.subr.mxu0 0.0
    %597 = vmatpush1.xpose.msra.mxu0 0.0
    %598 = vmatprep.subr.mxu0 0.0
    %599 = vmatpush1.xpose.msra.mxu0 0.0
    %600 = vmatprep.subr.mxu0 0.0
    %601 = vmatpush1.xpose.msra.mxu0 %v568
    %602 = vmatprep.subr.mxu0 0.0
    %603 = vmatpush2.xpose.msra.mxu0 0.0
    %604 = vmatprep.subr.mxu0 0.0
    %605 = vmatpush2.xpose.msra.mxu0 0.0
    %606 = vmatprep.subr.mxu0 0.0
    %607 = vmatpush2.xpose.msra.mxu0 0.0
    %608 = vmatprep.subr.mxu0 0.0
    %609 = vmatpush2.xpose.msra.mxu0 0.0
    %610 = vmatprep.subr.mxu0 0.0
    %611 = vmatpush2.xpose.msra.mxu0 0.0
    %612 = vmatprep.subr.mxu0 0.0
    %613 = vmatpush2.xpose.msra.mxu0 0.0
    %614 = vmatprep.subr.mxu0 0.0
    %615 = vmatpush2.xpose.msra.mxu0 0.0
    %616 = vmatprep.subr.mxu0 0.0
    %617 = vmatpush2.xpose.msra.mxu0 0.0
    %618 = vmatprep.subr.mxu0 0.0
    %619 = vmatpush2.xpose.msra.mxu0 0.0
    %620 = vmatprep.subr.mxu0 0.0
    %621 = vmatpush2.xpose.msra.mxu0 0.0
    %622 = vmatprep.subr.mxu0 0.0
    %623 = vmatpush2.xpose.msra.mxu0 0.0
    %624 = vmatprep.subr.mxu0 0.0
    %625 = vmatpush2.xpose.msra.mxu0 0.0
    %626 = vmatprep.subr.mxu0 0.0
    %627 = vmatpush2.xpose.msra.mxu0 0.0
    %628 = vmatprep.subr.mxu0 0.0
    %629 = vmatpush2.xpose.msra.mxu0 0.0
    %630 = vmatprep.subr.mxu0 0.0
    %631 = vmatpush2.xpose.msra.mxu0 0.0
    %632 = vmatprep.subr.mxu0 0.0
    %633 = vmatpush2.xpose.msra.mxu0 0.0
    %634 = vmatprep.mubr.f32.mxu0 0.0
    %635 = vmatmul.mubr.f32.gmra.mxu0 %v566
    %v636 = vpop.f32.mrf.mxu0
    %v637 = vadd.f32 0.0, %v636
    %v638 = vpop.f32.mrf.mxu0
    %639 = vdwg.mxu0
    %640 = vrot.lane.b32.xlu0 %v180, 96
    %v641 = vpop.permute.xlu0 %640
    %v642 = vsel %vm185, %v166, 0
    %v644 = vsel %vm185, %v641, 0
    %646 = vmatprep.subr.mxu0 0.0
    %647 = vmatpush1.xpose.msra.mxu0 0.0
    %648 = vmatprep.subr.mxu0 0.0
    %649 = vmatpush1.xpose.msra.mxu0 0.0
    %650 = vmatprep.subr.mxu0 0.0
    %651 = vmatpush1.xpose.msra.mxu0 0.0
    %652 = vmatprep.subr.mxu0 0.0
    %653 = vmatpush1.xpose.msra.mxu0 0.0
    %654 = vmatprep.subr.mxu0 0.0
    %655 = vmatpush1.xpose.msra.mxu0 0.0
    %656 = vmatprep.subr.mxu0 0.0
    %657 = vmatpush1.xpose.msra.mxu0 0.0
    %658 = vmatprep.subr.mxu0 0.0
    %659 = vmatpush1.xpose.msra.mxu0 0.0
    %660 = vmatprep.subr.mxu0 0.0
    %661 = vmatpush1.xpose.msra.mxu0 0.0
    %662 = vmatprep.subr.mxu0 0.0
    %663 = vmatpush1.xpose.msra.mxu0 0.0
    %664 = vmatprep.subr.mxu0 0.0
    %665 = vmatpush1.xpose.msra.mxu0 0.0
    %666 = vmatprep.subr.mxu0 0.0
    %667 = vmatpush1.xpose.msra.mxu0 0.0
    %668 = vmatprep.subr.mxu0 0.0
    %669 = vmatpush1.xpose.msra.mxu0 0.0
    %670 = vmatprep.subr.mxu0 0.0
    %671 = vmatpush1.xpose.msra.mxu0 0.0
    %672 = vmatprep.subr.mxu0 0.0
    %673 = vmatpush1.xpose.msra.mxu0 0.0
    %674 = vmatprep.subr.mxu0 0.0
    %675 = vmatpush1.xpose.msra.mxu0 0.0
    %676 = vmatprep.subr.mxu0 0.0
    %677 = vmatpush1.xpose.msra.mxu0 %v644
    %678 = vmatprep.subr.mxu0 0.0
    %679 = vmatpush2.xpose.msra.mxu0 0.0
    %680 = vmatprep.subr.mxu0 0.0
    %681 = vmatpush2.xpose.msra.mxu0 0.0
    %682 = vmatprep.subr.mxu0 0.0
    %683 = vmatpush2.xpose.msra.mxu0 0.0
    %684 = vmatprep.subr.mxu0 0.0
    %685 = vmatpush2.xpose.msra.mxu0 0.0
    %686 = vmatprep.subr.mxu0 0.0
    %687 = vmatpush2.xpose.msra.mxu0 0.0
    %688 = vmatprep.subr.mxu0 0.0
    %689 = vmatpush2.xpose.msra.mxu0 0.0
    %690 = vmatprep.subr.mxu0 0.0
    %691 = vmatpush2.xpose.msra.mxu0 0.0
    %692 = vmatprep.subr.mxu0 0.0
    %693 = vmatpush2.xpose.msra.mxu0 0.0
    %694 = vmatprep.subr.mxu0 0.0
    %695 = vmatpush2.xpose.msra.mxu0 0.0
    %696 = vmatprep.subr.mxu0 0.0
    %697 = vmatpush2.xpose.msra.mxu0 0.0
    %698 = vmatprep.subr.mxu0 0.0
    %699 = vmatpush2.xpose.msra.mxu0 0.0
    %700 = vmatprep.subr.mxu0 0.0
    %701 = vmatpush2.xpose.msra.mxu0 0.0
    %702 = vmatprep.subr.mxu0 0.0
    %703 = vmatpush2.xpose.msra.mxu0 0.0
    %704 = vmatprep.subr.mxu0 0.0
    %705 = vmatpush2.xpose.msra.mxu0 0.0
    %706 = vmatprep.subr.mxu0 0.0
    %707 = vmatpush2.xpose.msra.mxu0 0.0
    %708 = vmatprep.subr.mxu0 0.0
    %709 = vmatpush2.xpose.msra.mxu0 0.0
    %710 = vmatprep.mubr.f32.mxu0 0.0
    %711 = vmatmul.mubr.f32.gmra.mxu0 %v642
    %v712 = vpop.f32.mrf.mxu0
    %v713 = vadd.f32 0.0, %v712
    %v714 = vpop.f32.mrf.mxu0
    %715 = vdwg.mxu0
    %716 = vrot.lane.b32.xlu0 %v182, 96
    %v717 = vpop.permute.xlu0 %716
    %v718 = vsel %vm185, %v168, 0
    %v720 = vsel %vm185, %v717, 0
    %722 = vmatprep.subr.mxu0 0.0
    %723 = vmatpush1.xpose.msra.mxu0 0.0
    %724 = vmatprep.subr.mxu0 0.0
    %725 = vmatpush1.xpose.msra.mxu0 0.0
    %726 = vmatprep.subr.mxu0 0.0
    %727 = vmatpush1.xpose.msra.mxu0 0.0
    %728 = vmatprep.subr.mxu0 0.0
    %729 = vmatpush1.xpose.msra.mxu0 0.0
    %730 = vmatprep.subr.mxu0 0.0
    %731 = vmatpush1.xpose.msra.mxu0 0.0
    %732 = vmatprep.subr.mxu0 0.0
    %733 = vmatpush1.xpose.msra.mxu0 0.0
    %734 = vmatprep.subr.mxu0 0.0
    %735 = vmatpush1.xpose.msra.mxu0 0.0
    %736 = vmatprep.subr.mxu0 0.0
    %737 = vmatpush1.xpose.msra.mxu0 0.0
    %738 = vmatprep.subr.mxu0 0.0
    %739 = vmatpush1.xpose.msra.mxu0 0.0
    %740 = vmatprep.subr.mxu0 0.0
    %741 = vmatpush1.xpose.msra.mxu0 0.0
    %742 = vmatprep.subr.mxu0 0.0
    %743 = vmatpush1.xpose.msra.mxu0 0.0
    %744 = vmatprep.subr.mxu0 0.0
    %745 = vmatpush1.xpose.msra.mxu0 0.0
    %746 = vmatprep.subr.mxu0 0.0
    %747 = vmatpush1.xpose.msra.mxu0 0.0
    %748 = vmatprep.subr.mxu0 0.0
    %749 = vmatpush1.xpose.msra.mxu0 0.0
    %750 = vmatprep.subr.mxu0 0.0
    %751 = vmatpush1.xpose.msra.mxu0 0.0
    %752 = vmatprep.subr.mxu0 0.0
    %753 = vmatpush1.xpose.msra.mxu0 %v720
    %754 = vmatprep.subr.mxu0 0.0
    %755 = vmatpush2.xpose.msra.mxu0 0.0
    %756 = vmatprep.subr.mxu0 0.0
    %757 = vmatpush2.xpose.msra.mxu0 0.0
    %758 = vmatprep.subr.mxu0 0.0
    %759 = vmatpush2.xpose.msra.mxu0 0.0
    %760 = vmatprep.subr.mxu0 0.0
    %761 = vmatpush2.xpose.msra.mxu0 0.0
    %762 = vmatprep.subr.mxu0 0.0
    %763 = vmatpush2.xpose.msra.mxu0 0.0
    %764 = vmatprep.subr.mxu0 0.0
    %765 = vmatpush2.xpose.msra.mxu0 0.0
    %766 = vmatprep.subr.mxu0 0.0
    %767 = vmatpush2.xpose.msra.mxu0 0.0
    %768 = vmatprep.subr.mxu0 0.0
    %769 = vmatpush2.xpose.msra.mxu0 0.0
    %770 = vmatprep.subr.mxu0 0.0
    %771 = vmatpush2.xpose.msra.mxu0 0.0
    %772 = vmatprep.subr.mxu0 0.0
    %773 = vmatpush2.xpose.msra.mxu0 0.0
    %774 = vmatprep.subr.mxu0 0.0
    %775 = vmatpush2.xpose.msra.mxu0 0.0
    %776 = vmatprep.subr.mxu0 0.0
    %777 = vmatpush2.xpose.msra.mxu0 0.0
    %778 = vmatprep.subr.mxu0 0.0
    %779 = vmatpush2.xpose.msra.mxu0 0.0
    %780 = vmatprep.subr.mxu0 0.0
    %781 = vmatpush2.xpose.msra.mxu0 0.0
    %782 = vmatprep.subr.mxu0 0.0
    %783 = vmatpush2.xpose.msra.mxu0 0.0
    %784 = vmatprep.subr.mxu0 0.0
    %785 = vmatpush2.xpose.msra.mxu0 0.0
    %786 = vmatprep.mubr.f32.mxu0 0.0
    %787 = vmatmul.mubr.f32.gmra.mxu0 %v718
    %v788 = vpop.f32.mrf.mxu0
    %v789 = vadd.f32 0.0, %v788
    %v790 = vpop.f32.mrf.mxu0
    %791 = vdwg.mxu0
    %v792 = vsel %vm185, %v257, -inf
    %793 = vmax.xlane.f32.xlu0 %v792
    %v794 = vpop.xlane.xlu0 %793
    %v795 = vsel %vm185, %v333, -inf
    %796 = vmax.xlane.f32.xlu0 %v795
    %v797 = vpop.xlane.xlu0 %796
    %v798 = vsel %vm185, %v409, -inf
    %799 = vmax.xlane.f32.xlu0 %v798
    %v800 = vpop.xlane.xlu0 %799
    %v801 = vsel %vm185, %v485, -inf
    %802 = vmax.xlane.f32.xlu0 %v801
    %v803 = vpop.xlane.xlu0 %802
    %v804 = vsel %vm185, %v561, -inf
    %805 = vmax.xlane.f32.xlu0 %v804
    %v806 = vpop.xlane.xlu0 %805
    %v807 = vsel %vm185, %v637, -inf
    %808 = vmax.xlane.f32.xlu0 %v807
    %v809 = vpop.xlane.xlu0 %808
    %v810 = vsel %vm185, %v713, -inf
    %811 = vmax.xlane.f32.xlu0 %v810
    %v812 = vpop.xlane.xlu0 %811
    %v813 = vsel %vm185, %v789, -inf
    %814 = vmax.xlane.f32.xlu0 %v813
    %v815 = vpop.xlane.xlu0 %814
    %v816 = vsub.f32 %v257, %v794
    %v817 = vsub.f32 %v333, %v797
    %v818 = vsub.f32 %v409, %v800
    %v819 = vsub.f32 %v485, %v803
    %v820 = vsub.f32 %v561, %v806
    %v821 = vsub.f32 %v637, %v809
    %v822 = vsub.f32 %v713, %v812
    %v823 = vsub.f32 %v789, %v815
    %v824 = vmul.f32 %v816, 1.442695
    %v825 = vpow.pop %v824
    %v826 = vmul.f32 %v817, 1.442695
    %v827 = vpow.pop %v826
    %v828 = vmul.f32 %v818, 1.442695
    %v829 = vpow.pop %v828
    %v830 = vmul.f32 %v819, 1.442695
    %v831 = vpow.pop %v830
    %v832 = vmul.f32 %v820, 1.442695
    %v833 = vpow.pop %v832
    %v834 = vmul.f32 %v821, 1.442695
    %v835 = vpow.pop %v834
    %v836 = vmul.f32 %v822, 1.442695
    %v837 = vpow.pop %v836
    %v838 = vmul.f32 %v823, 1.442695
    %v839 = vpow.pop %v838
    %v840 = vsel %vm185, %v825, 0.0
    %841 = vadd.xlane.f32.xlu0 %v840
    %v842 = vpop.xlane.xlu0 %841
    %v843 = vsel %vm185, %v827, 0.0
    %844 = vadd.xlane.f32.xlu0 %v843
    %v845 = vpop.xlane.xlu0 %844
    %v846 = vsel %vm185, %v829, 0.0
    %847 = vadd.xlane.f32.xlu0 %v846
    %v848 = vpop.xlane.xlu0 %847
    %v849 = vsel %vm185, %v831, 0.0
    %850 = vadd.xlane.f32.xlu0 %v849
    %v851 = vpop.xlane.xlu0 %850
    %v852 = vsel %vm185, %v833, 0.0
    %853 = vadd.xlane.f32.xlu0 %v852
    %v854 = vpop.xlane.xlu0 %853
    %v855 = vsel %vm185, %v835, 0.0
    %856 = vadd.xlane.f32.xlu0 %v855
    %v857 = vpop.xlane.xlu0 %856
    %v858 = vsel %vm185, %v837, 0.0
    %859 = vadd.xlane.f32.xlu0 %v858
    %v860 = vpop.xlane.xlu0 %859
    %v861 = vsel %vm185, %v839, 0.0
    %862 = vadd.xlane.f32.xlu0 %v861
    %v863 = vpop.xlane.xlu0 %862
    %v864 = vrcp.pop %v842
    %v865 = vrcp.pop %v845
    %v866 = vrcp.pop %v848
    %v867 = vrcp.pop %v851
    %v868 = vrcp.pop %v854
    %v869 = vrcp.pop %v857
    %v870 = vrcp.pop %v860
    %v871 = vrcp.pop %v863
    %v872 = vmul.f32 %v825, %v864
    %v873 = vmul.f32 %v827, %v865
    %v874 = vmul.f32 %v829, %v866
    %v875 = vmul.f32 %v831, %v867
    %v876 = vmul.f32 %v833, %v868
    %v877 = vmul.f32 %v835, %v869
    %v878 = vmul.f32 %v837, %v870
    %v879 = vmul.f32 %v839, %v871
    %880 = vrot.lane.b32.xlu0 %v145, 64
    %v881 = vpop.permute.xlu0 %880
    %v884 = vsel %vm185, %v872, 0
    %886 = vmatprep.subr.mxu0 0.0
    %887 = vmatpush1.msra.mxu0 0.0
    %888 = vmatprep.subr.mxu0 0.0
    %889 = vmatpush1.msra.mxu0 0.0
    %890 = vmatprep.subr.mxu0 0.0
    %891 = vmatpush1.msra.mxu0 0.0
    %892 = vmatprep.subr.mxu0 0.0
    %893 = vmatpush1.msra.mxu0 0.0
    %894 = vmatprep.subr.mxu0 0.0
    %895 = vmatpush1.msra.mxu0 0.0
    %896 = vmatprep.subr.mxu0 0.0
    %897 = vmatpush1.msra.mxu0 0.0
    %898 = vmatprep.subr.mxu0 0.0
    %899 = vmatpush1.msra.mxu0 0.0
    %900 = vmatprep.subr.mxu0 0.0
    %901 = vmatpush1.msra.mxu0 0.0
    %902 = vmatprep.subr.mxu0 0.0
    %903 = vmatpush1.msra.mxu0 0.0
    %904 = vmatprep.subr.mxu0 0.0
    %905 = vmatpush1.msra.mxu0 0.0
    %906 = vmatprep.subr.mxu0 0.0
    %907 = vmatpush1.msra.mxu0 0.0
    %908 = vmatprep.subr.mxu0 0.0
    %909 = vmatpush1.msra.mxu0 0.0
    %910 = vmatprep.subr.mxu0 0.0
    %911 = vmatpush1.msra.mxu0 0.0
    %912 = vmatprep.subr.mxu0 0.0
    %913 = vmatpush1.msra.mxu0 0.0
    %914 = vmatprep.subr.mxu0 0.0
    %915 = vmatpush1.msra.mxu0 0.0
    %916 = vmatprep.subr.mxu0 0.0
    %917 = vmatpush1.msra.mxu0 %v881
    %918 = vmatprep.subr.mxu0 0.0
    %919 = vmatpush2.msra.mxu0 0.0
    %920 = vmatprep.subr.mxu0 0.0
    %921 = vmatpush2.msra.mxu0 0.0
    %922 = vmatprep.subr.mxu0 0.0
    %923 = vmatpush2.msra.mxu0 0.0
    %924 = vmatprep.subr.mxu0 0.0
    %925 = vmatpush2.msra.mxu0 0.0
    %926 = vmatprep.subr.mxu0 0.0
    %927 = vmatpush2.msra.mxu0 0.0
    %928 = vmatprep.subr.mxu0 0.0
    %929 = vmatpush2.msra.mxu0 0.0
    %930 = vmatprep.subr.mxu0 0.0
    %931 = vmatpush2.msra.mxu0 0.0
    %932 = vmatprep.subr.mxu0 0.0
    %933 = vmatpush2.msra.mxu0 0.0
    %934 = vmatprep.subr.mxu0 0.0
    %935 = vmatpush2.msra.mxu0 0.0
    %936 = vmatprep.subr.mxu0 0.0
    %937 = vmatpush2.msra.mxu0 0.0
    %938 = vmatprep.subr.mxu0 0.0
    %939 = vmatpush2.msra.mxu0 0.0
    %940 = vmatprep.subr.mxu0 0.0
    %941 = vmatpush2.msra.mxu0 0.0
    %942 = vmatprep.subr.mxu0 0.0
    %943 = vmatpush2.msra.mxu0 0.0
    %944 = vmatprep.subr.mxu0 0.0
    %945 = vmatpush2.msra.mxu0 0.0
    %946 = vmatprep.subr.mxu0 0.0
    %947 = vmatpush2.msra.mxu0 0.0
    %948 = vmatprep.subr.mxu0 0.0
    %949 = vmatpush2.msra.mxu0 0.0
    %950 = vmatprep.mubr.f32.mxu0 0.0
    %951 = vmatmul.mubr.f32.gmra.mxu0 %v884
    %v952 = vpop.f32.mrf.mxu0
    %v953 = vadd.f32 0.0, %v952
    %v954 = vpop.f32.mrf.mxu0
    %955 = vdwg.mxu0
    %956 = vrot.lane.b32.xlu0 %v150, 64
    %v957 = vpop.permute.xlu0 %956
    %v960 = vsel %vm185, %v873, 0
    %962 = vmatprep.subr.mxu0 0.0
    %963 = vmatpush1.msra.mxu0 0.0
    %964 = vmatprep.subr.mxu0 0.0
    %965 = vmatpush1.msra.mxu0 0.0
    %966 = vmatprep.subr.mxu0 0.0
    %967 = vmatpush1.msra.mxu0 0.0
    %968 = vmatprep.subr.mxu0 0.0
    %969 = vmatpush1.msra.mxu0 0.0
    %970 = vmatprep.subr.mxu0 0.0
    %971 = vmatpush1.msra.mxu0 0.0
    %972 = vmatprep.subr.mxu0 0.0
    %973 = vmatpush1.msra.mxu0 0.0
    %974 = vmatprep.subr.mxu0 0.0
    %975 = vmatpush1.msra.mxu0 0.0
    %976 = vmatprep.subr.mxu0 0.0
    %977 = vmatpush1.msra.mxu0 0.0
    %978 = vmatprep.subr.mxu0 0.0
    %979 = vmatpush1.msra.mxu0 0.0
    %980 = vmatprep.subr.mxu0 0.0
    %981 = vmatpush1.msra.mxu0 0.0
    %982 = vmatprep.subr.mxu0 0.0
    %983 = vmatpush1.msra.mxu0 0.0
    %984 = vmatprep.subr.mxu0 0.0
    %985 = vmatpush1.msra.mxu0 0.0
    %986 = vmatprep.subr.mxu0 0.0
    %987 = vmatpush1.msra.mxu0 0.0
    %988 = vmatprep.subr.mxu0 0.0
    %989 = vmatpush1.msra.mxu0 0.0
    %990 = vmatprep.subr.mxu0 0.0
    %991 = vmatpush1.msra.mxu0 0.0
    %992 = vmatprep.subr.mxu0 0.0
    %993 = vmatpush1.msra.mxu0 %v957
    %994 = vmatprep.subr.mxu0 0.0
    %995 = vmatpush2.msra.mxu0 0.0
    %996 = vmatprep.subr.mxu0 0.0
    %997 = vmatpush2.msra.mxu0 0.0
    %998 = vmatprep.subr.mxu0 0.0
    %999 = vmatpush2.msra.mxu0 0.0
    %1000 = vmatprep.subr.mxu0 0.0
    %1001 = vmatpush2.msra.mxu0 0.0
    %1002 = vmatprep.subr.mxu0 0.0
    %1003 = vmatpush2.msra.mxu0 0.0
    %1004 = vmatprep.subr.mxu0 0.0
    %1005 = vmatpush2.msra.mxu0 0.0
    %1006 = vmatprep.subr.mxu0 0.0
    %1007 = vmatpush2.msra.mxu0 0.0
    %1008 = vmatprep.subr.mxu0 0.0
    %1009 = vmatpush2.msra.mxu0 0.0
    %1010 = vmatprep.subr.mxu0 0.0
    %1011 = vmatpush2.msra.mxu0 0.0
    %1012 = vmatprep.subr.mxu0 0.0
    %1013 = vmatpush2.msra.mxu0 0.0
    %1014 = vmatprep.subr.mxu0 0.0
    %1015 = vmatpush2.msra.mxu0 0.0
    %1016 = vmatprep.subr.mxu0 0.0
    %1017 = vmatpush2.msra.mxu0 0.0
    %1018 = vmatprep.subr.mxu0 0.0
    %1019 = vmatpush2.msra.mxu0 0.0
    %1020 = vmatprep.subr.mxu0 0.0
    %1021 = vmatpush2.msra.mxu0 0.0
    %1022 = vmatprep.subr.mxu0 0.0
    %1023 = vmatpush2.msra.mxu0 0.0
    %1024 = vmatprep.subr.mxu0 0.0
    %1025 = vmatpush2.msra.mxu0 0.0
    %1026 = vmatprep.mubr.f32.mxu0 0.0
    %1027 = vmatmul.mubr.f32.gmra.mxu0 %v960
    %v1028 = vpop.f32.mrf.mxu0
    %v1029 = vadd.f32 0.0, %v1028
    %v1030 = vpop.f32.mrf.mxu0
    %1031 = vdwg.mxu0
    %1032 = vrot.lane.b32.xlu0 %v172, 64
    %v1033 = vpop.permute.xlu0 %1032
    %v1036 = vsel %vm185, %v874, 0
    %1038 = vmatprep.subr.mxu0 0.0
    %1039 = vmatpush1.msra.mxu0 0.0
    %1040 = vmatprep.subr.mxu0 0.0
    %1041 = vmatpush1.msra.mxu0 0.0
    %1042 = vmatprep.subr.mxu0 0.0
    %1043 = vmatpush1.msra.mxu0 0.0
    %1044 = vmatprep.subr.mxu0 0.0
    %1045 = vmatpush1.msra.mxu0 0.0
    %1046 = vmatprep.subr.mxu0 0.0
    %1047 = vmatpush1.msra.mxu0 0.0
    %1048 = vmatprep.subr.mxu0 0.0
    %1049 = vmatpush1.msra.mxu0 0.0
    %1050 = vmatprep.subr.mxu0 0.0
    %1051 = vmatpush1.msra.mxu0 0.0
    %1052 = vmatprep.subr.mxu0 0.0
    %1053 = vmatpush1.msra.mxu0 0.0
    %1054 = vmatprep.subr.mxu0 0.0
    %1055 = vmatpush1.msra.mxu0 0.0
    %1056 = vmatprep.subr.mxu0 0.0
    %1057 = vmatpush1.msra.mxu0 0.0
    %1058 = vmatprep.subr.mxu0 0.0
    %1059 = vmatpush1.msra.mxu0 0.0
    %1060 = vmatprep.subr.mxu0 0.0
    %1061 = vmatpush1.msra.mxu0 0.0
    %1062 = vmatprep.subr.mxu0 0.0
    %1063 = vmatpush1.msra.mxu0 0.0
    %1064 = vmatprep.subr.mxu0 0.0
    %1065 = vmatpush1.msra.mxu0 0.0
    %1066 = vmatprep.subr.mxu0 0.0
    %1067 = vmatpush1.msra.mxu0 0.0
    %1068 = vmatprep.subr.mxu0 0.0
    %1069 = vmatpush1.msra.mxu0 %v1033
    %1070 = vmatprep.subr.mxu0 0.0
    %1071 = vmatpush2.msra.mxu0 0.0
    %1072 = vmatprep.subr.mxu0 0.0
    %1073 = vmatpush2.msra.mxu0 0.0
    %1074 = vmatprep.subr.mxu0 0.0
    %1075 = vmatpush2.msra.mxu0 0.0
    %1076 = vmatprep.subr.mxu0 0.0
    %1077 = vmatpush2.msra.mxu0 0.0
    %1078 = vmatprep.subr.mxu0 0.0
    %1079 = vmatpush2.msra.mxu0 0.0
    %1080 = vmatprep.subr.mxu0 0.0
    %1081 = vmatpush2.msra.mxu0 0.0
    %1082 = vmatprep.subr.mxu0 0.0
    %1083 = vmatpush2.msra.mxu0 0.0
    %1084 = vmatprep.subr.mxu0 0.0
    %1085 = vmatpush2.msra.mxu0 0.0
    %1086 = vmatprep.subr.mxu0 0.0
    %1087 = vmatpush2.msra.mxu0 0.0
    %1088 = vmatprep.subr.mxu0 0.0
    %1089 = vmatpush2.msra.mxu0 0.0
    %1090 = vmatprep.subr.mxu0 0.0
    %1091 = vmatpush2.msra.mxu0 0.0
    %1092 = vmatprep.subr.mxu0 0.0
    %1093 = vmatpush2.msra.mxu0 0.0
    %1094 = vmatprep.subr.mxu0 0.0
    %1095 = vmatpush2.msra.mxu0 0.0
    %1096 = vmatprep.subr.mxu0 0.0
    %1097 = vmatpush2.msra.mxu0 0.0
    %1098 = vmatprep.subr.mxu0 0.0
    %1099 = vmatpush2.msra.mxu0 0.0
    %1100 = vmatprep.subr.mxu0 0.0
    %1101 = vmatpush2.msra.mxu0 0.0
    %1102 = vmatprep.mubr.f32.mxu0 0.0
    %1103 = vmatmul.mubr.f32.gmra.mxu0 %v1036
    %v1104 = vpop.f32.mrf.mxu0
    %v1105 = vadd.f32 0.0, %v1104
    %v1106 = vpop.f32.mrf.mxu0
    %1107 = vdwg.mxu0
    %1108 = vrot.lane.b32.xlu0 %v174, 64
    %v1109 = vpop.permute.xlu0 %1108
    %v1112 = vsel %vm185, %v875, 0
    %1114 = vmatprep.subr.mxu0 0.0
    %1115 = vmatpush1.msra.mxu0 0.0
    %1116 = vmatprep.subr.mxu0 0.0
    %1117 = vmatpush1.msra.mxu0 0.0
    %1118 = vmatprep.subr.mxu0 0.0
    %1119 = vmatpush1.msra.mxu0 0.0
    %1120 = vmatprep.subr.mxu0 0.0
    %1121 = vmatpush1.msra.mxu0 0.0
    %1122 = vmatprep.subr.mxu0 0.0
    %1123 = vmatpush1.msra.mxu0 0.0
    %1124 = vmatprep.subr.mxu0 0.0
    %1125 = vmatpush1.msra.mxu0 0.0
    %1126 = vmatprep.subr.mxu0 0.0
    %1127 = vmatpush1.msra.mxu0 0.0
    %1128 = vmatprep.subr.mxu0 0.0
    %1129 = vmatpush1.msra.mxu0 0.0
    %1130 = vmatprep.subr.mxu0 0.0
    %1131 = vmatpush1.msra.mxu0 0.0
    %1132 = vmatprep.subr.mxu0 0.0
    %1133 = vmatpush1.msra.mxu0 0.0
    %1134 = vmatprep.subr.mxu0 0.0
    %1135 = vmatpush1.msra.mxu0 0.0
    %1136 = vmatprep.subr.mxu0 0.0
    %1137 = vmatpush1.msra.mxu0 0.0
    %1138 = vmatprep.subr.mxu0 0.0
    %1139 = vmatpush1.msra.mxu0 0.0
    %1140 = vmatprep.subr.mxu0 0.0
    %1141 = vmatpush1.msra.mxu0 0.0
    %1142 = vmatprep.subr.mxu0 0.0
    %1143 = vmatpush1.msra.mxu0 0.0
    %1144 = vmatprep.subr.mxu0 0.0
    %1145 = vmatpush1.msra.mxu0 %v1109
    %1146 = vmatprep.subr.mxu0 0.0
    %1147 = vmatpush2.msra.mxu0 0.0
    %1148 = vmatprep.subr.mxu0 0.0
    %1149 = vmatpush2.msra.mxu0 0.0
    %1150 = vmatprep.subr.mxu0 0.0
    %1151 = vmatpush2.msra.mxu0 0.0
    %1152 = vmatprep.subr.mxu0 0.0
    %1153 = vmatpush2.msra.mxu0 0.0
    %1154 = vmatprep.subr.mxu0 0.0
    %1155 = vmatpush2.msra.mxu0 0.0
    %1156 = vmatprep.subr.mxu0 0.0
    %1157 = vmatpush2.msra.mxu0 0.0
    %1158 = vmatprep.subr.mxu0 0.0
    %1159 = vmatpush2.msra.mxu0 0.0
    %1160 = vmatprep.subr.mxu0 0.0
    %1161 = vmatpush2.msra.mxu0 0.0
    %1162 = vmatprep.subr.mxu0 0.0
    %1163 = vmatpush2.msra.mxu0 0.0
    %1164 = vmatprep.subr.mxu0 0.0
    %1165 = vmatpush2.msra.mxu0 0.0
    %1166 = vmatprep.subr.mxu0 0.0
    %1167 = vmatpush2.msra.mxu0 0.0
    %1168 = vmatprep.subr.mxu0 0.0
    %1169 = vmatpush2.msra.mxu0 0.0
    %1170 = vmatprep.subr.mxu0 0.0
    %1171 = vmatpush2.msra.mxu0 0.0
    %1172 = vmatprep.subr.mxu0 0.0
    %1173 = vmatpush2.msra.mxu0 0.0
    %1174 = vmatprep.subr.mxu0 0.0
    %1175 = vmatpush2.msra.mxu0 0.0
    %1176 = vmatprep.subr.mxu0 0.0
    %1177 = vmatpush2.msra.mxu0 0.0
    %1178 = vmatprep.mubr.f32.mxu0 0.0
    %1179 = vmatmul.mubr.f32.gmra.mxu0 %v1112
    %v1180 = vpop.f32.mrf.mxu0
    %v1181 = vadd.f32 0.0, %v1180
    %v1182 = vpop.f32.mrf.mxu0
    %1183 = vdwg.mxu0
    %1184 = vrot.lane.b32.xlu0 %v176, 64
    %v1185 = vpop.permute.xlu0 %1184
    %v1188 = vsel %vm185, %v876, 0
    %1190 = vmatprep.subr.mxu0 0.0
    %1191 = vmatpush1.msra.mxu0 0.0
    %1192 = vmatprep.subr.mxu0 0.0
    %1193 = vmatpush1.msra.mxu0 0.0
    %1194 = vmatprep.subr.mxu0 0.0
    %1195 = vmatpush1.msra.mxu0 0.0
    %1196 = vmatprep.subr.mxu0 0.0
    %1197 = vmatpush1.msra.mxu0 0.0
    %1198 = vmatprep.subr.mxu0 0.0
    %1199 = vmatpush1.msra.mxu0 0.0
    %1200 = vmatprep.subr.mxu0 0.0
    %1201 = vmatpush1.msra.mxu0 0.0
    %1202 = vmatprep.subr.mxu0 0.0
    %1203 = vmatpush1.msra.mxu0 0.0
    %1204 = vmatprep.subr.mxu0 0.0
    %1205 = vmatpush1.msra.mxu0 0.0
    %1206 = vmatprep.subr.mxu0 0.0
    %1207 = vmatpush1.msra.mxu0 0.0
    %1208 = vmatprep.subr.mxu0 0.0
    %1209 = vmatpush1.msra.mxu0 0.0
    %1210 = vmatprep.subr.mxu0 0.0
    %1211 = vmatpush1.msra.mxu0 0.0
    %1212 = vmatprep.subr.mxu0 0.0
    %1213 = vmatpush1.msra.mxu0 0.0
    %1214 = vmatprep.subr.mxu0 0.0
    %1215 = vmatpush1.msra.mxu0 0.0
    %1216 = vmatprep.subr.mxu0 0.0
    %1217 = vmatpush1.msra.mxu0 0.0
    %1218 = vmatprep.subr.mxu0 0.0
    %1219 = vmatpush1.msra.mxu0 0.0
    %1220 = vmatprep.subr.mxu0 0.0
    %1221 = vmatpush1.msra.mxu0 %v1185
    %1222 = vmatprep.subr.mxu0 0.0
    %1223 = vmatpush2.msra.mxu0 0.0
    %1224 = vmatprep.subr.mxu0 0.0
    %1225 = vmatpush2.msra.mxu0 0.0
    %1226 = vmatprep.subr.mxu0 0.0
    %1227 = vmatpush2.msra.mxu0 0.0
    %1228 = vmatprep.subr.mxu0 0.0
    %1229 = vmatpush2.msra.mxu0 0.0
    %1230 = vmatprep.subr.mxu0 0.0
    %1231 = vmatpush2.msra.mxu0 0.0
    %1232 = vmatprep.subr.mxu0 0.0
    %1233 = vmatpush2.msra.mxu0 0.0
    %1234 = vmatprep.subr.mxu0 0.0
    %1235 = vmatpush2.msra.mxu0 0.0
    %1236 = vmatprep.subr.mxu0 0.0
    %1237 = vmatpush2.msra.mxu0 0.0
    %1238 = vmatprep.subr.mxu0 0.0
    %1239 = vmatpush2.msra.mxu0 0.0
    %1240 = vmatprep.subr.mxu0 0.0
    %1241 = vmatpush2.msra.mxu0 0.0
    %1242 = vmatprep.subr.mxu0 0.0
    %1243 = vmatpush2.msra.mxu0 0.0
    %1244 = vmatprep.subr.mxu0 0.0
    %1245 = vmatpush2.msra.mxu0 0.0
    %1246 = vmatprep.subr.mxu0 0.0
    %1247 = vmatpush2.msra.mxu0 0.0
    %1248 = vmatprep.subr.mxu0 0.0
    %1249 = vmatpush2.msra.mxu0 0.0
    %1250 = vmatprep.subr.mxu0 0.0
    %1251 = vmatpush2.msra.mxu0 0.0
    %1252 = vmatprep.subr.mxu0 0.0
    %1253 = vmatpush2.msra.mxu0 0.0
    %1254 = vmatprep.mubr.f32.mxu0 0.0
    %1255 = vmatmul.mubr.f32.gmra.mxu0 %v1188
    %v1256 = vpop.f32.mrf.mxu0
    %v1257 = vadd.f32 0.0, %v1256
    %v1258 = vpop.f32.mrf.mxu0
    %1259 = vdwg.mxu0
    %1260 = vrot.lane.b32.xlu0 %v178, 64
    %v1261 = vpop.permute.xlu0 %1260
    %v1264 = vsel %vm185, %v877, 0
    %1266 = vmatprep.subr.mxu0 0.0
    %1267 = vmatpush1.msra.mxu0 0.0
    %1268 = vmatprep.subr.mxu0 0.0
    %1269 = vmatpush1.msra.mxu0 0.0
    %1270 = vmatprep.subr.mxu0 0.0
    %1271 = vmatpush1.msra.mxu0 0.0
    %1272 = vmatprep.subr.mxu0 0.0
    %1273 = vmatpush1.msra.mxu0 0.0
    %1274 = vmatprep.subr.mxu0 0.0
    %1275 = vmatpush1.msra.mxu0 0.0
    %1276 = vmatprep.subr.mxu0 0.0
    %1277 = vmatpush1.msra.mxu0 0.0
    %1278 = vmatprep.subr.mxu0 0.0
    %1279 = vmatpush1.msra.mxu0 0.0
    %1280 = vmatprep.subr.mxu0 0.0
    %1281 = vmatpush1.msra.mxu0 0.0
    %1282 = vmatprep.subr.mxu0 0.0
    %1283 = vmatpush1.msra.mxu0 0.0
    %1284 = vmatprep.subr.mxu0 0.0
    %1285 = vmatpush1.msra.mxu0 0.0
    %1286 = vmatprep.subr.mxu0 0.0
    %1287 = vmatpush1.msra.mxu0 0.0
    %1288 = vmatprep.subr.mxu0 0.0
    %1289 = vmatpush1.msra.mxu0 0.0
    %1290 = vmatprep.subr.mxu0 0.0
    %1291 = vmatpush1.msra.mxu0 0.0
    %1292 = vmatprep.subr.mxu0 0.0
    %1293 = vmatpush1.msra.mxu0 0.0
    %1294 = vmatprep.subr.mxu0 0.0
    %1295 = vmatpush1.msra.mxu0 0.0
    %1296 = vmatprep.subr.mxu0 0.0
    %1297 = vmatpush1.msra.mxu0 %v1261
    %1298 = vmatprep.subr.mxu0 0.0
    %1299 = vmatpush2.msra.mxu0 0.0
    %1300 = vmatprep.subr.mxu0 0.0
    %1301 = vmatpush2.msra.mxu0 0.0
    %1302 = vmatprep.subr.mxu0 0.0
    %1303 = vmatpush2.msra.mxu0 0.0
    %1304 = vmatprep.subr.mxu0 0.0
    %1305 = vmatpush2.msra.mxu0 0.0
    %1306 = vmatprep.subr.mxu0 0.0
    %1307 = vmatpush2.msra.mxu0 0.0
    %1308 = vmatprep.subr.mxu0 0.0
    %1309 = vmatpush2.msra.mxu0 0.0
    %1310 = vmatprep.subr.mxu0 0.0
    %1311 = vmatpush2.msra.mxu0 0.0
    %1312 = vmatprep.subr.mxu0 0.0
    %1313 = vmatpush2.msra.mxu0 0.0
    %1314 = vmatprep.subr.mxu0 0.0
    %1315 = vmatpush2.msra.mxu0 0.0
    %1316 = vmatprep.subr.mxu0 0.0
    %1317 = vmatpush2.msra.mxu0 0.0
    %1318 = vmatprep.subr.mxu0 0.0
    %1319 = vmatpush2.msra.mxu0 0.0
    %1320 = vmatprep.subr.mxu0 0.0
    %1321 = vmatpush2.msra.mxu0 0.0
    %1322 = vmatprep.subr.mxu0 0.0
    %1323 = vmatpush2.msra.mxu0 0.0
    %1324 = vmatprep.subr.mxu0 0.0
    %1325 = vmatpush2.msra.mxu0 0.0
    %1326 = vmatprep.subr.mxu0 0.0
    %1327 = vmatpush2.msra.mxu0 0.0
    %1328 = vmatprep.subr.mxu0 0.0
    %1329 = vmatpush2.msra.mxu0 0.0
    %1330 = vmatprep.mubr.f32.mxu0 0.0
    %1331 = vmatmul.mubr.f32.gmra.mxu0 %v1264
    %v1332 = vpop.f32.mrf.mxu0
    %v1333 = vadd.f32 0.0, %v1332
    %v1334 = vpop.f32.mrf.mxu0
    %1335 = vdwg.mxu0
    %1336 = vrot.lane.b32.xlu0 %v180, 64
    %v1337 = vpop.permute.xlu0 %1336
    %v1340 = vsel %vm185, %v878, 0
    %1342 = vmatprep.subr.mxu0 0.0
    %1343 = vmatpush1.msra.mxu0 0.0
    %1344 = vmatprep.subr.mxu0 0.0
    %1345 = vmatpush1.msra.mxu0 0.0
    %1346 = vmatprep.subr.mxu0 0.0
    %1347 = vmatpush1.msra.mxu0 0.0
    %1348 = vmatprep.subr.mxu0 0.0
    %1349 = vmatpush1.msra.mxu0 0.0
    %1350 = vmatprep.subr.mxu0 0.0
    %1351 = vmatpush1.msra.mxu0 0.0
    %1352 = vmatprep.subr.mxu0 0.0
    %1353 = vmatpush1.msra.mxu0 0.0
    %1354 = vmatprep.subr.mxu0 0.0
    %1355 = vmatpush1.msra.mxu0 0.0
    %1356 = vmatprep.subr.mxu0 0.0
    %1357 = vmatpush1.msra.mxu0 0.0
    %1358 = vmatprep.subr.mxu0 0.0
    %1359 = vmatpush1.msra.mxu0 0.0
    %1360 = vmatprep.subr.mxu0 0.0
    %1361 = vmatpush1.msra.mxu0 0.0
    %1362 = vmatprep.subr.mxu0 0.0
    %1363 = vmatpush1.msra.mxu0 0.0
    %1364 = vmatprep.subr.mxu0 0.0
    %1365 = vmatpush1.msra.mxu0 0.0
    %1366 = vmatprep.subr.mxu0 0.0
    %1367 = vmatpush1.msra.mxu0 0.0
    %1368 = vmatprep.subr.mxu0 0.0
    %1369 = vmatpush1.msra.mxu0 0.0
    %1370 = vmatprep.subr.mxu0 0.0
    %1371 = vmatpush1.msra.mxu0 0.0
    %1372 = vmatprep.subr.mxu0 0.0
    %1373 = vmatpush1.msra.mxu0 %v1337
    %1374 = vmatprep.subr.mxu0 0.0
    %1375 = vmatpush2.msra.mxu0 0.0
    %1376 = vmatprep.subr.mxu0 0.0
    %1377 = vmatpush2.msra.mxu0 0.0
    %1378 = vmatprep.subr.mxu0 0.0
    %1379 = vmatpush2.msra.mxu0 0.0
    %1380 = vmatprep.subr.mxu0 0.0
    %1381 = vmatpush2.msra.mxu0 0.0
    %1382 = vmatprep.subr.mxu0 0.0
    %1383 = vmatpush2.msra.mxu0 0.0
    %1384 = vmatprep.subr.mxu0 0.0
    %1385 = vmatpush2.msra.mxu0 0.0
    %1386 = vmatprep.subr.mxu0 0.0
    %1387 = vmatpush2.msra.mxu0 0.0
    %1388 = vmatprep.subr.mxu0 0.0
    %1389 = vmatpush2.msra.mxu0 0.0
    %1390 = vmatprep.subr.mxu0 0.0
    %1391 = vmatpush2.msra.mxu0 0.0
    %1392 = vmatprep.subr.mxu0 0.0
    %1393 = vmatpush2.msra.mxu0 0.0
    %1394 = vmatprep.subr.mxu0 0.0
    %1395 = vmatpush2.msra.mxu0 0.0
    %1396 = vmatprep.subr.mxu0 0.0
    %1397 = vmatpush2.msra.mxu0 0.0
    %1398 = vmatprep.subr.mxu0 0.0
    %1399 = vmatpush2.msra.mxu0 0.0
    %1400 = vmatprep.subr.mxu0 0.0
    %1401 = vmatpush2.msra.mxu0 0.0
    %1402 = vmatprep.subr.mxu0 0.0
    %1403 = vmatpush2.msra.mxu0 0.0
    %1404 = vmatprep.subr.mxu0 0.0
    %1405 = vmatpush2.msra.mxu0 0.0
    %1406 = vmatprep.mubr.f32.mxu0 0.0
    %1407 = vmatmul.mubr.f32.gmra.mxu0 %v1340
    %v1408 = vpop.f32.mrf.mxu0
    %v1409 = vadd.f32 0.0, %v1408
    %v1410 = vpop.f32.mrf.mxu0
    %1411 = vdwg.mxu0
    %1412 = vrot.lane.b32.xlu0 %v182, 64
    %v1413 = vpop.permute.xlu0 %1412
    %v1416 = vsel %vm185, %v879, 0
    %1418 = vmatprep.subr.mxu0 0.0
    %1419 = vmatpush1.msra.mxu0 0.0
    %1420 = vmatprep.subr.mxu0 0.0
    %1421 = vmatpush1.msra.mxu0 0.0
    %1422 = vmatprep.subr.mxu0 0.0
    %1423 = vmatpush1.msra.mxu0 0.0
    %1424 = vmatprep.subr.mxu0 0.0
    %1425 = vmatpush1.msra.mxu0 0.0
    %1426 = vmatprep.subr.mxu0 0.0
    %1427 = vmatpush1.msra.mxu0 0.0
    %1428 = vmatprep.subr.mxu0 0.0
    %1429 = vmatpush1.msra.mxu0 0.0
    %1430 = vmatprep.subr.mxu0 0.0
    %1431 = vmatpush1.msra.mxu0 0.0
    %1432 = vmatprep.subr.mxu0 0.0
    %1433 = vmatpush1.msra.mxu0 0.0
    %1434 = vmatprep.subr.mxu0 0.0
    %1435 = vmatpush1.msra.mxu0 0.0
    %1436 = vmatprep.subr.mxu0 0.0
    %1437 = vmatpush1.msra.mxu0 0.0
    %1438 = vmatprep.subr.mxu0 0.0
    %1439 = vmatpush1.msra.mxu0 0.0
    %1440 = vmatprep.subr.mxu0 0.0
    %1441 = vmatpush1.msra.mxu0 0.0
    %1442 = vmatprep.subr.mxu0 0.0
    %1443 = vmatpush1.msra.mxu0 0.0
    %1444 = vmatprep.subr.mxu0 0.0
    %1445 = vmatpush1.msra.mxu0 0.0
    %1446 = vmatprep.subr.mxu0 0.0
    %1447 = vmatpush1.msra.mxu0 0.0
    %1448 = vmatprep.subr.mxu0 0.0
    %1449 = vmatpush1.msra.mxu0 %v1413
    %1450 = vmatprep.subr.mxu0 0.0
    %1451 = vmatpush2.msra.mxu0 0.0
    %1452 = vmatprep.subr.mxu0 0.0
    %1453 = vmatpush2.msra.mxu0 0.0
    %1454 = vmatprep.subr.mxu0 0.0
    %1455 = vmatpush2.msra.mxu0 0.0
    %1456 = vmatprep.subr.mxu0 0.0
    %1457 = vmatpush2.msra.mxu0 0.0
    %1458 = vmatprep.subr.mxu0 0.0
    %1459 = vmatpush2.msra.mxu0 0.0
    %1460 = vmatprep.subr.mxu0 0.0
    %1461 = vmatpush2.msra.mxu0 0.0
    %1462 = vmatprep.subr.mxu0 0.0
    %1463 = vmatpush2.msra.mxu0 0.0
    %1464 = vmatprep.subr.mxu0 0.0
    %1465 = vmatpush2.msra.mxu0 0.0
    %1466 = vmatprep.subr.mxu0 0.0
    %1467 = vmatpush2.msra.mxu0 0.0
    %1468 = vmatprep.subr.mxu0 0.0
    %1469 = vmatpush2.msra.mxu0 0.0
    %1470 = vmatprep.subr.mxu0 0.0
    %1471 = vmatpush2.msra.mxu0 0.0
    %1472 = vmatprep.subr.mxu0 0.0
    %1473 = vmatpush2.msra.mxu0 0.0
    %1474 = vmatprep.subr.mxu0 0.0
    %1475 = vmatpush2.msra.mxu0 0.0
    %1476 = vmatprep.subr.mxu0 0.0
    %1477 = vmatpush2.msra.mxu0 0.0
    %1478 = vmatprep.subr.mxu0 0.0
    %1479 = vmatpush2.msra.mxu0 0.0
    %1480 = vmatprep.subr.mxu0 0.0
    %1481 = vmatpush2.msra.mxu0 0.0
    %1482 = vmatprep.mubr.f32.mxu0 0.0
    %1483 = vmatmul.mubr.f32.gmra.mxu0 %v1416
    %v1484 = vpop.f32.mrf.mxu0
    %v1485 = vadd.f32 0.0, %v1484
    %v1486 = vpop.f32.mrf.mxu0
    %1487 = vdwg.mxu0
    %1490 = vrot.lane.b32.xlu0 %v1105, 8
    %v1491 = vpop.permute.xlu0 %1490
    %1492 = vrot.lane.b32.xlu0 %v1181, 8
    %v1493 = vpop.permute.xlu0 %1492
    %1498 = vrot.lane.b32.xlu0 %v1257, 16
    %v1499 = vpop.permute.xlu0 %1498
    %1500 = vrot.lane.b32.xlu0 %v1333, 16
    %v1501 = vpop.permute.xlu0 %1500
    %1506 = vrot.lane.b32.xlu0 %v1409, 24
    %v1507 = vpop.permute.xlu0 %1506
    %1508 = vrot.lane.b32.xlu0 %v1485, 24
    %v1509 = vpop.permute.xlu0 %1508
    %v1512 = vsel %vm185, %v953, %v1491
    %v1513 = vsel %vm185, %v1029, %v1493
    %vm1514 = vcmask 130048
    %v1515 = vsel %vm1514, %v1512, %v1499
    %v1516 = vsel %vm1514, %v1513, %v1501
    %vm1517 = vcmask 195584
    %v1518 = vsel %vm1517, %v1515, %v1507
    %v1519 = vsel %vm1517, %v1516, %v1509
    %v1520 = vld [vmem:[%s4] sm:$0xff]
    %v1521 = vld [vmem:[%s4 + $0x8] sm:$0xff]
    %v1522 = vld [vmem:[%s4 + $0x10] sm:$0xff]
    %v1523 = vld [vmem:[%s4 + $0x18] sm:$0xff]
    %v1524 = vld [vmem:[%s5] sm:$0x1]
    %v1526 = vlaneseq
    %v1527 = vshrl.u32 %v1526, 7
    %v1528 = vsub.s32 0, %v1527
    %v1529 = vrot.slane %v1524, %v1528
    %v1532 = vsel %vm71, %v1518, 0
    %v1535 = vsel %vm71, %v1519, 0
    %1537 = vmatprep.subr.mxu0 0.0
    %1538 = vmatpush1.msra.mxu0 0.0
    %1539 = vmatprep.subr.mxu0 0.0
    %1540 = vmatpush1.msra.mxu0 0.0
    %1541 = vmatprep.subr.mxu0 0.0
    %1542 = vmatpush1.msra.mxu0 0.0
    %1543 = vmatprep.subr.mxu0 0.0
    %1544 = vmatpush1.msra.mxu0 0.0
    %1545 = vmatprep.subr.mxu0 0.0
    %1546 = vmatpush1.msra.mxu0 0.0
    %1547 = vmatprep.subr.mxu0 0.0
    %1548 = vmatpush1.msra.mxu0 0.0
    %1549 = vmatprep.subr.mxu0 0.0
    %1550 = vmatpush1.msra.mxu0 0.0
    %1551 = vmatprep.subr.mxu0 0.0
    %1552 = vmatpush1.msra.mxu0 0.0
    %1553 = vmatprep.subr.mxu0 0.0
    %1554 = vmatpush1.msra.mxu0 0.0
    %1555 = vmatprep.subr.mxu0 0.0
    %1556 = vmatpush1.msra.mxu0 0.0
    %1557 = vmatprep.subr.mxu0 0.0
    %1558 = vmatpush1.msra.mxu0 0.0
    %1559 = vmatprep.subr.mxu0 0.0
    %1560 = vmatpush1.msra.mxu0 0.0
    %1561 = vmatprep.subr.mxu0 0.0
    %1562 = vmatpush1.msra.mxu0 %v1523
    %1563 = vmatprep.subr.mxu0 0.0
    %1564 = vmatpush1.msra.mxu0 %v1522
    %1565 = vmatprep.subr.mxu0 0.0
    %1566 = vmatpush1.msra.mxu0 %v1521
    %1567 = vmatprep.subr.mxu0 0.0
    %1568 = vmatpush1.msra.mxu0 %v1520
    %1569 = vmatprep.subr.mxu0 0.0
    %1570 = vmatpush2.msra.mxu0 0.0
    %1571 = vmatprep.subr.mxu0 0.0
    %1572 = vmatpush2.msra.mxu0 0.0
    %1573 = vmatprep.subr.mxu0 0.0
    %1574 = vmatpush2.msra.mxu0 0.0
    %1575 = vmatprep.subr.mxu0 0.0
    %1576 = vmatpush2.msra.mxu0 0.0
    %1577 = vmatprep.subr.mxu0 0.0
    %1578 = vmatpush2.msra.mxu0 0.0
    %1579 = vmatprep.subr.mxu0 0.0
    %1580 = vmatpush2.msra.mxu0 0.0
    %1581 = vmatprep.subr.mxu0 0.0
    %1582 = vmatpush2.msra.mxu0 0.0
    %1583 = vmatprep.subr.mxu0 0.0
    %1584 = vmatpush2.msra.mxu0 0.0
    %1585 = vmatprep.subr.mxu0 0.0
    %1586 = vmatpush2.msra.mxu0 0.0
    %1587 = vmatprep.subr.mxu0 0.0
    %1588 = vmatpush2.msra.mxu0 0.0
    %1589 = vmatprep.subr.mxu0 0.0
    %1590 = vmatpush2.msra.mxu0 0.0
    %1591 = vmatprep.subr.mxu0 0.0
    %1592 = vmatpush2.msra.mxu0 0.0
    %1593 = vmatprep.subr.mxu0 0.0
    %1594 = vmatpush2.msra.mxu0 0.0
    %1595 = vmatprep.subr.mxu0 0.0
    %1596 = vmatpush2.msra.mxu0 0.0
    %1597 = vmatprep.subr.mxu0 0.0
    %1598 = vmatpush2.msra.mxu0 0.0
    %1599 = vmatprep.subr.mxu0 0.0
    %1600 = vmatpush2.msra.mxu0 0.0
    %1601 = vmatprep.mubr.f32.mxu0 0.0
    %1602 = vmatmul.mubr.f32.gmra.mxu0 %v1532
    %v1603 = vpop.f32.mrf.mxu0
    %v1604 = vadd.f32 %v1529, %v1603
    %v1605 = vpop.f32.mrf.mxu0
    %1606 = vmatprep.mubr.f32.mxu0 0.0
    %1607 = vmatmul.mubr.f32.gmra.mxu0 %v1535
    %v1608 = vpop.f32.mrf.mxu0
    %v1609 = vadd.f32 %v1529, %v1608
    %v1610 = vpop.f32.mrf.mxu0
    %1611 = vdwg.mxu0
    %v1612 = vadd.f32 %v58, %v1604
    %v1613 = vadd.f32 %v59, %v1609
    %v1614 = vld [vmem:[%s6] sm:$0x1]
    %v1615 = vld [vmem:[%s7] sm:$0x1]
    %v1616 = vsel %vm71, %v1612, 0.0
    %1617 = vadd.xlane.f32.xlu0 %v1616
    %v1618 = vpop.xlane.xlu0 %1617
    %v1619 = vsel %vm71, %v1613, 0.0
    %1620 = vadd.xlane.f32.xlu0 %v1619
    %v1621 = vpop.xlane.xlu0 %1620
    %v1622 = vrcp.pop 32.0
    %v1623 = vmul.f32 %v1618, %v1622
    %v1624 = vmul.f32 %v1621, %v1622
    %v1625 = vsub.f32 %v1612, %v1623
    %v1626 = vsub.f32 %v1613, %v1624
    %v1627 = vmul.f32 %v1625, %v1625
    %v1628 = vmul.f32 %v1626, %v1626
    %v1629 = vsel %vm71, %v1627, 0.0
    %1630 = vadd.xlane.f32.xlu0 %v1629
    %v1631 = vpop.xlane.xlu0 %1630
    %v1632 = vsel %vm71, %v1628, 0.0
    %1633 = vadd.xlane.f32.xlu0 %v1632
    %v1634 = vpop.xlane.xlu0 %1633
    %v1635 = vmul.f32 %v1631, %v1622
    %v1636 = vmul.f32 %v1634, %v1622
    %v1637 = vadd.f32 %v1635, 1e-05
    %v1638 = vadd.f32 %v1636, 1e-05
    %v1639 = vrsqrt.pop %v1637
    %v1640 = vrsqrt.pop %v1638
    %v1641 = vmul.f32 %v1625, %v1639
    %v1642 = vmul.f32 %v1626, %v1640
    %v1644 = vlaneseq
    %v1645 = vshrl.u32 %v1644, 7
    %v1646 = vsub.s32 0, %v1645
    %v1647 = vrot.slane %v1614, %v1646
    %v1649 = vmul.f32 %v1641, %v1647
    %v1650 = vmul.f32 %v1642, %v1647
    %v1652 = vlaneseq
    %v1653 = vshrl.u32 %v1652, 7
    %v1654 = vsub.s32 0, %v1653
    %v1655 = vrot.slane %v1615, %v1654
    %v1657 = vadd.f32 %v1649, %v1655
    %v1658 = vadd.f32 %v1650, %v1655
    %v1659 = vld [vmem:[%s8] sm:$0xff]
    %v1660 = vld [vmem:[%s8 + $0x8] sm:$0xff]
    %v1661 = vld [vmem:[%s8 + $0x10] sm:$0xff]
    %v1662 = vld [vmem:[%s8 + $0x18] sm:$0xff]
    %v1663 = vld [vmem:[%s9] sm:$0x1]
    %v1665 = vlaneseq
    %v1666 = vshrl.u32 %v1665, 7
    %v1667 = vsub.s32 0, %v1666
    %v1668 = vrot.slane %v1663, %v1667
    %v1671 = vsel %vm71, %v1657, 0
    %v1674 = vsel %vm71, %v1658, 0
    %1676 = vmatprep.subr.mxu0 0.0
    %1677 = vmatpush1.msra.mxu0 0.0
    %1678 = vmatprep.subr.mxu0 0.0
    %1679 = vmatpush1.msra.mxu0 0.0
    %1680 = vmatprep.subr.mxu0 0.0
    %1681 = vmatpush1.msra.mxu0 0.0
    %1682 = vmatprep.subr.mxu0 0.0
    %1683 = vmatpush1.msra.mxu0 0.0
    %1684 = vmatprep.subr.mxu0 0.0
    %1685 = vmatpush1.msra.mxu0 0.0
    %1686 = vmatprep.subr.mxu0 0.0
    %1687 = vmatpush1.msra.mxu0 0.0
    %1688 = vmatprep.subr.mxu0 0.0
    %1689 = vmatpush1.msra.mxu0 0.0
    %1690 = vmatprep.subr.mxu0 0.0
    %1691 = vmatpush1.msra.mxu0 0.0
    %1692 = vmatprep.subr.mxu0 0.0
    %1693 = vmatpush1.msra.mxu0 0.0
    %1694 = vmatprep.subr.mxu0 0.0
    %1695 = vmatpush1.msra.mxu0 0.0
    %1696 = vmatprep.subr.mxu0 0.0
    %1697 = vmatpush1.msra.mxu0 0.0
    %1698 = vmatprep.subr.mxu0 0.0
    %1699 = vmatpush1.msra.mxu0 0.0
    %1700 = vmatprep.subr.mxu0 0.0
    %1701 = vmatpush1.msra.mxu0 %v1662
    %1702 = vmatprep.subr.mxu0 0.0
    %1703 = vmatpush1.msra.mxu0 %v1661
    %1704 = vmatprep.subr.mxu0 0.0
    %1705 = vmatpush1.msra.mxu0 %v1660
    %1706 = vmatprep.subr.mxu0 0.0
    %1707 = vmatpush1.msra.mxu0 %v1659
    %1708 = vmatprep.subr.mxu0 0.0
    %1709 = vmatpush2.msra.mxu0 0.0
    %1710 = vmatprep.subr.mxu0 0.0
    %1711 = vmatpush2.msra.mxu0 0.0
    %1712 = vmatprep.subr.mxu0 0.0
    %1713 = vmatpush2.msra.mxu0 0.0
    %1714 = vmatprep.subr.mxu0 0.0
    %1715 = vmatpush2.msra.mxu0 0.0
    %1716 = vmatprep.subr.mxu0 0.0
    %1717 = vmatpush2.msra.mxu0 0.0
    %1718 = vmatprep.subr.mxu0 0.0
    %1719 = vmatpush2.msra.mxu0 0.0
    %1720 = vmatprep.subr.mxu0 0.0
    %1721 = vmatpush2.msra.mxu0 0.0
    %1722 = vmatprep.subr.mxu0 0.0
    %1723 = vmatpush2.msra.mxu0 0.0
    %1724 = vmatprep.subr.mxu0 0.0
    %1725 = vmatpush2.msra.mxu0 0.0
    %1726 = vmatprep.subr.mxu0 0.0
    %1727 = vmatpush2.msra.mxu0 0.0
    %1728 = vmatprep.subr.mxu0 0.0
    %1729 = vmatpush2.msra.mxu0 0.0
    %1730 = vmatprep.subr.mxu0 0.0
    %1731 = vmatpush2.msra.mxu0 0.0
    %1732 = vmatprep.subr.mxu0 0.0
    %1733 = vmatpush2.msra.mxu0 0.0
    %1734 = vmatprep.subr.mxu0 0.0
    %1735 = vmatpush2.msra.mxu0 0.0
    %1736 = vmatprep.subr.mxu0 0.0
    %1737 = vmatpush2.msra.mxu0 0.0
    %1738 = vmatprep.subr.mxu0 0.0
    %1739 = vmatpush2.msra.mxu0 0.0
    %1740 = vmatprep.mubr.f32.mxu0 0.0
    %1741 = vmatmul.mubr.f32.gmra.mxu0 %v1671
    %v1742 = vpop.f32.mrf.mxu0
    %v1743 = vadd.f32 %v1668, %v1742
    %v1744 = vpop.f32.mrf.mxu0
    %1745 = vmatprep.mubr.f32.mxu0 0.0
    %1746 = vmatmul.mubr.f32.gmra.mxu0 %v1674
    %v1747 = vpop.f32.mrf.mxu0
    %v1748 = vadd.f32 %v1668, %v1747
    %v1749 = vpop.f32.mrf.mxu0
    %1750 = vdwg.mxu0
    %v1751 = vmax.f32 %v1743, 0.0
    %v1752 = vmax.f32 %v1748, 0.0
    %v1753 = vld [vmem:[%s10] sm:$0xff]
    %v1754 = vld [vmem:[%s10 + $0x8] sm:$0xff]
    %v1755 = vld [vmem:[%s10 + $0x10] sm:$0xff]
    %v1756 = vld [vmem:[%s10 + $0x18] sm:$0xff]
    %v1757 = vld [vmem:[%s10 + $0x20] sm:$0xff]
    %v1758 = vld [vmem:[%s10 + $0x28] sm:$0xff]
    %v1759 = vld [vmem:[%s10 + $0x30] sm:$0xff]
    %v1760 = vld [vmem:[%s10 + $0x38] sm:$0xff]
    %v1761 = vld [vmem:[%s11] sm:$0x1]
    %v1763 = vlaneseq
    %v1764 = vshrl.u32 %v1763, 7
    %v1765 = vsub.s32 0, %v1764
    %v1766 = vrot.slane %v1761, %v1765
    %vm1768 = vcmask 523264
    %v1770 = vsel %vm1768, %v1751, 0
    %v1773 = vsel %vm1768, %v1752, 0
    %1775 = vmatprep.subr.mxu0 0.0
    %1776 = vmatpush1.msra.mxu0 0.0
    %1777 = vmatprep.subr.mxu0 0.0
    %1778 = vmatpush1.msra.mxu0 0.0
    %1779 = vmatprep.subr.mxu0 0.0
    %1780 = vmatpush1.msra.mxu0 0.0
    %1781 = vmatprep.subr.mxu0 0.0
    %1782 = vmatpush1.msra.mxu0 0.0
    %1783 = vmatprep.subr.mxu0 0.0
    %1784 = vmatpush1.msra.mxu0 0.0
    %1785 = vmatprep.subr.mxu0 0.0
    %1786 = vmatpush1.msra.mxu0 0.0
    %1787 = vmatprep.subr.mxu0 0.0
    %1788 = vmatpush1.msra.mxu0 0.0
    %1789 = vmatprep.subr.mxu0 0.0
    %1790 = vmatpush1.msra.mxu0 0.0
    %1791 = vmatprep.subr.mxu0 0.0
    %1792 = vmatpush1.msra.mxu0 %v1760
    %1793 = vmatprep.subr.mxu0 0.0
    %1794 = vmatpush1.msra.mxu0 %v1759
    %1795 = vmatprep.subr.mxu0 0.0
    %1796 = vmatpush1.msra.mxu0 %v1758
    %1797 = vmatprep.subr.mxu0 0.0
    %1798 = vmatpush1.msra.mxu0 %v1757
    %1799 = vmatprep.subr.mxu0 0.0
    %1800 = vmatpush1.msra.mxu0 %v1756
    %1801 = vmatprep.subr.mxu0 0.0
    %1802 = vmatpush1.msra.mxu0 %v1755
    %1803 = vmatprep.subr.mxu0 0.0
    %1804 = vmatpush1.msra.mxu0 %v1754
    %1805 = vmatprep.subr.mxu0 0.0
    %1806 = vmatpush1.msra.mxu0 %v1753
    %1807 = vmatprep.subr.mxu0 0.0
    %1808 = vmatpush2.msra.mxu0 0.0
    %1809 = vmatprep.subr.mxu0 0.0
    %1810 = vmatpush2.msra.mxu0 0.0
    %1811 = vmatprep.subr.mxu0 0.0
    %1812 = vmatpush2.msra.mxu0 0.0
    %1813 = vmatprep.subr.mxu0 0.0
    %1814 = vmatpush2.msra.mxu0 0.0
    %1815 = vmatprep.subr.mxu0 0.0
    %1816 = vmatpush2.msra.mxu0 0.0
    %1817 = vmatprep.subr.mxu0 0.0
    %1818 = vmatpush2.msra.mxu0 0.0
    %1819 = vmatprep.subr.mxu0 0.0
    %1820 = vmatpush2.msra.mxu0 0.0
    %1821 = vmatprep.subr.mxu0 0.0
    %1822 = vmatpush2.msra.mxu0 0.0
    %1823 = vmatprep.subr.mxu0 0.0
    %1824 = vmatpush2.msra.mxu0 0.0
    %1825 = vmatprep.subr.mxu0 0.0
    %1826 = vmatpush2.msra.mxu0 0.0
    %1827 = vmatprep.subr.mxu0 0.0
    %1828 = vmatpush2.msra.mxu0 0.0
    %1829 = vmatprep.subr.mxu0 0.0
    %1830 = vmatpush2.msra.mxu0 0.0
    %1831 = vmatprep.subr.mxu0 0.0
    %1832 = vmatpush2.msra.mxu0 0.0
    %1833 = vmatprep.subr.mxu0 0.0
    %1834 = vmatpush2.msra.mxu0 0.0
    %1835 = vmatprep.subr.mxu0 0.0
    %1836 = vmatpush2.msra.mxu0 0.0
    %1837 = vmatprep.subr.mxu0 0.0
    %1838 = vmatpush2.msra.mxu0 0.0
    %1839 = vmatprep.mubr.f32.mxu0 0.0
    %1840 = vmatmul.mubr.f32.gmra.mxu0 %v1770
    %v1841 = vpop.f32.mrf.mxu0
    %v1842 = vadd.f32 %v1766, %v1841
    %v1843 = vpop.f32.mrf.mxu0
    %1844 = vmatprep.mubr.f32.mxu0 0.0
    %1845 = vmatmul.mubr.f32.gmra.mxu0 %v1773
    %v1846 = vpop.f32.mrf.mxu0
    %v1847 = vadd.f32 %v1766, %v1846
    %v1848 = vpop.f32.mrf.mxu0
    %1849 = vdwg.mxu0
    %v1850 = vadd.f32 %v1657, %v1842
    %v1851 = vadd.f32 %v1658, %v1847
    %v1852 = vld [vmem:[%s12] sm:$0x1]
    %v1853 = vld [vmem:[%s13] sm:$0x1]
    %v1854 = vsel %vm71, %v1850, 0.0
    %1855 = vadd.xlane.f32.xlu0 %v1854
    %v1856 = vpop.xlane.xlu0 %1855
    %v1857 = vsel %vm71, %v1851, 0.0
    %1858 = vadd.xlane.f32.xlu0 %v1857
    %v1859 = vpop.xlane.xlu0 %1858
    %v1860 = vmul.f32 %v1856, %v1622
    %v1861 = vmul.f32 %v1859, %v1622
    %v1862 = vsub.f32 %v1850, %v1860
    %v1863 = vsub.f32 %v1851, %v1861
    %v1864 = vmul.f32 %v1862, %v1862
    %v1865 = vmul.f32 %v1863, %v1863
    %v1866 = vsel %vm71, %v1864, 0.0
    %1867 = vadd.xlane.f32.xlu0 %v1866
    %v1868 = vpop.xlane.xlu0 %1867
    %v1869 = vsel %vm71, %v1865, 0.0
    %1870 = vadd.xlane.f32.xlu0 %v1869
    %v1871 = vpop.xlane.xlu0 %1870
    %v1872 = vmul.f32 %v1868, %v1622
    %v1873 = vmul.f32 %v1871, %v1622
    %v1874 = vadd.f32 %v1872, 1e-05
    %v1875 = vadd.f32 %v1873, 1e-05
    %v1876 = vrsqrt.pop %v1874
    %v1877 = vrsqrt.pop %v1875
    %v1878 = vmul.f32 %v1862, %v1876
    %v1879 = vmul.f32 %v1863, %v1877
    %v1881 = vlaneseq
    %v1882 = vshrl.u32 %v1881, 7
    %v1883 = vsub.s32 0, %v1882
    %v1884 = vrot.slane %v1852, %v1883
    %v1886 = vmul.f32 %v1878, %v1884
    %v1887 = vmul.f32 %v1879, %v1884
    %v1889 = vlaneseq
    %v1890 = vshrl.u32 %v1889, 7
    %v1891 = vsub.s32 0, %v1890
    %v1892 = vrot.slane %v1853, %v1891
    %v1894 = vadd.f32 %v1886, %v1892
    %v1895 = vadd.f32 %v1887, %v1892
    %s1896 = scalar_lea.vmem %s2, 32
    %v1897 = vld [vmem:[%s1896] sm:$0xff]
    %v1898 = vld [vmem:[%s1896 + $0x8] sm:$0xff]
    %v1899 = vld [vmem:[%s1896 + $0x10] sm:$0xff]
    %v1900 = vld [vmem:[%s1896 + $0x18] sm:$0xff]
    %s1901 = scalar_lea.vmem %s3, 1
    %v1902 = vld [vmem:[%s1901] sm:$0x1]
    %v1904 = vlaneseq
    %v1905 = vshrl.u32 %v1904, 7
    %v1906 = vsub.s32 0, %v1905
    %v1907 = vrot.slane %v1902, %v1906
    %v1910 = vsel %vm71, %v1894, 0
    %v1913 = vsel %vm71, %v1895, 0
    %1915 = vmatprep.subr.mxu0 0.0
    %1916 = vmatpush1.msra.mxu0 0.0
    %1917 = vmatprep.subr.mxu0 0.0
    %1918 = vmatpush1.msra.mxu0 0.0
    %1919 = vmatprep.subr.mxu0 0.0
    %1920 = vmatpush1.msra.mxu0 0.0
    %1921 = vmatprep.subr.mxu0 0.0
    %1922 = vmatpush1.msra.mxu0 0.0
    %1923 = vmatprep.subr.mxu0 0.0
    %1924 = vmatpush1.msra.mxu0 0.0
    %1925 = vmatprep.subr.mxu0 0.0
    %1926 = vmatpush1.msra.mxu0 0.0
    %1927 = vmatprep.subr.mxu0 0.0
    %1928 = vmatpush1.msra.mxu0 0.0
    %1929 = vmatprep.subr.mxu0 0.0
    %1930 = vmatpush1.msra.mxu0 0.0
    %1931 = vmatprep.subr.mxu0 0.0
    %1932 = vmatpush1.msra.mxu0 0.0
    %1933 = vmatprep.subr.mxu0 0.0
    %1934 = vmatpush1.msra.mxu0 0.0
    %1935 = vmatprep.subr.mxu0 0.0
    %1936 = vmatpush1.msra.mxu0 0.0
    %1937 = vmatprep.subr.mxu0 0.0
    %1938 = vmatpush1.msra.mxu0 0.0
    %1939 = vmatprep.subr.mxu0 0.0
    %1940 = vmatpush1.msra.mxu0 %v1900
    %1941 = vmatprep.subr.mxu0 0.0
    %1942 = vmatpush1.msra.mxu0 %v1899
    %1943 = vmatprep.subr.mxu0 0.0
    %1944 = vmatpush1.msra.mxu0 %v1898
    %1945 = vmatprep.subr.mxu0 0.0
    %1946 = vmatpush1.msra.mxu0 %v1897
    %1947 = vmatprep.subr.mxu0 0.0
    %1948 = vmatpush2.msra.mxu0 0.0
    %1949 = vmatprep.subr.mxu0 0.0
    %1950 = vmatpush2.msra.mxu0 0.0
    %1951 = vmatprep.subr.mxu0 0.0
    %1952 = vmatpush2.msra.mxu0 0.0
    %1953 = vmatprep.subr.mxu0 0.0
    %1954 = vmatpush2.msra.mxu0 0.0
    %1955 = vmatprep.subr.mxu0 0.0
    %1956 = vmatpush2.msra.mxu0 0.0
    %1957 = vmatprep.subr.mxu0 0.0
    %1958 = vmatpush2.msra.mxu0 0.0
    %1959 = vmatprep.subr.mxu0 0.0
    %1960 = vmatpush2.msra.mxu0 0.0
    %1961 = vmatprep.subr.mxu0 0.0
    %1962 = vmatpush2.msra.mxu0 0.0
    %1963 = vmatprep.subr.mxu0 0.0
    %1964 = vmatpush2.msra.mxu0 0.0
    %1965 = vmatprep.subr.mxu0 0.0
    %1966 = vmatpush2.msra.mxu0 0.0
    %1967 = vmatprep.subr.mxu0 0.0
    %1968 = vmatpush2.msra.mxu0 0.0
    %1969 = vmatprep.subr.mxu0 0.0
    %1970 = vmatpush2.msra.mxu0 0.0
    %1971 = vmatprep.subr.mxu0 0.0
    %1972 = vmatpush2.msra.mxu0 0.0
    %1973 = vmatprep.subr.mxu0 0.0
    %1974 = vmatpush2.msra.mxu0 0.0
    %1975 = vmatprep.subr.mxu0 0.0
    %1976 = vmatpush2.msra.mxu0 0.0
    %1977 = vmatprep.subr.mxu0 0.0
    %1978 = vmatpush2.msra.mxu0 0.0
    %1979 = vmatprep.mubr.f32.mxu0 0.0
    %1980 = vmatmul.mubr.f32.gmra.mxu0 %v1910
    %v1981 = vpop.f32.mrf.mxu0
    %v1982 = vadd.f32 %v1907, %v1981
    %v1983 = vpop.f32.mrf.mxu0
    %1984 = vmatprep.mubr.f32.mxu0 0.0
    %1985 = vmatmul.mubr.f32.gmra.mxu0 %v1913
    %v1986 = vpop.f32.mrf.mxu0
    %v1987 = vadd.f32 %v1907, %v1986
    %v1988 = vpop.f32.mrf.mxu0
    %1989 = vdwg.mxu0
    %v1990 = vmul.f32 %v1982, 0.35355338
    %v1991 = vmul.f32 %v1987, 0.35355338
    %1994 = vrot.lane.b32.xlu0 %v1990, 120
    %v1995 = vpop.permute.xlu0 %1994
    %1996 = vrot.lane.b32.xlu0 %v1991, 120
    %v1997 = vpop.permute.xlu0 %1996
    %1998 = vrot.lane.b32.xlu0 %v1990, 112
    %v1999 = vpop.permute.xlu0 %1998
    %2000 = vrot.lane.b32.xlu0 %v1991, 112
    %v2001 = vpop.permute.xlu0 %2000
    %2002 = vrot.lane.b32.xlu0 %v1990, 104
    %v2003 = vpop.permute.xlu0 %2002
    %2004 = vrot.lane.b32.xlu0 %v1991, 104
    %v2005 = vpop.permute.xlu0 %2004
    %2008 = vrot.lane.b32.xlu0 %v1982, 120
    %v2009 = vpop.permute.xlu0 %2008
    %2010 = vrot.lane.b32.xlu0 %v1987, 120
    %v2011 = vpop.permute.xlu0 %2010
    %2012 = vrot.lane.b32.xlu0 %v1982, 112
    %v2013 = vpop.permute.xlu0 %2012
    %2014 = vrot.lane.b32.xlu0 %v1987, 112
    %v2015 = vpop.permute.xlu0 %2014
    %2016 = vrot.lane.b32.xlu0 %v1982, 104
    %v2017 = vpop.permute.xlu0 %2016
    %2018 = vrot.lane.b32.xlu0 %v1987, 104
    %v2019 = vpop.permute.xlu0 %2018
    %2020 = vrot.lane.b32.xlu0 %v1982, 96
    %v2021 = vpop.permute.xlu0 %2020
    %v2022 = vsel %vm185, %v1990, 0
    %v2024 = vsel %vm185, %v2021, 0
    %2026 = vmatprep.subr.mxu0 0.0
    %2027 = vmatpush1.xpose.msra.mxu0 0.0
    %2028 = vmatprep.subr.mxu0 0.0
    %2029 = vmatpush1.xpose.msra.mxu0 0.0
    %2030 = vmatprep.subr.mxu0 0.0
    %2031 = vmatpush1.xpose.msra.mxu0 0.0
    %2032 = vmatprep.subr.mxu0 0.0
    %2033 = vmatpush1.xpose.msra.mxu0 0.0
    %2034 = vmatprep.subr.mxu0 0.0
    %2035 = vmatpush1.xpose.msra.mxu0 0.0
    %2036 = vmatprep.subr.mxu0 0.0
    %2037 = vmatpush1.xpose.msra.mxu0 0.0
    %2038 = vmatprep.subr.mxu0 0.0
    %2039 = vmatpush1.xpose.msra.mxu0 0.0
    %2040 = vmatprep.subr.mxu0 0.0
    %2041 = vmatpush1.xpose.msra.mxu0 0.0
    %2042 = vmatprep.subr.mxu0 0.0
    %2043 = vmatpush1.xpose.msra.mxu0 0.0
    %2044 = vmatprep.subr.mxu0 0.0
    %2045 = vmatpush1.xpose.msra.mxu0 0.0
    %2046 = vmatprep.subr.mxu0 0.0
    %2047 = vmatpush1.xpose.msra.mxu0 0.0
    %2048 = vmatprep.subr.mxu0 0.0
    %2049 = vmatpush1.xpose.msra.mxu0 0.0
    %2050 = vmatprep.subr.mxu0 0.0
    %2051 = vmatpush1.xpose.msra.mxu0 0.0
    %2052 = vmatprep.subr.mxu0 0.0
    %2053 = vmatpush1.xpose.msra.mxu0 0.0
    %2054 = vmatprep.subr.mxu0 0.0
    %2055 = vmatpush1.xpose.msra.mxu0 0.0
    %2056 = vmatprep.subr.mxu0 0.0
    %2057 = vmatpush1.xpose.msra.mxu0 %v2024
    %2058 = vmatprep.subr.mxu0 0.0
    %2059 = vmatpush2.xpose.msra.mxu0 0.0
    %2060 = vmatprep.subr.mxu0 0.0
    %2061 = vmatpush2.xpose.msra.mxu0 0.0
    %2062 = vmatprep.subr.mxu0 0.0
    %2063 = vmatpush2.xpose.msra.mxu0 0.0
    %2064 = vmatprep.subr.mxu0 0.0
    %2065 = vmatpush2.xpose.msra.mxu0 0.0
    %2066 = vmatprep.subr.mxu0 0.0
    %2067 = vmatpush2.xpose.msra.mxu0 0.0
    %2068 = vmatprep.subr.mxu0 0.0
    %2069 = vmatpush2.xpose.msra.mxu0 0.0
    %2070 = vmatprep.subr.mxu0 0.0
    %2071 = vmatpush2.xpose.msra.mxu0 0.0
    %2072 = vmatprep.subr.mxu0 0.0
    %2073 = vmatpush2.xpose.msra.mxu0 0.0
    %2074 = vmatprep.subr.mxu0 0.0
    %2075 = vmatpush2.xpose.msra.mxu0 0.0
    %2076 = vmatprep.subr.mxu0 0.0
    %2077 = vmatpush2.xpose.msra.mxu0 0.0
    %2078 = vmatprep.subr.mxu0 0.0
    %2079 = vmatpush2.xpose.msra.mxu0 0.0
    %2080 = vmatprep.subr.mxu0 0.0
    %2081 = vmatpush2.xpose.msra.mxu0 0.0
    %2082 = vmatprep.subr.mxu0 0.0
    %2083 = vmatpush2.xpose.msra.mxu0 0.0
    %2084 = vmatprep.subr.mxu0 0.0
    %2085 = vmatpush2.xpose.msra.mxu0 0.0
    %2086 = vmatprep.subr.mxu0 0.0
    %2087 = vmatpush2.xpose.msra.mxu0 0.0
    %2088 = vmatprep.subr.mxu0 0.0
    %2089 = vmatpush2.xpose.msra.mxu0 0.0
    %2090 = vmatprep.mubr.f32.mxu0 0.0
    %2091 = vmatmul.mubr.f32.gmra.mxu0 %v2022
    %v2092 = vpop.f32.mrf.mxu0
    %v2093 = vadd.f32 0.0, %v2092
    %v2094 = vpop.f32.mrf.mxu0
    %2095 = vdwg.mxu0
    %2096 = vrot.lane.b32.xlu0 %v1987, 96
    %v2097 = vpop.permute.xlu0 %2096
    %v2098 = vsel %vm185, %v1991, 0
    %v2100 = vsel %vm185, %v2097, 0
    %2102 = vmatprep.subr.mxu0 0.0
    %2103 = vmatpush1.xpose.msra.mxu0 0.0
    %2104 = vmatprep.subr.mxu0 0.0
    %2105 = vmatpush1.xpose.msra.mxu0 0.0
    %2106 = vmatprep.subr.mxu0 0.0
    %2107 = vmatpush1.xpose.msra.mxu0 0.0
    %2108 = vmatprep.subr.mxu0 0.0
    %2109 = vmatpush1.xpose.msra.mxu0 0.0
    %2110 = vmatprep.subr.mxu0 0.0
    %2111 = vmatpush1.xpose.msra.mxu0 0.0
    %2112 = vmatprep.subr.mxu0 0.0
    %2113 = vmatpush1.xpose.msra.mxu0 0.0
    %2114 = vmatprep.subr.mxu0 0.0
    %2115 = vmatpush1.xpose.msra.mxu0 0.0
    %2116 = vmatprep.subr.mxu0 0.0
    %2117 = vmatpush1.xpose.msra.mxu0 0.0
    %2118 = vmatprep.subr.mxu0 0.0
    %2119 = vmatpush1.xpose.msra.mxu0 0.0
    %2120 = vmatprep.subr.mxu0 0.0
    %2121 = vmatpush1.xpose.msra.mxu0 0.0
    %2122 = vmatprep.subr.mxu0 0.0
    %2123 = vmatpush1.xpose.msra.mxu0 0.0
    %2124 = vmatprep.subr.mxu0 0.0
    %2125 = vmatpush1.xpose.msra.mxu0 0.0
    %2126 = vmatprep.subr.mxu0 0.0
    %2127 = vmatpush1.xpose.msra.mxu0 0.0
    %2128 = vmatprep.subr.mxu0 0.0
    %2129 = vmatpush1.xpose.msra.mxu0 0.0
    %2130 = vmatprep.subr.mxu0 0.0
    %2131 = vmatpush1.xpose.msra.mxu0 0.0
    %2132 = vmatprep.subr.mxu0 0.0
    %2133 = vmatpush1.xpose.msra.mxu0 %v2100
    %2134 = vmatprep.subr.mxu0 0.0
    %2135 = vmatpush2.xpose.msra.mxu0 0.0
    %2136 = vmatprep.subr.mxu0 0.0
    %2137 = vmatpush2.xpose.msra.mxu0 0.0
    %2138 = vmatprep.subr.mxu0 0.0
    %2139 = vmatpush2.xpose.msra.mxu0 0.0
    %2140 = vmatprep.subr.mxu0 0.0
    %2141 = vmatpush2.xpose.msra.mxu0 0.0
    %2142 = vmatprep.subr.mxu0 0.0
    %2143 = vmatpush2.xpose.msra.mxu0 0.0
    %2144 = vmatprep.subr.mxu0 0.0
    %2145 = vmatpush2.xpose.msra.mxu0 0.0
    %2146 = vmatprep.subr.mxu0 0.0
    %2147 = vmatpush2.xpose.msra.mxu0 0.0
    %2148 = vmatprep.subr.mxu0 0.0
    %2149 = vmatpush2.xpose.msra.mxu0 0.0
    %2150 = vmatprep.subr.mxu0 0.0
    %2151 = vmatpush2.xpose.msra.mxu0 0.0
    %2152 = vmatprep.subr.mxu0 0.0
    %2153 = vmatpush2.xpose.msra.mxu0 0.0
    %2154 = vmatprep.subr.mxu0 0.0
    %2155 = vmatpush2.xpose.msra.mxu0 0.0
    %2156 = vmatprep.subr.mxu0 0.0
    %2157 = vmatpush2.xpose.msra.mxu0 0.0
    %2158 = vmatprep.subr.mxu0 0.0
    %2159 = vmatpush2.xpose.msra.mxu0 0.0
    %2160 = vmatprep.subr.mxu0 0.0
    %2161 = vmatpush2.xpose.msra.mxu0 0.0
    %2162 = vmatprep.subr.mxu0 0.0
    %2163 = vmatpush2.xpose.msra.mxu0 0.0
    %2164 = vmatprep.subr.mxu0 0.0
    %2165 = vmatpush2.xpose.msra.mxu0 0.0
    %2166 = vmatprep.mubr.f32.mxu0 0.0
    %2167 = vmatmul.mubr.f32.gmra.mxu0 %v2098
    %v2168 = vpop.f32.mrf.mxu0
    %v2169 = vadd.f32 0.0, %v2168
    %v2170 = vpop.f32.mrf.mxu0
    %2171 = vdwg.mxu0
    %2172 = vrot.lane.b32.xlu0 %v2009, 96
    %v2173 = vpop.permute.xlu0 %2172
    %v2174 = vsel %vm185, %v1995, 0
    %v2176 = vsel %vm185, %v2173, 0
    %2178 = vmatprep.subr.mxu0 0.0
    %2179 = vmatpush1.xpose.msra.mxu0 0.0
    %2180 = vmatprep.subr.mxu0 0.0
    %2181 = vmatpush1.xpose.msra.mxu0 0.0
    %2182 = vmatprep.subr.mxu0 0.0
    %2183 = vmatpush1.xpose.msra.mxu0 0.0
    %2184 = vmatprep.subr.mxu0 0.0
    %2185 = vmatpush1.xpose.msra.mxu0 0.0
    %2186 = vmatprep.subr.mxu0 0.0
    %2187 = vmatpush1.xpose.msra.mxu0 0.0
    %2188 = vmatprep.subr.mxu0 0.0
    %2189 = vmatpush1.xpose.msra.mxu0 0.0
    %2190 = vmatprep.subr.mxu0 0.0
    %2191 = vmatpush1.xpose.msra.mxu0 0.0
    %2192 = vmatprep.subr.mxu0 0.0
    %2193 = vmatpush1.xpose.msra.mxu0 0.0
    %2194 = vmatprep.subr.mxu0 0.0
    %2195 = vmatpush1.xpose.msra.mxu0 0.0
    %2196 = vmatprep.subr.mxu0 0.0
    %2197 = vmatpush1.xpose.msra.mxu0 0.0
    %2198 = vmatprep.subr.mxu0 0.0
    %2199 = vmatpush1.xpose.msra.mxu0 0.0
    %2200 = vmatprep.subr.mxu0 0.0
    %2201 = vmatpush1.xpose.msra.mxu0 0.0
    %2202 = vmatprep.subr.mxu0 0.0
    %2203 = vmatpush1.xpose.msra.mxu0 0.0
    %2204 = vmatprep.subr.mxu0 0.0
    %2205 = vmatpush1.xpose.msra.mxu0 0.0
    %2206 = vmatprep.subr.mxu0 0.0
    %2207 = vmatpush1.xpose.msra.mxu0 0.0
    %2208 = vmatprep.subr.mxu0 0.0
    %2209 = vmatpush1.xpose.msra.mxu0 %v2176
    %2210 = vmatprep.subr.mxu0 0.0
    %2211 = vmatpush2.xpose.msra.mxu0 0.0
    %2212 = vmatprep.subr.mxu0 0.0
    %2213 = vmatpush2.xpose.msra.mxu0 0.0
    %2214 = vmatprep.subr.mxu0 0.0
    %2215 = vmatpush2.xpose.msra.mxu0 0.0
    %2216 = vmatprep.subr.mxu0 0.0
    %2217 = vmatpush2.xpose.msra.mxu0 0.0
    %2218 = vmatprep.subr.mxu0 0.0
    %2219 = vmatpush2.xpose.msra.mxu0 0.0
    %2220 = vmatprep.subr.mxu0 0.0
    %2221 = vmatpush2.xpose.msra.mxu0 0.0
    %2222 = vmatprep.subr.mxu0 0.0
    %2223 = vmatpush2.xpose.msra.mxu0 0.0
    %2224 = vmatprep.subr.mxu0 0.0
    %2225 = vmatpush2.xpose.msra.mxu0 0.0
    %2226 = vmatprep.subr.mxu0 0.0
    %2227 = vmatpush2.xpose.msra.mxu0 0.0
    %2228 = vmatprep.subr.mxu0 0.0
    %2229 = vmatpush2.xpose.msra.mxu0 0.0
    %2230 = vmatprep.subr.mxu0 0.0
    %2231 = vmatpush2.xpose.msra.mxu0 0.0
    %2232 = vmatprep.subr.mxu0 0.0
    %2233 = vmatpush2.xpose.msra.mxu0 0.0
    %2234 = vmatprep.subr.mxu0 0.0
    %2235 = vmatpush2.xpose.msra.mxu0 0.0
    %2236 = vmatprep.subr.mxu0 0.0
    %2237 = vmatpush2.xpose.msra.mxu0 0.0
    %2238 = vmatprep.subr.mxu0 0.0
    %2239 = vmatpush2.xpose.msra.mxu0 0.0
    %2240 = vmatprep.subr.mxu0 0.0
    %2241 = vmatpush2.xpose.msra.mxu0 0.0
    %2242 = vmatprep.mubr.f32.mxu0 0.0
    %2243 = vmatmul.mubr.f32.gmra.mxu0 %v2174
    %v2244 = vpop.f32.mrf.mxu0
    %v2245 = vadd.f32 0.0, %v2244
    %v2246 = vpop.f32.mrf.mxu0
    %2247 = vdwg.mxu0
    %2248 = vrot.lane.b32.xlu0 %v2011, 96
    %v2249 = vpop.permute.xlu0 %2248
    %v2250 = vsel %vm185, %v1997, 0
    %v2252 = vsel %vm185, %v2249, 0
    %2254 = vmatprep.subr.mxu0 0.0
    %2255 = vmatpush1.xpose.msra.mxu0 0.0
    %2256 = vmatprep.subr.mxu0 0.0
    %2257 = vmatpush1.xpose.msra.mxu0 0.0
    %2258 = vmatprep.subr.mxu0 0.0
    %2259 = vmatpush1.xpose.msra.mxu0 0.0
    %2260 = vmatprep.subr.mxu0 0.0
    %2261 = vmatpush1.xpose.msra.mxu0 0.0
    %2262 = vmatprep.subr.mxu0 0.0
    %2263 = vmatpush1.xpose.msra.mxu0 0.0
    %2264 = vmatprep.subr.mxu0 0.0
    %2265 = vmatpush1.xpose.msra.mxu0 0.0
    %2266 = vmatprep.subr.mxu0 0.0
    %2267 = vmatpush1.xpose.msra.mxu0 0.0
    %2268 = vmatprep.subr.mxu0 0.0
    %2269 = vmatpush1.xpose.msra.mxu0 0.0
    %2270 = vmatprep.subr.mxu0 0.0
    %2271 = vmatpush1.xpose.msra.mxu0 0.0
    %2272 = vmatprep.subr.mxu0 0.0
    %2273 = vmatpush1.xpose.msra.mxu0 0.0
    %2274 = vmatprep.subr.mxu0 0.0
    %2275 = vmatpush1.xpose.msra.mxu0 0.0
    %2276 = vmatprep.subr.mxu0 0.0
    %2277 = vmatpush1.xpose.msra.mxu0 0.0
    %2278 = vmatprep.subr.mxu0 0.0
    %2279 = vmatpush1.xpose.msra.mxu0 0.0
    %2280 = vmatprep.subr.mxu0 0.0
    %2281 = vmatpush1.xpose.msra.mxu0 0.0
    %2282 = vmatprep.subr.mxu0 0.0
    %2283 = vmatpush1.xpose.msra.mxu0 0.0
    %2284 = vmatprep.subr.mxu0 0.0
    %2285 = vmatpush1.xpose.msra.mxu0 %v2252
    %2286 = vmatprep.subr.mxu0 0.0
    %2287 = vmatpush2.xpose.msra.mxu0 0.0
    %2288 = vmatprep.subr.mxu0 0.0
    %2289 = vmatpush2.xpose.msra.mxu0 0.0
    %2290 = vmatprep.subr.mxu0 0.0
    %2291 = vmatpush2.xpose.msra.mxu0 0.0
    %2292 = vmatprep.subr.mxu0 0.0
    %2293 = vmatpush2.xpose.msra.mxu0 0.0
    %2294 = vmatprep.subr.mxu0 0.0
    %2295 = vmatpush2.xpose.msra.mxu0 0.0
    %2296 = vmatprep.subr.mxu0 0.0
    %2297 = vmatpush2.xpose.msra.mxu0 0.0
    %2298 = vmatprep.subr.mxu0 0.0
    %2299 = vmatpush2.xpose.msra.mxu0 0.0
    %2300 = vmatprep.subr.mxu0 0.0
    %2301 = vmatpush2.xpose.msra.mxu0 0.0
    %2302 = vmatprep.subr.mxu0 0.0
    %2303 = vmatpush2.xpose.msra.mxu0 0.0
    %2304 = vmatprep.subr.mxu0 0.0
    %2305 = vmatpush2.xpose.msra.mxu0 0.0
    %2306 = vmatprep.subr.mxu0 0.0
    %2307 = vmatpush2.xpose.msra.mxu0 0.0
    %2308 = vmatprep.subr.mxu0 0.0
    %2309 = vmatpush2.xpose.msra.mxu0 0.0
    %2310 = vmatprep.subr.mxu0 0.0
    %2311 = vmatpush2.xpose.msra.mxu0 0.0
    %2312 = vmatprep.subr.mxu0 0.0
    %2313 = vmatpush2.xpose.msra.mxu0 0.0
    %2314 = vmatprep.subr.mxu0 0.0
    %2315 = vmatpush2.xpose.msra.mxu0 0.0
    %2316 = vmatprep.subr.mxu0 0.0
    %2317 = vmatpush2.xpose.msra.mxu0 0.0
    %2318 = vmatprep.mubr.f32.mxu0 0.0
    %2319 = vmatmul.mubr.f32.gmra.mxu0 %v2250
    %v2320 = vpop.f32.mrf.mxu0
    %v2321 = vadd.f32 0.0, %v2320
    %v2322 = vpop.f32.mrf.mxu0
    %2323 = vdwg.mxu0
    %2324 = vrot.lane.b32.xlu0 %v2013, 96
    %v2325 = vpop.permute.xlu0 %2324
    %v2326 = vsel %vm185, %v1999, 0
    %v2328 = vsel %vm185, %v2325, 0
    %2330 = vmatprep.subr.mxu0 0.0
    %2331 = vmatpush1.xpose.msra.mxu0 0.0
    %2332 = vmatprep.subr.mxu0 0.0
    %2333 = vmatpush1.xpose.msra.mxu0 0.0
    %2334 = vmatprep.subr.mxu0 0.0
    %2335 = vmatpush1.xpose.msra.mxu0 0.0
    %2336 = vmatprep.subr.mxu0 0.0
    %2337 = vmatpush1.xpose.msra.mxu0 0.0
    %2338 = vmatprep.subr.mxu0 0.0
    %2339 = vmatpush1.xpose.msra.mxu0 0.0
    %2340 = vmatprep.subr.mxu0 0.0
    %2341 = vmatpush1.xpose.msra.mxu0 0.0
    %2342 = vmatprep.subr.mxu0 0.0
    %2343 = vmatpush1.xpose.msra.mxu0 0.0
    %2344 = vmatprep.subr.mxu0 0.0
    %2345 = vmatpush1.xpose.msra.mxu0 0.0
    %2346 = vmatprep.subr.mxu0 0.0
    %2347 = vmatpush1.xpose.msra.mxu0 0.0
    %2348 = vmatprep.subr.mxu0 0.0
    %2349 = vmatpush1.xpose.msra.mxu0 0.0
    %2350 = vmatprep.subr.mxu0 0.0
    %2351 = vmatpush1.xpose.msra.mxu0 0.0
    %2352 = vmatprep.subr.mxu0 0.0
    %2353 = vmatpush1.xpose.msra.mxu0 0.0
    %2354 = vmatprep.subr.mxu0 0.0
    %2355 = vmatpush1.xpose.msra.mxu0 0.0
    %2356 = vmatprep.subr.mxu0 0.0
    %2357 = vmatpush1.xpose.msra.mxu0 0.0
    %2358 = vmatprep.subr.mxu0 0.0
    %2359 = vmatpush1.xpose.msra.mxu0 0.0
    %2360 = vmatprep.subr.mxu0 0.0
    %2361 = vmatpush1.xpose.msra.mxu0 %v2328
    %2362 = vmatprep.subr.mxu0 0.0
    %2363 = vmatpush2.xpose.msra.mxu0 0.0
    %2364 = vmatprep.subr.mxu0 0.0
    %2365 = vmatpush2.xpose.msra.mxu0 0.0
    %2366 = vmatprep.subr.mxu0 0.0
    %2367 = vmatpush2.xpose.msra.mxu0 0.0
    %2368 = vmatprep.subr.mxu0 0.0
    %2369 = vmatpush2.xpose.msra.mxu0 0.0
    %2370 = vmatprep.subr.mxu0 0.0
    %2371 = vmatpush2.xpose.msra.mxu0 0.0
    %2372 = vmatprep.subr.mxu0 0.0
    %2373 = vmatpush2.xpose.msra.mxu0 0.0
    %2374 = vmatprep.subr.mxu0 0.0
    %2375 = vmatpush2.xpose.msra.mxu0 0.0
    %2376 = vmatprep.subr.mxu0 0.0
    %2377 = vmatpush2.xpose.msra.mxu0 0.0
    %2378 = vmatprep.subr.mxu0 0.0
    %2379 = vmatpush2.xpose.msra.mxu0 0.0
    %2380 = vmatprep.subr.mxu0 0.0
    %2381 = vmatpush2.xpose.msra.mxu0 0.0
    %2382 = vmatprep.subr.mxu0 0.0
    %2383 = vmatpush2.xpose.msra.mxu0 0.0
    %2384 = vmatprep.subr.mxu0 0.0
    %2385 = vmatpush2.xpose.msra.mxu0 0.0
    %2386 = vmatprep.subr.mxu0 0.0
    %2387 = vmatpush2.xpose.msra.mxu0 0.0
    %2388 = vmatprep.subr.mxu0 0.0
    %2389 = vmatpush2.xpose.msra.mxu0 0.0
    %2390 = vmatprep.subr.mxu0 0.0
    %2391 = vmatpush2.xpose.msra.mxu0 0.0
    %2392 = vmatprep.subr.mxu0 0.0
    %2393 = vmatpush2.xpose.msra.mxu0 0.0
    %2394 = vmatprep.mubr.f32.mxu0 0.0
    %2395 = vmatmul.mubr.f32.gmra.mxu0 %v2326
    %v2396 = vpop.f32.mrf.mxu0
    %v2397 = vadd.f32 0.0, %v2396
    %v2398 = vpop.f32.mrf.mxu0
    %2399 = vdwg.mxu0
    %2400 = vrot.lane.b32.xlu0 %v2015, 96
    %v2401 = vpop.permute.xlu0 %2400
    %v2402 = vsel %vm185, %v2001, 0
    %v2404 = vsel %vm185, %v2401, 0
    %2406 = vmatprep.subr.mxu0 0.0
    %2407 = vmatpush1.xpose.msra.mxu0 0.0
    %2408 = vmatprep.subr.mxu0 0.0
    %2409 = vmatpush1.xpose.msra.mxu0 0.0
    %2410 = vmatprep.subr.mxu0 0.0
    %2411 = vmatpush1.xpose.msra.mxu0 0.0
    %2412 = vmatprep.subr.mxu0 0.0
    %2413 = vmatpush1.xpose.msra.mxu0 0.0
    %2414 = vmatprep.subr.mxu0 0.0
    %2415 = vmatpush1.xpose.msra.mxu0 0.0
    %2416 = vmatprep.subr.mxu0 0.0
    %2417 = vmatpush1.xpose.msra.mxu0 0.0
    %2418 = vmatprep.subr.mxu0 0.0
    %2419 = vmatpush1.xpose.msra.mxu0 0.0
    %2420 = vmatprep.subr.mxu0 0.0
    %2421 = vmatpush1.xpose.msra.mxu0 0.0
    %2422 = vmatprep.subr.mxu0 0.0
    %2423 = vmatpush1.xpose.msra.mxu0 0.0
    %2424 = vmatprep.subr.mxu0 0.0
    %2425 = vmatpush1.xpose.msra.mxu0 0.0
    %2426 = vmatprep.subr.mxu0 0.0
    %2427 = vmatpush1.xpose.msra.mxu0 0.0
    %2428 = vmatprep.subr.mxu0 0.0
    %2429 = vmatpush1.xpose.msra.mxu0 0.0
    %2430 = vmatprep.subr.mxu0 0.0
    %2431 = vmatpush1.xpose.msra.mxu0 0.0
    %2432 = vmatprep.subr.mxu0 0.0
    %2433 = vmatpush1.xpose.msra.mxu0 0.0
    %2434 = vmatprep.subr.mxu0 0.0
    %2435 = vmatpush1.xpose.msra.mxu0 0.0
    %2436 = vmatprep.subr.mxu0 0.0
    %2437 = vmatpush1.xpose.msra.mxu0 %v2404
    %2438 = vmatprep.subr.mxu0 0.0
    %2439 = vmatpush2.xpose.msra.mxu0 0.0
    %2440 = vmatprep.subr.mxu0 0.0
    %2441 = vmatpush2.xpose.msra.mxu0 0.0
    %2442 = vmatprep.subr.mxu0 0.0
    %2443 = vmatpush2.xpose.msra.mxu0 0.0
    %2444 = vmatprep.subr.mxu0 0.0
    %2445 = vmatpush2.xpose.msra.mxu0 0.0
    %2446 = vmatprep.subr.mxu0 0.0
    %2447 = vmatpush2.xpose.msra.mxu0 0.0
    %2448 = vmatprep.subr.mxu0 0.0
    %2449 = vmatpush2.xpose.msra.mxu0 0.0
    %2450 = vmatprep.subr.mxu0 0.0
    %2451 = vmatpush2.xpose.msra.mxu0 0.0
    %2452 = vmatprep.subr.mxu0 0.0
    %2453 = vmatpush2.xpose.msra.mxu0 0.0
    %2454 = vmatprep.subr.mxu0 0.0
    %2455 = vmatpush2.xpose.msra.mxu0 0.0
    %2456 = vmatprep.subr.mxu0 0.0
    %2457 = vmatpush2.xpose.msra.mxu0 0.0
    %2458 = vmatprep.subr.mxu0 0.0
    %2459 = vmatpush2.xpose.msra.mxu0 0.0
    %2460 = vmatprep.subr.mxu0 0.0
    %2461 = vmatpush2.xpose.msra.mxu0 0.0
    %2462 = vmatprep.subr.mxu0 0.0
    %2463 = vmatpush2.xpose.msra.mxu0 0.0
    %2464 = vmatprep.subr.mxu0 0.0
    %2465 = vmatpush2.xpose.msra.mxu0 0.0
    %2466 = vmatprep.subr.mxu0 0.0
    %2467 = vmatpush2.xpose.msra.mxu0 0.0
    %2468 = vmatprep.subr.mxu0 0.0
    %2469 = vmatpush2.xpose.msra.mxu0 0.0
    %2470 = vmatprep.mubr.f32.mxu0 0.0
    %2471 = vmatmul.mubr.f32.gmra.mxu0 %v2402
    %v2472 = vpop.f32.mrf.mxu0
    %v2473 = vadd.f32 0.0, %v2472
    %v2474 = vpop.f32.mrf.mxu0
    %2475 = vdwg.mxu0
    %2476 = vrot.lane.b32.xlu0 %v2017, 96
    %v2477 = vpop.permute.xlu0 %2476
    %v2478 = vsel %vm185, %v2003, 0
    %v2480 = vsel %vm185, %v2477, 0
    %2482 = vmatprep.subr.mxu0 0.0
    %2483 = vmatpush1.xpose.msra.mxu0 0.0
    %2484 = vmatprep.subr.mxu0 0.0
    %2485 = vmatpush1.xpose.msra.mxu0 0.0
    %2486 = vmatprep.subr.mxu0 0.0
    %2487 = vmatpush1.xpose.msra.mxu0 0.0
    %2488 = vmatprep.subr.mxu0 0.0
    %2489 = vmatpush1.xpose.msra.mxu0 0.0
    %2490 = vmatprep.subr.mxu0 0.0
    %2491 = vmatpush1.xpose.msra.mxu0 0.0
    %2492 = vmatprep.subr.mxu0 0.0
    %2493 = vmatpush1.xpose.msra.mxu0 0.0
    %2494 = vmatprep.subr.mxu0 0.0
    %2495 = vmatpush1.xpose.msra.mxu0 0.0
    %2496 = vmatprep.subr.mxu0 0.0
    %2497 = vmatpush1.xpose.msra.mxu0 0.0
    %2498 = vmatprep.subr.mxu0 0.0
    %2499 = vmatpush1.xpose.msra.mxu0 0.0
    %2500 = vmatprep.subr.mxu0 0.0
    %2501 = vmatpush1.xpose.msra.mxu0 0.0
    %2502 = vmatprep.subr.mxu0 0.0
    %2503 = vmatpush1.xpose.msra.mxu0 0.0
    %2504 = vmatprep.subr.mxu0 0.0
    %2505 = vmatpush1.xpose.msra.mxu0 0.0
    %2506 = vmatprep.subr.mxu0 0.0
    %2507 = vmatpush1.xpose.msra.mxu0 0.0
    %2508 = vmatprep.subr.mxu0 0.0
    %2509 = vmatpush1.xpose.msra.mxu0 0.0
    %2510 = vmatprep.subr.mxu0 0.0
    %2511 = vmatpush1.xpose.msra.mxu0 0.0
    %2512 = vmatprep.subr.mxu0 0.0
    %2513 = vmatpush1.xpose.msra.mxu0 %v2480
    %2514 = vmatprep.subr.mxu0 0.0
    %2515 = vmatpush2.xpose.msra.mxu0 0.0
    %2516 = vmatprep.subr.mxu0 0.0
    %2517 = vmatpush2.xpose.msra.mxu0 0.0
    %2518 = vmatprep.subr.mxu0 0.0
    %2519 = vmatpush2.xpose.msra.mxu0 0.0
    %2520 = vmatprep.subr.mxu0 0.0
    %2521 = vmatpush2.xpose.msra.mxu0 0.0
    %2522 = vmatprep.subr.mxu0 0.0
    %2523 = vmatpush2.xpose.msra.mxu0 0.0
    %2524 = vmatprep.subr.mxu0 0.0
    %2525 = vmatpush2.xpose.msra.mxu0 0.0
    %2526 = vmatprep.subr.mxu0 0.0
    %2527 = vmatpush2.xpose.msra.mxu0 0.0
    %2528 = vmatprep.subr.mxu0 0.0
    %2529 = vmatpush2.xpose.msra.mxu0 0.0
    %2530 = vmatprep.subr.mxu0 0.0
    %2531 = vmatpush2.xpose.msra.mxu0 0.0
    %2532 = vmatprep.subr.mxu0 0.0
    %2533 = vmatpush2.xpose.msra.mxu0 0.0
    %2534 = vmatprep.subr.mxu0 0.0
    %2535 = vmatpush2.xpose.msra.mxu0 0.0
    %2536 = vmatprep.subr.mxu0 0.0
    %2537 = vmatpush2.xpose.msra.mxu0 0.0
    %2538 = vmatprep.subr.mxu0 0.0
    %2539 = vmatpush2.xpose.msra.mxu0 0.0
    %2540 = vmatprep.subr.mxu0 0.0
    %2541 = vmatpush2.xpose.msra.mxu0 0.0
    %2542 = vmatprep.subr.mxu0 0.0
    %2543 = vmatpush2.xpose.msra.mxu0 0.0
    %2544 = vmatprep.subr.mxu0 0.0
    %2545 = vmatpush2.xpose.msra.mxu0 0.0
    %2546 = vmatprep.mubr.f32.mxu0 0.0
    %2547 = vmatmul.mubr.f32.gmra.mxu0 %v2478
    %v2548 = vpop.f32.mrf.mxu0
    %v2549 = vadd.f32 0.0, %v2548
    %v2550 = vpop.f32.mrf.mxu0
    %2551 = vdwg.mxu0
    %2552 = vrot.lane.b32.xlu0 %v2019, 96
    %v2553 = vpop.permute.xlu0 %2552
    %v2554 = vsel %vm185, %v2005, 0
    %v2556 = vsel %vm185, %v2553, 0
    %2558 = vmatprep.subr.mxu0 0.0
    %2559 = vmatpush1.xpose.msra.mxu0 0.0
    %2560 = vmatprep.subr.mxu0 0.0
    %2561 = vmatpush1.xpose.msra.mxu0 0.0
    %2562 = vmatprep.subr.mxu0 0.0
    %2563 = vmatpush1.xpose.msra.mxu0 0.0
    %2564 = vmatprep.subr.mxu0 0.0
    %2565 = vmatpush1.xpose.msra.mxu0 0.0
    %2566 = vmatprep.subr.mxu0 0.0
    %2567 = vmatpush1.xpose.msra.mxu0 0.0
    %2568 = vmatprep.subr.mxu0 0.0
    %2569 = vmatpush1.xpose.msra.mxu0 0.0
    %2570 = vmatprep.subr.mxu0 0.0
    %2571 = vmatpush1.xpose.msra.mxu0 0.0
    %2572 = vmatprep.subr.mxu0 0.0
    %2573 = vmatpush1.xpose.msra.mxu0 0.0
    %2574 = vmatprep.subr.mxu0 0.0
    %2575 = vmatpush1.xpose.msra.mxu0 0.0
    %2576 = vmatprep.subr.mxu0 0.0
    %2577 = vmatpush1.xpose.msra.mxu0 0.0
    %2578 = vmatprep.subr.mxu0 0.0
    %2579 = vmatpush1.xpose.msra.mxu0 0.0
    %2580 = vmatprep.subr.mxu0 0.0
    %2581 = vmatpush1.xpose.msra.mxu0 0.0
    %2582 = vmatprep.subr.mxu0 0.0
    %2583 = vmatpush1.xpose.msra.mxu0 0.0
    %2584 = vmatprep.subr.mxu0 0.0
    %2585 = vmatpush1.xpose.msra.mxu0 0.0
    %2586 = vmatprep.subr.mxu0 0.0
    %2587 = vmatpush1.xpose.msra.mxu0 0.0
    %2588 = vmatprep.subr.mxu0 0.0
    %2589 = vmatpush1.xpose.msra.mxu0 %v2556
    %2590 = vmatprep.subr.mxu0 0.0
    %2591 = vmatpush2.xpose.msra.mxu0 0.0
    %2592 = vmatprep.subr.mxu0 0.0
    %2593 = vmatpush2.xpose.msra.mxu0 0.0
    %2594 = vmatprep.subr.mxu0 0.0
    %2595 = vmatpush2.xpose.msra.mxu0 0.0
    %2596 = vmatprep.subr.mxu0 0.0
    %2597 = vmatpush2.xpose.msra.mxu0 0.0
    %2598 = vmatprep.subr.mxu0 0.0
    %2599 = vmatpush2.xpose.msra.mxu0 0.0
    %2600 = vmatprep.subr.mxu0 0.0
    %2601 = vmatpush2.xpose.msra.mxu0 0.0
    %2602 = vmatprep.subr.mxu0 0.0
    %2603 = vmatpush2.xpose.msra.mxu0 0.0
    %2604 = vmatprep.subr.mxu0 0.0
    %2605 = vmatpush2.xpose.msra.mxu0 0.0
    %2606 = vmatprep.subr.mxu0 0.0
    %2607 = vmatpush2.xpose.msra.mxu0 0.0
    %2608 = vmatprep.subr.mxu0 0.0
    %2609 = vmatpush2.xpose.msra.mxu0 0.0
    %2610 = vmatprep.subr.mxu0 0.0
    %2611 = vmatpush2.xpose.msra.mxu0 0.0
    %2612 = vmatprep.subr.mxu0 0.0
    %2613 = vmatpush2.xpose.msra.mxu0 0.0
    %2614 = vmatprep.subr.mxu0 0.0
    %2615 = vmatpush2.xpose.msra.mxu0 0.0
    %2616 = vmatprep.subr.mxu0 0.0
    %2617 = vmatpush2.xpose.msra.mxu0 0.0
    %2618 = vmatprep.subr.mxu0 0.0
    %2619 = vmatpush2.xpose.msra.mxu0 0.0
    %2620 = vmatprep.subr.mxu0 0.0
    %2621 = vmatpush2.xpose.msra.mxu0 0.0
    %2622 = vmatprep.mubr.f32.mxu0 0.0
    %2623 = vmatmul.mubr.f32.gmra.mxu0 %v2554
    %v2624 = vpop.f32.mrf.mxu0
    %v2625 = vadd.f32 0.0, %v2624
    %v2626 = vpop.f32.mrf.mxu0
    %2627 = vdwg.mxu0
    %v2628 = vsel %vm185, %v2093, -inf
    %2629 = vmax.xlane.f32.xlu0 %v2628
    %v2630 = vpop.xlane.xlu0 %2629
    %v2631 = vsel %vm185, %v2169, -inf
    %2632 = vmax.xlane.f32.xlu0 %v2631
    %v2633 = vpop.xlane.xlu0 %2632
    %v2634 = vsel %vm185, %v2245, -inf
    %2635 = vmax.xlane.f32.xlu0 %v2634
    %v2636 = vpop.xlane.xlu0 %2635
    %v2637 = vsel %vm185, %v2321, -inf
    %2638 = vmax.xlane.f32.xlu0 %v2637
    %v2639 = vpop.xlane.xlu0 %2638
    %v2640 = vsel %vm185, %v2397, -inf
    %2641 = vmax.xlane.f32.xlu0 %v2640
    %v2642 = vpop.xlane.xlu0 %2641
    %v2643 = vsel %vm185, %v2473, -inf
    %2644 = vmax.xlane.f32.xlu0 %v2643
    %v2645 = vpop.xlane.xlu0 %2644
    %v2646 = vsel %vm185, %v2549, -inf
    %2647 = vmax.xlane.f32.xlu0 %v2646
    %v2648 = vpop.xlane.xlu0 %2647
    %v2649 = vsel %vm185, %v2625, -inf
    %2650 = vmax.xlane.f32.xlu0 %v2649
    %v2651 = vpop.xlane.xlu0 %2650
    %v2652 = vsub.f32 %v2093, %v2630
    %v2653 = vsub.f32 %v2169, %v2633
    %v2654 = vsub.f32 %v2245, %v2636
    %v2655 = vsub.f32 %v2321, %v2639
    %v2656 = vsub.f32 %v2397, %v2642
    %v2657 = vsub.f32 %v2473, %v2645
    %v2658 = vsub.f32 %v2549, %v2648
    %v2659 = vsub.f32 %v2625, %v2651
    %v2660 = vmul.f32 %v2652, 1.442695
    %v2661 = vpow.pop %v2660
    %v2662 = vmul.f32 %v2653, 1.442695
    %v2663 = vpow.pop %v2662
    %v2664 = vmul.f32 %v2654, 1.442695
    %v2665 = vpow.pop %v2664
    %v2666 = vmul.f32 %v2655, 1.442695
    %v2667 = vpow.pop %v2666
    %v2668 = vmul.f32 %v2656, 1.442695
    %v2669 = vpow.pop %v2668
    %v2670 = vmul.f32 %v2657, 1.442695
    %v2671 = vpow.pop %v2670
    %v2672 = vmul.f32 %v2658, 1.442695
    %v2673 = vpow.pop %v2672
    %v2674 = vmul.f32 %v2659, 1.442695
    %v2675 = vpow.pop %v2674
    %v2676 = vsel %vm185, %v2661, 0.0
    %2677 = vadd.xlane.f32.xlu0 %v2676
    %v2678 = vpop.xlane.xlu0 %2677
    %v2679 = vsel %vm185, %v2663, 0.0
    %2680 = vadd.xlane.f32.xlu0 %v2679
    %v2681 = vpop.xlane.xlu0 %2680
    %v2682 = vsel %vm185, %v2665, 0.0
    %2683 = vadd.xlane.f32.xlu0 %v2682
    %v2684 = vpop.xlane.xlu0 %2683
    %v2685 = vsel %vm185, %v2667, 0.0
    %2686 = vadd.xlane.f32.xlu0 %v2685
    %v2687 = vpop.xlane.xlu0 %2686
    %v2688 = vsel %vm185, %v2669, 0.0
    %2689 = vadd.xlane.f32.xlu0 %v2688
    %v2690 = vpop.xlane.xlu0 %2689
    %v2691 = vsel %vm185, %v2671, 0.0
    %2692 = vadd.xlane.f32.xlu0 %v2691
    %v2693 = vpop.xlane.xlu0 %2692
    %v2694 = vsel %vm185, %v2673, 0.0
    %2695 = vadd.xlane.f32.xlu0 %v2694
    %v2696 = vpop.xlane.xlu0 %2695
    %v2697 = vsel %vm185, %v2675, 0.0
    %2698 = vadd.xlane.f32.xlu0 %v2697
    %v2699 = vpop.xlane.xlu0 %2698
    %v2700 = vrcp.pop %v2678
    %v2701 = vrcp.pop %v2681
    %v2702 = vrcp.pop %v2684
    %v2703 = vrcp.pop %v2687
    %v2704 = vrcp.pop %v2690
    %v2705 = vrcp.pop %v2693
    %v2706 = vrcp.pop %v2696
    %v2707 = vrcp.pop %v2699
    %v2708 = vmul.f32 %v2661, %v2700
    %v2709 = vmul.f32 %v2663, %v2701
    %v2710 = vmul.f32 %v2665, %v2702
    %v2711 = vmul.f32 %v2667, %v2703
    %v2712 = vmul.f32 %v2669, %v2704
    %v2713 = vmul.f32 %v2671, %v2705
    %v2714 = vmul.f32 %v2673, %v2706
    %v2715 = vmul.f32 %v2675, %v2707
    %2716 = vrot.lane.b32.xlu0 %v1982, 64
    %v2717 = vpop.permute.xlu0 %2716
    %v2720 = vsel %vm185, %v2708, 0
    %2722 = vmatprep.subr.mxu0 0.0
    %2723 = vmatpush1.msra.mxu0 0.0
    %2724 = vmatprep.subr.mxu0 0.0
    %2725 = vmatpush1.msra.mxu0 0.0
    %2726 = vmatprep.subr.mxu0 0.0
    %2727 = vmatpush1.msra.mxu0 0.0
    %2728 = vmatprep.subr.mxu0 0.0
    %2729 = vmatpush1.msra.mxu0 0.0
    %2730 = vmatprep.subr.mxu0 0.0
    %2731 = vmatpush1.msra.mxu0 0.0
    %2732 = vmatprep.subr.mxu0 0.0
    %2733 = vmatpush1.msra.mxu0 0.0
    %2734 = vmatprep.subr.mxu0 0.0
    %2735 = vmatpush1.msra.mxu0 0.0
    %2736 = vmatprep.subr.mxu0 0.0
    %2737 = vmatpush1.msra.mxu0 0.0
    %2738 = vmatprep.subr.mxu0 0.0
    %2739 = vmatpush1.msra.mxu0 0.0
    %2740 = vmatprep.subr.mxu0 0.0
    %2741 = vmatpush1.msra.mxu0 0.0
    %2742 = vmatprep.subr.mxu0 0.0
    %2743 = vmatpush1.msra.mxu0 0.0
    %2744 = vmatprep.subr.mxu0 0.0
    %2745 = vmatpush1.msra.mxu0 0.0
    %2746 = vmatprep.subr.mxu0 0.0
    %2747 = vmatpush1.msra.mxu0 0.0
    %2748 = vmatprep.subr.mxu0 0.0
    %2749 = vmatpush1.msra.mxu0 0.0
    %2750 = vmatprep.subr.mxu0 0.0
    %2751 = vmatpush1.msra.mxu0 0.0
    %2752 = vmatprep.subr.mxu0 0.0
    %2753 = vmatpush1.msra.mxu0 %v2717
    %2754 = vmatprep.subr.mxu0 0.0
    %2755 = vmatpush2.msra.mxu0 0.0
    %2756 = vmatprep.subr.mxu0 0.0
    %2757 = vmatpush2.msra.mxu0 0.0
    %2758 = vmatprep.subr.mxu0 0.0
    %2759 = vmatpush2.msra.mxu0 0.0
    %2760 = vmatprep.subr.mxu0 0.0
    %2761 = vmatpush2.msra.mxu0 0.0
    %2762 = vmatprep.subr.mxu0 0.0
    %2763 = vmatpush2.msra.mxu0 0.0
    %2764 = vmatprep.subr.mxu0 0.0
    %2765 = vmatpush2.msra.mxu0 0.0
    %2766 = vmatprep.subr.mxu0 0.0
    %2767 = vmatpush2.msra.mxu0 0.0
    %2768 = vmatprep.subr.mxu0 0.0
    %2769 = vmatpush2.msra.mxu0 0.0
    %2770 = vmatprep.subr.mxu0 0.0
    %2771 = vmatpush2.msra.mxu0 0.0
    %2772 = vmatprep.subr.mxu0 0.0
    %2773 = vmatpush2.msra.mxu0 0.0
    %2774 = vmatprep.subr.mxu0 0.0
    %2775 = vmatpush2.msra.mxu0 0.0
    %2776 = vmatprep.subr.mxu0 0.0
    %2777 = vmatpush2.msra.mxu0 0.0
    %2778 = vmatprep.subr.mxu0 0.0
    %2779 = vmatpush2.msra.mxu0 0.0
    %2780 = vmatprep.subr.mxu0 0.0
    %2781 = vmatpush2.msra.mxu0 0.0
    %2782 = vmatprep.subr.mxu0 0.0
    %2783 = vmatpush2.msra.mxu0 0.0
    %2784 = vmatprep.subr.mxu0 0.0
    %2785 = vmatpush2.msra.mxu0 0.0
    %2786 = vmatprep.mubr.f32.mxu0 0.0
    %2787 = vmatmul.mubr.f32.gmra.mxu0 %v2720
    %v2788 = vpop.f32.mrf.mxu0
    %v2789 = vadd.f32 0.0, %v2788
    %v2790 = vpop.f32.mrf.mxu0
    %2791 = vdwg.mxu0
    %2792 = vrot.lane.b32.xlu0 %v1987, 64
    %v2793 = vpop.permute.xlu0 %2792
    %v2796 = vsel %vm185, %v2709, 0
    %2798 = vmatprep.subr.mxu0 0.0
    %2799 = vmatpush1.msra.mxu0 0.0
    %2800 = vmatprep.subr.mxu0 0.0
    %2801 = vmatpush1.msra.mxu0 0.0
    %2802 = vmatprep.subr.mxu0 0.0
    %2803 = vmatpush1.msra.mxu0 0.0
    %2804 = vmatprep.subr.mxu0 0.0
    %2805 = vmatpush1.msra.mxu0 0.0
    %2806 = vmatprep.subr.mxu0 0.0
    %2807 = vmatpush1.msra.mxu0 0.0
    %2808 = vmatprep.subr.mxu0 0.0
    %2809 = vmatpush1.msra.mxu0 0.0
    %2810 = vmatprep.subr.mxu0 0.0
    %2811 = vmatpush1.msra.mxu0 0.0
    %2812 = vmatprep.subr.mxu0 0.0
    %2813 = vmatpush1.msra.mxu0 0.0
    %2814 = vmatprep.subr.mxu0 0.0
    %2815 = vmatpush1.msra.mxu0 0.0
    %2816 = vmatprep.subr.mxu0 0.0
    %2817 = vmatpush1.msra.mxu0 0.0
    %2818 = vmatprep.subr.mxu0 0.0
    %2819 = vmatpush1.msra.mxu0 0.0
    %2820 = vmatprep.subr.mxu0 0.0
    %2821 = vmatpush1.msra.mxu0 0.0
    %2822 = vmatprep.subr.mxu0 0.0
    %2823 = vmatpush1.msra.mxu0 0.0
    %2824 = vmatprep.subr.mxu0 0.0
    %2825 = vmatpush1.msra.mxu0 0.0
    %2826 = vmatprep.subr.mxu0 0.0
    %2827 = vmatpush1.msra.mxu0 0.0
    %2828 = vmatprep.subr.mxu0 0.0
    %2829 = vmatpush1.msra.mxu0 %v2793
    %2830 = vmatprep.subr.mxu0 0.0
    %2831 = vmatpush2.msra.mxu0 0.0
    %2832 = vmatprep.subr.mxu0 0.0
    %2833 = vmatpush2.msra.mxu0 0.0
    %2834 = vmatprep.subr.mxu0 0.0
    %2835 = vmatpush2.msra.mxu0 0.0
    %2836 = vmatprep.subr.mxu0 0.0
    %2837 = vmatpush2.msra.mxu0 0.0
    %2838 = vmatprep.subr.mxu0 0.0
    %2839 = vmatpush2.msra.mxu0 0.0
    %2840 = vmatprep.subr.mxu0 0.0
    %2841 = vmatpush2.msra.mxu0 0.0
    %2842 = vmatprep.subr.mxu0 0.0
    %2843 = vmatpush2.msra.mxu0 0.0
    %2844 = vmatprep.subr.mxu0 0.0
    %2845 = vmatpush2.msra.mxu0 0.0
    %2846 = vmatprep.subr.mxu0 0.0
    %2847 = vmatpush2.msra.mxu0 0.0
    %2848 = vmatprep.subr.mxu0 0.0
    %2849 = vmatpush2.msra.mxu0 0.0
    %2850 = vmatprep.subr.mxu0 0.0
    %2851 = vmatpush2.msra.mxu0 0.0
    %2852 = vmatprep.subr.mxu0 0.0
    %2853 = vmatpush2.msra.mxu0 0.0
    %2854 = vmatprep.subr.mxu0 0.0
    %2855 = vmatpush2.msra.mxu0 0.0
    %2856 = vmatprep.subr.mxu0 0.0
    %2857 = vmatpush2.msra.mxu0 0.0
    %2858 = vmatprep.subr.mxu0 0.0
    %2859 = vmatpush2.msra.mxu0 0.0
    %2860 = vmatprep.subr.mxu0 0.0
    %2861 = vmatpush2.msra.mxu0 0.0
    %2862 = vmatprep.mubr.f32.mxu0 0.0
    %2863 = vmatmul.mubr.f32.gmra.mxu0 %v2796
    %v2864 = vpop.f32.mrf.mxu0
    %v2865 = vadd.f32 0.0, %v2864
    %v2866 = vpop.f32.mrf.mxu0
    %2867 = vdwg.mxu0
    %2868 = vrot.lane.b32.xlu0 %v2009, 64
    %v2869 = vpop.permute.xlu0 %2868
    %v2872 = vsel %vm185, %v2710, 0
    %2874 = vmatprep.subr.mxu0 0.0
    %2875 = vmatpush1.msra.mxu0 0.0
    %2876 = vmatprep.subr.mxu0 0.0
    %2877 = vmatpush1.msra.mxu0 0.0
    %2878 = vmatprep.subr.mxu0 0.0
    %2879 = vmatpush1.msra.mxu0 0.0
    %2880 = vmatprep.subr.mxu0 0.0
    %2881 = vmatpush1.msra.mxu0 0.0
    %2882 = vmatprep.subr.mxu0 0.0
    %2883 = vmatpush1.msra.mxu0 0.0
    %2884 = vmatprep.subr.mxu0 0.0
    %2885 = vmatpush1.msra.mxu0 0.0
    %2886 = vmatprep.subr.mxu0 0.0
    %2887 = vmatpush1.msra.mxu0 0.0
    %2888 = vmatprep.subr.mxu0 0.0
    %2889 = vmatpush1.msra.mxu0 0.0
    %2890 = vmatprep.subr.mxu0 0.0
    %2891 = vmatpush1.msra.mxu0 0.0
    %2892 = vmatprep.subr.mxu0 0.0
    %2893 = vmatpush1.msra.mxu0 0.0
    %2894 = vmatprep.subr.mxu0 0.0
    %2895 = vmatpush1.msra.mxu0 0.0
    %2896 = vmatprep.subr.mxu0 0.0
    %2897 = vmatpush1.msra.mxu0 0.0
    %2898 = vmatprep.subr.mxu0 0.0
    %2899 = vmatpush1.msra.mxu0 0.0
    %2900 = vmatprep.subr.mxu0 0.0
    %2901 = vmatpush1.msra.mxu0 0.0
    %2902 = vmatprep.subr.mxu0 0.0
    %2903 = vmatpush1.msra.mxu0 0.0
    %2904 = vmatprep.subr.mxu0 0.0
    %2905 = vmatpush1.msra.mxu0 %v2869
    %2906 = vmatprep.subr.mxu0 0.0
    %2907 = vmatpush2.msra.mxu0 0.0
    %2908 = vmatprep.subr.mxu0 0.0
    %2909 = vmatpush2.msra.mxu0 0.0
    %2910 = vmatprep.subr.mxu0 0.0
    %2911 = vmatpush2.msra.mxu0 0.0
    %2912 = vmatprep.subr.mxu0 0.0
    %2913 = vmatpush2.msra.mxu0 0.0
    %2914 = vmatprep.subr.mxu0 0.0
    %2915 = vmatpush2.msra.mxu0 0.0
    %2916 = vmatprep.subr.mxu0 0.0
    %2917 = vmatpush2.msra.mxu0 0.0
    %2918 = vmatprep.subr.mxu0 0.0
    %2919 = vmatpush2.msra.mxu0 0.0
    %2920 = vmatprep.subr.mxu0 0.0
    %2921 = vmatpush2.msra.mxu0 0.0
    %2922 = vmatprep.subr.mxu0 0.0
    %2923 = vmatpush2.msra.mxu0 0.0
    %2924 = vmatprep.subr.mxu0 0.0
    %2925 = vmatpush2.msra.mxu0 0.0
    %2926 = vmatprep.subr.mxu0 0.0
    %2927 = vmatpush2.msra.mxu0 0.0
    %2928 = vmatprep.subr.mxu0 0.0
    %2929 = vmatpush2.msra.mxu0 0.0
    %2930 = vmatprep.subr.mxu0 0.0
    %2931 = vmatpush2.msra.mxu0 0.0
    %2932 = vmatprep.subr.mxu0 0.0
    %2933 = vmatpush2.msra.mxu0 0.0
    %2934 = vmatprep.subr.mxu0 0.0
    %2935 = vmatpush2.msra.mxu0 0.0
    %2936 = vmatprep.subr.mxu0 0.0
    %2937 = vmatpush2.msra.mxu0 0.0
    %2938 = vmatprep.mubr.f32.mxu0 0.0
    %2939 = vmatmul.mubr.f32.gmra.mxu0 %v2872
    %v2940 = vpop.f32.mrf.mxu0
    %v2941 = vadd.f32 0.0, %v2940
    %v2942 = vpop.f32.mrf.mxu0
    %2943 = vdwg.mxu0
    %2944 = vrot.lane.b32.xlu0 %v2011, 64
    %v2945 = vpop.permute.xlu0 %2944
    %v2948 = vsel %vm185, %v2711, 0
    %2950 = vmatprep.subr.mxu0 0.0
    %2951 = vmatpush1.msra.mxu0 0.0
    %2952 = vmatprep.subr.mxu0 0.0
    %2953 = vmatpush1.msra.mxu0 0.0
    %2954 = vmatprep.subr.mxu0 0.0
    %2955 = vmatpush1.msra.mxu0 0.0
    %2956 = vmatprep.subr.mxu0 0.0
    %2957 = vmatpush1.msra.mxu0 0.0
    %2958 = vmatprep.subr.mxu0 0.0
    %2959 = vmatpush1.msra.mxu0 0.0
    %2960 = vmatprep.subr.mxu0 0.0
    %2961 = vmatpush1.msra.mxu0 0.0
    %2962 = vmatprep.subr.mxu0 0.0
    %2963 = vmatpush1.msra.mxu0 0.0
    %2964 = vmatprep.subr.mxu0 0.0
    %2965 = vmatpush1.msra.mxu0 0.0
    %2966 = vmatprep.subr.mxu0 0.0
    %2967 = vmatpush1.msra.mxu0 0.0
    %2968 = vmatprep.subr.mxu0 0.0
    %2969 = vmatpush1.msra.mxu0 0.0
    %2970 = vmatprep.subr.mxu0 0.0
    %2971 = vmatpush1.msra.mxu0 0.0
    %2972 = vmatprep.subr.mxu0 0.0
    %2973 = vmatpush1.msra.mxu0 0.0
    %2974 = vmatprep.subr.mxu0 0.0
    %2975 = vmatpush1.msra.mxu0 0.0
    %2976 = vmatprep.subr.mxu0 0.0
    %2977 = vmatpush1.msra.mxu0 0.0
    %2978 = vmatprep.subr.mxu0 0.0
    %2979 = vmatpush1.msra.mxu0 0.0
    %2980 = vmatprep.subr.mxu0 0.0
    %2981 = vmatpush1.msra.mxu0 %v2945
    %2982 = vmatprep.subr.mxu0 0.0
    %2983 = vmatpush2.msra.mxu0 0.0
    %2984 = vmatprep.subr.mxu0 0.0
    %2985 = vmatpush2.msra.mxu0 0.0
    %2986 = vmatprep.subr.mxu0 0.0
    %2987 = vmatpush2.msra.mxu0 0.0
    %2988 = vmatprep.subr.mxu0 0.0
    %2989 = vmatpush2.msra.mxu0 0.0
    %2990 = vmatprep.subr.mxu0 0.0
    %2991 = vmatpush2.msra.mxu0 0.0
    %2992 = vmatprep.subr.mxu0 0.0
    %2993 = vmatpush2.msra.mxu0 0.0
    %2994 = vmatprep.subr.mxu0 0.0
    %2995 = vmatpush2.msra.mxu0 0.0
    %2996 = vmatprep.subr.mxu0 0.0
    %2997 = vmatpush2.msra.mxu0 0.0
    %2998 = vmatprep.subr.mxu0 0.0
    %2999 = vmatpush2.msra.mxu0 0.0
    %3000 = vmatprep.subr.mxu0 0.0
    %3001 = vmatpush2.msra.mxu0 0.0
    %3002 = vmatprep.subr.mxu0 0.0
    %3003 = vmatpush2.msra.mxu0 0.0
    %3004 = vmatprep.subr.mxu0 0.0
    %3005 = vmatpush2.msra.mxu0 0.0
    %3006 = vmatprep.subr.mxu0 0.0
    %3007 = vmatpush2.msra.mxu0 0.0
    %3008 = vmatprep.subr.mxu0 0.0
    %3009 = vmatpush2.msra.mxu0 0.0
    %3010 = vmatprep.subr.mxu0 0.0
    %3011 = vmatpush2.msra.mxu0 0.0
    %3012 = vmatprep.subr.mxu0 0.0
    %3013 = vmatpush2.msra.mxu0 0.0
    %3014 = vmatprep.mubr.f32.mxu0 0.0
    %3015 = vmatmul.mubr.f32.gmra.mxu0 %v2948
    %v3016 = vpop.f32.mrf.mxu0
    %v3017 = vadd.f32 0.0, %v3016
    %v3018 = vpop.f32.mrf.mxu0
    %3019 = vdwg.mxu0
    %3020 = vrot.lane.b32.xlu0 %v2013, 64
    %v3021 = vpop.permute.xlu0 %3020
    %v3024 = vsel %vm185, %v2712, 0
    %3026 = vmatprep.subr.mxu0 0.0
    %3027 = vmatpush1.msra.mxu0 0.0
    %3028 = vmatprep.subr.mxu0 0.0
    %3029 = vmatpush1.msra.mxu0 0.0
    %3030 = vmatprep.subr.mxu0 0.0
    %3031 = vmatpush1.msra.mxu0 0.0
    %3032 = vmatprep.subr.mxu0 0.0
    %3033 = vmatpush1.msra.mxu0 0.0
    %3034 = vmatprep.subr.mxu0 0.0
    %3035 = vmatpush1.msra.mxu0 0.0
    %3036 = vmatprep.subr.mxu0 0.0
    %3037 = vmatpush1.msra.mxu0 0.0
    %3038 = vmatprep.subr.mxu0 0.0
    %3039 = vmatpush1.msra.mxu0 0.0
    %3040 = vmatprep.subr.mxu0 0.0
    %3041 = vmatpush1.msra.mxu0 0.0
    %3042 = vmatprep.subr.mxu0 0.0
    %3043 = vmatpush1.msra.mxu0 0.0
    %3044 = vmatprep.subr.mxu0 0.0
    %3045 = vmatpush1.msra.mxu0 0.0
    %3046 = vmatprep.subr.mxu0 0.0
    %3047 = vmatpush1.msra.mxu0 0.0
    %3048 = vmatprep.subr.mxu0 0.0
    %3049 = vmatpush1.msra.mxu0 0.0
    %3050 = vmatprep.subr.mxu0 0.0
    %3051 = vmatpush1.msra.mxu0 0.0
    %3052 = vmatprep.subr.mxu0 0.0
    %3053 = vmatpush1.msra.mxu0 0.0
    %3054 = vmatprep.subr.mxu0 0.0
    %3055 = vmatpush1.msra.mxu0 0.0
    %3056 = vmatprep.subr.mxu0 0.0
    %3057 = vmatpush1.msra.mxu0 %v3021
    %3058 = vmatprep.subr.mxu0 0.0
    %3059 = vmatpush2.msra.mxu0 0.0
    %3060 = vmatprep.subr.mxu0 0.0
    %3061 = vmatpush2.msra.mxu0 0.0
    %3062 = vmatprep.subr.mxu0 0.0
    %3063 = vmatpush2.msra.mxu0 0.0
    %3064 = vmatprep.subr.mxu0 0.0
    %3065 = vmatpush2.msra.mxu0 0.0
    %3066 = vmatprep.subr.mxu0 0.0
    %3067 = vmatpush2.msra.mxu0 0.0
    %3068 = vmatprep.subr.mxu0 0.0
    %3069 = vmatpush2.msra.mxu0 0.0
    %3070 = vmatprep.subr.mxu0 0.0
    %3071 = vmatpush2.msra.mxu0 0.0
    %3072 = vmatprep.subr.mxu0 0.0
    %3073 = vmatpush2.msra.mxu0 0.0
    %3074 = vmatprep.subr.mxu0 0.0
    %3075 = vmatpush2.msra.mxu0 0.0
    %3076 = vmatprep.subr.mxu0 0.0
    %3077 = vmatpush2.msra.mxu0 0.0
    %3078 = vmatprep.subr.mxu0 0.0
    %3079 = vmatpush2.msra.mxu0 0.0
    %3080 = vmatprep.subr.mxu0 0.0
    %3081 = vmatpush2.msra.mxu0 0.0
    %3082 = vmatprep.subr.mxu0 0.0
    %3083 = vmatpush2.msra.mxu0 0.0
    %3084 = vmatprep.subr.mxu0 0.0
    %3085 = vmatpush2.msra.mxu0 0.0
    %3086 = vmatprep.subr.mxu0 0.0
    %3087 = vmatpush2.msra.mxu0 0.0
    %3088 = vmatprep.subr.mxu0 0.0
    %3089 = vmatpush2.msra.mxu0 0.0
    %3090 = vmatprep.mubr.f32.mxu0 0.0
    %3091 = vmatmul.mubr.f32.gmra.mxu0 %v3024
    %v3092 = vpop.f32.mrf.mxu0
    %v3093 = vadd.f32 0.0, %v3092
    %v3094 = vpop.f32.mrf.mxu0
    %3095 = vdwg.mxu0
    %3096 = vrot.lane.b32.xlu0 %v2015, 64
    %v3097 = vpop.permute.xlu0 %3096
    %v3100 = vsel %vm185, %v2713, 0
    %3102 = vmatprep.subr.mxu0 0.0
    %3103 = vmatpush1.msra.mxu0 0.0
    %3104 = vmatprep.subr.mxu0 0.0
    %3105 = vmatpush1.msra.mxu0 0.0
    %3106 = vmatprep.subr.mxu0 0.0
    %3107 = vmatpush1.msra.mxu0 0.0
    %3108 = vmatprep.subr.mxu0 0.0
    %3109 = vmatpush1.msra.mxu0 0.0
    %3110 = vmatprep.subr.mxu0 0.0
    %3111 = vmatpush1.msra.mxu0 0.0
    %3112 = vmatprep.subr.mxu0 0.0
    %3113 = vmatpush1.msra.mxu0 0.0
    %3114 = vmatprep.subr.mxu0 0.0
    %3115 = vmatpush1.msra.mxu0 0.0
    %3116 = vmatprep.subr.mxu0 0.0
    %3117 = vmatpush1.msra.mxu0 0.0
    %3118 = vmatprep.subr.mxu0 0.0
    %3119 = vmatpush1.msra.mxu0 0.0
    %3120 = vmatprep.subr.mxu0 0.0
    %3121 = vmatpush1.msra.mxu0 0.0
    %3122 = vmatprep.subr.mxu0 0.0
    %3123 = vmatpush1.msra.mxu0 0.0
    %3124 = vmatprep.subr.mxu0 0.0
    %3125 = vmatpush1.msra.mxu0 0.0
    %3126 = vmatprep.subr.mxu0 0.0
    %3127 = vmatpush1.msra.mxu0 0.0
    %3128 = vmatprep.subr.mxu0 0.0
    %3129 = vmatpush1.msra.mxu0 0.0
    %3130 = vmatprep.subr.mxu0 0.0
    %3131 = vmatpush1.msra.mxu0 0.0
    %3132 = vmatprep.subr.mxu0 0.0
    %3133 = vmatpush1.msra.mxu0 %v3097
    %3134 = vmatprep.subr.mxu0 0.0
    %3135 = vmatpush2.msra.mxu0 0.0
    %3136 = vmatprep.subr.mxu0 0.0
    %3137 = vmatpush2.msra.mxu0 0.0
    %3138 = vmatprep.subr.mxu0 0.0
    %3139 = vmatpush2.msra.mxu0 0.0
    %3140 = vmatprep.subr.mxu0 0.0
    %3141 = vmatpush2.msra.mxu0 0.0
    %3142 = vmatprep.subr.mxu0 0.0
    %3143 = vmatpush2.msra.mxu0 0.0
    %3144 = vmatprep.subr.mxu0 0.0
    %3145 = vmatpush2.msra.mxu0 0.0
    %3146 = vmatprep.subr.mxu0 0.0
    %3147 = vmatpush2.msra.mxu0 0.0
    %3148 = vmatprep.subr.mxu0 0.0
    %3149 = vmatpush2.msra.mxu0 0.0
    %3150 = vmatprep.subr.mxu0 0.0
    %3151 = vmatpush2.msra.mxu0 0.0
    %3152 = vmatprep.subr.mxu0 0.0
    %3153 = vmatpush2.msra.mxu0 0.0
    %3154 = vmatprep.subr.mxu0 0.0
    %3155 = vmatpush2.msra.mxu0 0.0
    %3156 = vmatprep.subr.mxu0 0.0
    %3157 = vmatpush2.msra.mxu0 0.0
    %3158 = vmatprep.subr.mxu0 0.0
    %3159 = vmatpush2.msra.mxu0 0.0
    %3160 = vmatprep.subr.mxu0 0.0
    %3161 = vmatpush2.msra.mxu0 0.0
    %3162 = vmatprep.subr.mxu0 0.0
    %3163 = vmatpush2.msra.mxu0 0.0
    %3164 = vmatprep.subr.mxu0 0.0
    %3165 = vmatpush2.msra.mxu0 0.0
    %3166 = vmatprep.mubr.f32.mxu0 0.0
    %3167 = vmatmul.mubr.f32.gmra.mxu0 %v3100
    %v3168 = vpop.f32.mrf.mxu0
    %v3169 = vadd.f32 0.0, %v3168
    %v3170 = vpop.f32.mrf.mxu0
    %3171 = vdwg.mxu0
    %3172 = vrot.lane.b32.xlu0 %v2017, 64
    %v3173 = vpop.permute.xlu0 %3172
    %v3176 = vsel %vm185, %v2714, 0
    %3178 = vmatprep.subr.mxu0 0.0
    %3179 = vmatpush1.msra.mxu0 0.0
    %3180 = vmatprep.subr.mxu0 0.0
    %3181 = vmatpush1.msra.mxu0 0.0
    %3182 = vmatprep.subr.mxu0 0.0
    %3183 = vmatpush1.msra.mxu0 0.0
    %3184 = vmatprep.subr.mxu0 0.0
    %3185 = vmatpush1.msra.mxu0 0.0
    %3186 = vmatprep.subr.mxu0 0.0
    %3187 = vmatpush1.msra.mxu0 0.0
    %3188 = vmatprep.subr.mxu0 0.0
    %3189 = vmatpush1.msra.mxu0 0.0
    %3190 = vmatprep.subr.mxu0 0.0
    %3191 = vmatpush1.msra.mxu0 0.0
    %3192 = vmatprep.subr.mxu0 0.0
    %3193 = vmatpush1.msra.mxu0 0.0
    %3194 = vmatprep.subr.mxu0 0.0
    %3195 = vmatpush1.msra.mxu0 0.0
    %3196 = vmatprep.subr.mxu0 0.0
    %3197 = vmatpush1.msra.mxu0 0.0
    %3198 = vmatprep.subr.mxu0 0.0
    %3199 = vmatpush1.msra.mxu0 0.0
    %3200 = vmatprep.subr.mxu0 0.0
    %3201 = vmatpush1.msra.mxu0 0.0
    %3202 = vmatprep.subr.mxu0 0.0
    %3203 = vmatpush1.msra.mxu0 0.0
    %3204 = vmatprep.subr.mxu0 0.0
    %3205 = vmatpush1.msra.mxu0 0.0
    %3206 = vmatprep.subr.mxu0 0.0
    %3207 = vmatpush1.msra.mxu0 0.0
    %3208 = vmatprep.subr.mxu0 0.0
    %3209 = vmatpush1.msra.mxu0 %v3173
    %3210 = vmatprep.subr.mxu0 0.0
    %3211 = vmatpush2.msra.mxu0 0.0
    %3212 = vmatprep.subr.mxu0 0.0
    %3213 = vmatpush2.msra.mxu0 0.0
    %3214 = vmatprep.subr.mxu0 0.0
    %3215 = vmatpush2.msra.mxu0 0.0
    %3216 = vmatprep.subr.mxu0 0.0
    %3217 = vmatpush2.msra.mxu0 0.0
    %3218 = vmatprep.subr.mxu0 0.0
    %3219 = vmatpush2.msra.mxu0 0.0
    %3220 = vmatprep.subr.mxu0 0.0
    %3221 = vmatpush2.msra.mxu0 0.0
    %3222 = vmatprep.subr.mxu0 0.0
    %3223 = vmatpush2.msra.mxu0 0.0
    %3224 = vmatprep.subr.mxu0 0.0
    %3225 = vmatpush2.msra.mxu0 0.0
    %3226 = vmatprep.subr.mxu0 0.0
    %3227 = vmatpush2.msra.mxu0 0.0
    %3228 = vmatprep.subr.mxu0 0.0
    %3229 = vmatpush2.msra.mxu0 0.0
    %3230 = vmatprep.subr.mxu0 0.0
    %3231 = vmatpush2.msra.mxu0 0.0
    %3232 = vmatprep.subr.mxu0 0.0
    %3233 = vmatpush2.msra.mxu0 0.0
    %3234 = vmatprep.subr.mxu0 0.0
    %3235 = vmatpush2.msra.mxu0 0.0
    %3236 = vmatprep.subr.mxu0 0.0
    %3237 = vmatpush2.msra.mxu0 0.0
    %3238 = vmatprep.subr.mxu0 0.0
    %3239 = vmatpush2.msra.mxu0 0.0
    %3240 = vmatprep.subr.mxu0 0.0
    %3241 = vmatpush2.msra.mxu0 0.0
    %3242 = vmatprep.mubr.f32.mxu0 0.0
    %3243 = vmatmul.mubr.f32.gmra.mxu0 %v3176
    %v3244 = vpop.f32.mrf.mxu0
    %v3245 = vadd.f32 0.0, %v3244
    %v3246 = vpop.f32.mrf.mxu0
    %3247 = vdwg.mxu0
    %3248 = vrot.lane.b32.xlu0 %v2019, 64
    %v3249 = vpop.permute.xlu0 %3248
    %v3252 = vsel %vm185, %v2715, 0
    %3254 = vmatprep.subr.mxu0 0.0
    %3255 = vmatpush1.msra.mxu0 0.0
    %3256 = vmatprep.subr.mxu0 0.0
    %3257 = vmatpush1.msra.mxu0 0.0
    %3258 = vmatprep.subr.mxu0 0.0
    %3259 = vmatpush1.msra.mxu0 0.0
    %3260 = vmatprep.subr.mxu0 0.0
    %3261 = vmatpush1.msra.mxu0 0.0
    %3262 = vmatprep.subr.mxu0 0.0
    %3263 = vmatpush1.msra.mxu0 0.0
    %3264 = vmatprep.subr.mxu0 0.0
    %3265 = vmatpush1.msra.mxu0 0.0
    %3266 = vmatprep.subr.mxu0 0.0
    %3267 = vmatpush1.msra.mxu0 0.0
    %3268 = vmatprep.subr.mxu0 0.0
    %3269 = vmatpush1.msra.mxu0 0.0
    %3270 = vmatprep.subr.mxu0 0.0
    %3271 = vmatpush1.msra.mxu0 0.0
    %3272 = vmatprep.subr.mxu0 0.0
    %3273 = vmatpush1.msra.mxu0 0.0
    %3274 = vmatprep.subr.mxu0 0.0
    %3275 = vmatpush1.msra.mxu0 0.0
    %3276 = vmatprep.subr.mxu0 0.0
    %3277 = vmatpush1.msra.mxu0 0.0
    %3278 = vmatprep.subr.mxu0 0.0
    %3279 = vmatpush1.msra.mxu0 0.0
    %3280 = vmatprep.subr.mxu0 0.0
    %3281 = vmatpush1.msra.mxu0 0.0
    %3282 = vmatprep.subr.mxu0 0.0
    %3283 = vmatpush1.msra.mxu0 0.0
    %3284 = vmatprep.subr.mxu0 0.0
    %3285 = vmatpush1.msra.mxu0 %v3249
    %3286 = vmatprep.subr.mxu0 0.0
    %3287 = vmatpush2.msra.mxu0 0.0
    %3288 = vmatprep.subr.mxu0 0.0
    %3289 = vmatpush2.msra.mxu0 0.0
    %3290 = vmatprep.subr.mxu0 0.0
    %3291 = vmatpush2.msra.mxu0 0.0
    %3292 = vmatprep.subr.mxu0 0.0
    %3293 = vmatpush2.msra.mxu0 0.0
    %3294 = vmatprep.subr.mxu0 0.0
    %3295 = vmatpush2.msra.mxu0 0.0
    %3296 = vmatprep.subr.mxu0 0.0
    %3297 = vmatpush2.msra.mxu0 0.0
    %3298 = vmatprep.subr.mxu0 0.0
    %3299 = vmatpush2.msra.mxu0 0.0
    %3300 = vmatprep.subr.mxu0 0.0
    %3301 = vmatpush2.msra.mxu0 0.0
    %3302 = vmatprep.subr.mxu0 0.0
    %3303 = vmatpush2.msra.mxu0 0.0
    %3304 = vmatprep.subr.mxu0 0.0
    %3305 = vmatpush2.msra.mxu0 0.0
    %3306 = vmatprep.subr.mxu0 0.0
    %3307 = vmatpush2.msra.mxu0 0.0
    %3308 = vmatprep.subr.mxu0 0.0
    %3309 = vmatpush2.msra.mxu0 0.0
    %3310 = vmatprep.subr.mxu0 0.0
    %3311 = vmatpush2.msra.mxu0 0.0
    %3312 = vmatprep.subr.mxu0 0.0
    %3313 = vmatpush2.msra.mxu0 0.0
    %3314 = vmatprep.subr.mxu0 0.0
    %3315 = vmatpush2.msra.mxu0 0.0
    %3316 = vmatprep.subr.mxu0 0.0
    %3317 = vmatpush2.msra.mxu0 0.0
    %3318 = vmatprep.mubr.f32.mxu0 0.0
    %3319 = vmatmul.mubr.f32.gmra.mxu0 %v3252
    %v3320 = vpop.f32.mrf.mxu0
    %v3321 = vadd.f32 0.0, %v3320
    %v3322 = vpop.f32.mrf.mxu0
    %3323 = vdwg.mxu0
    %3326 = vrot.lane.b32.xlu0 %v2941, 8
    %v3327 = vpop.permute.xlu0 %3326
    %3328 = vrot.lane.b32.xlu0 %v3017, 8
    %v3329 = vpop.permute.xlu0 %3328
    %3334 = vrot.lane.b32.xlu0 %v3093, 16
    %v3335 = vpop.permute.xlu0 %3334
    %3336 = vrot.lane.b32.xlu0 %v3169, 16
    %v3337 = vpop.permute.xlu0 %3336
    %3342 = vrot.lane.b32.xlu0 %v3245, 24
    %v3343 = vpop.permute.xlu0 %3342
    %3344 = vrot.lane.b32.xlu0 %v3321, 24
    %v3345 = vpop.permute.xlu0 %3344
    %v3348 = vsel %vm185, %v2789, %v3327
    %v3349 = vsel %vm185, %v2865, %v3329
    %v3350 = vsel %vm1514, %v3348, %v3335
    %v3351 = vsel %vm1514, %v3349, %v3337
    %v3352 = vsel %vm1517, %v3350, %v3343
    %v3353 = vsel %vm1517, %v3351, %v3345
    %s3354 = scalar_lea.vmem %s4, 32
    %v3355 = vld [vmem:[%s3354] sm:$0xff]
    %v3356 = vld [vmem:[%s3354 + $0x8] sm:$0xff]
    %v3357 = vld [vmem:[%s3354 + $0x10] sm:$0xff]
    %v3358 = vld [vmem:[%s3354 + $0x18] sm:$0xff]
    %s3359 = scalar_lea.vmem %s5, 1
    %v3360 = vld [vmem:[%s3359] sm:$0x1]
    %v3362 = vlaneseq
    %v3363 = vshrl.u32 %v3362, 7
    %v3364 = vsub.s32 0, %v3363
    %v3365 = vrot.slane %v3360, %v3364
    %v3368 = vsel %vm71, %v3352, 0
    %v3371 = vsel %vm71, %v3353, 0
    %3373 = vmatprep.subr.mxu0 0.0
    %3374 = vmatpush1.msra.mxu0 0.0
    %3375 = vmatprep.subr.mxu0 0.0
    %3376 = vmatpush1.msra.mxu0 0.0
    %3377 = vmatprep.subr.mxu0 0.0
    %3378 = vmatpush1.msra.mxu0 0.0
    %3379 = vmatprep.subr.mxu0 0.0
    %3380 = vmatpush1.msra.mxu0 0.0
    %3381 = vmatprep.subr.mxu0 0.0
    %3382 = vmatpush1.msra.mxu0 0.0
    %3383 = vmatprep.subr.mxu0 0.0
    %3384 = vmatpush1.msra.mxu0 0.0
    %3385 = vmatprep.subr.mxu0 0.0
    %3386 = vmatpush1.msra.mxu0 0.0
    %3387 = vmatprep.subr.mxu0 0.0
    %3388 = vmatpush1.msra.mxu0 0.0
    %3389 = vmatprep.subr.mxu0 0.0
    %3390 = vmatpush1.msra.mxu0 0.0
    %3391 = vmatprep.subr.mxu0 0.0
    %3392 = vmatpush1.msra.mxu0 0.0
    %3393 = vmatprep.subr.mxu0 0.0
    %3394 = vmatpush1.msra.mxu0 0.0
    %3395 = vmatprep.subr.mxu0 0.0
    %3396 = vmatpush1.msra.mxu0 0.0
    %3397 = vmatprep.subr.mxu0 0.0
    %3398 = vmatpush1.msra.mxu0 %v3358
    %3399 = vmatprep.subr.mxu0 0.0
    %3400 = vmatpush1.msra.mxu0 %v3357
    %3401 = vmatprep.subr.mxu0 0.0
    %3402 = vmatpush1.msra.mxu0 %v3356
    %3403 = vmatprep.subr.mxu0 0.0
    %3404 = vmatpush1.msra.mxu0 %v3355
    %3405 = vmatprep.subr.mxu0 0.0
    %3406 = vmatpush2.msra.mxu0 0.0
    %3407 = vmatprep.subr.mxu0 0.0
    %3408 = vmatpush2.msra.mxu0 0.0
    %3409 = vmatprep.subr.mxu0 0.0
    %3410 = vmatpush2.msra.mxu0 0.0
    %3411 = vmatprep.subr.mxu0 0.0
    %3412 = vmatpush2.msra.mxu0 0.0
    %3413 = vmatprep.subr.mxu0 0.0
    %3414 = vmatpush2.msra.mxu0 0.0
    %3415 = vmatprep.subr.mxu0 0.0
    %3416 = vmatpush2.msra.mxu0 0.0
    %3417 = vmatprep.subr.mxu0 0.0
    %3418 = vmatpush2.msra.mxu0 0.0
    %3419 = vmatprep.subr.mxu0 0.0
    %3420 = vmatpush2.msra.mxu0 0.0
    %3421 = vmatprep.subr.mxu0 0.0
    %3422 = vmatpush2.msra.mxu0 0.0
    %3423 = vmatprep.subr.mxu0 0.0
    %3424 = vmatpush2.msra.mxu0 0.0
    %3425 = vmatprep.subr.mxu0 0.0
    %3426 = vmatpush2.msra.mxu0 0.0
    %3427 = vmatprep.subr.mxu0 0.0
    %3428 = vmatpush2.msra.mxu0 0.0
    %3429 = vmatprep.subr.mxu0 0.0
    %3430 = vmatpush2.msra.mxu0 0.0
    %3431 = vmatprep.subr.mxu0 0.0
    %3432 = vmatpush2.msra.mxu0 0.0
    %3433 = vmatprep.subr.mxu0 0.0
    %3434 = vmatpush2.msra.mxu0 0.0
    %3435 = vmatprep.subr.mxu0 0.0
    %3436 = vmatpush2.msra.mxu0 0.0
    %3437 = vmatprep.mubr.f32.mxu0 0.0
    %3438 = vmatmul.mubr.f32.gmra.mxu0 %v3368
    %v3439 = vpop.f32.mrf.mxu0
    %v3440 = vadd.f32 %v3365, %v3439
    %v3441 = vpop.f32.mrf.mxu0
    %3442 = vmatprep.mubr.f32.mxu0 0.0
    %3443 = vmatmul.mubr.f32.gmra.mxu0 %v3371
    %v3444 = vpop.f32.mrf.mxu0
    %v3445 = vadd.f32 %v3365, %v3444
    %v3446 = vpop.f32.mrf.mxu0
    %3447 = vdwg.mxu0
    %v3448 = vadd.f32 %v1894, %v3440
    %v3449 = vadd.f32 %v1895, %v3445
    %s3450 = scalar_lea.vmem %s6, 1
    %v3451 = vld [vmem:[%s3450] sm:$0x1]
    %s3452 = scalar_lea.vmem %s7, 1
    %v3453 = vld [vmem:[%s3452] sm:$0x1]
    %v3454 = vsel %vm71, %v3448, 0.0
    %3455 = vadd.xlane.f32.xlu0 %v3454
    %v3456 = vpop.xlane.xlu0 %3455
    %v3457 = vsel %vm71, %v3449, 0.0
    %3458 = vadd.xlane.f32.xlu0 %v3457
    %v3459 = vpop.xlane.xlu0 %3458
    %v3460 = vmul.f32 %v3456, %v1622
    %v3461 = vmul.f32 %v3459, %v1622
    %v3462 = vsub.f32 %v3448, %v3460
    %v3463 = vsub.f32 %v3449, %v3461
    %v3464 = vmul.f32 %v3462, %v3462
    %v3465 = vmul.f32 %v3463, %v3463
    %v3466 = vsel %vm71, %v3464, 0.0
    %3467 = vadd.xlane.f32.xlu0 %v3466
    %v3468 = vpop.xlane.xlu0 %3467
    %v3469 = vsel %vm71, %v3465, 0.0
    %3470 = vadd.xlane.f32.xlu0 %v3469
    %v3471 = vpop.xlane.xlu0 %3470
    %v3472 = vmul.f32 %v3468, %v1622
    %v3473 = vmul.f32 %v3471, %v1622
    %v3474 = vadd.f32 %v3472, 1e-05
    %v3475 = vadd.f32 %v3473, 1e-05
    %v3476 = vrsqrt.pop %v3474
    %v3477 = vrsqrt.pop %v3475
    %v3478 = vmul.f32 %v3462, %v3476
    %v3479 = vmul.f32 %v3463, %v3477
    %v3481 = vlaneseq
    %v3482 = vshrl.u32 %v3481, 7
    %v3483 = vsub.s32 0, %v3482
    %v3484 = vrot.slane %v3451, %v3483
    %v3486 = vmul.f32 %v3478, %v3484
    %v3487 = vmul.f32 %v3479, %v3484
    %v3489 = vlaneseq
    %v3490 = vshrl.u32 %v3489, 7
    %v3491 = vsub.s32 0, %v3490
    %v3492 = vrot.slane %v3453, %v3491
    %v3494 = vadd.f32 %v3486, %v3492
    %v3495 = vadd.f32 %v3487, %v3492
    %s3496 = scalar_lea.vmem %s8, 32
    %v3497 = vld [vmem:[%s3496] sm:$0xff]
    %v3498 = vld [vmem:[%s3496 + $0x8] sm:$0xff]
    %v3499 = vld [vmem:[%s3496 + $0x10] sm:$0xff]
    %v3500 = vld [vmem:[%s3496 + $0x18] sm:$0xff]
    %s3501 = scalar_lea.vmem %s9, 1
    %v3502 = vld [vmem:[%s3501] sm:$0x1]
    %v3504 = vlaneseq
    %v3505 = vshrl.u32 %v3504, 7
    %v3506 = vsub.s32 0, %v3505
    %v3507 = vrot.slane %v3502, %v3506
    %v3510 = vsel %vm71, %v3494, 0
    %v3513 = vsel %vm71, %v3495, 0
    %3515 = vmatprep.subr.mxu0 0.0
    %3516 = vmatpush1.msra.mxu0 0.0
    %3517 = vmatprep.subr.mxu0 0.0
    %3518 = vmatpush1.msra.mxu0 0.0
    %3519 = vmatprep.subr.mxu0 0.0
    %3520 = vmatpush1.msra.mxu0 0.0
    %3521 = vmatprep.subr.mxu0 0.0
    %3522 = vmatpush1.msra.mxu0 0.0
    %3523 = vmatprep.subr.mxu0 0.0
    %3524 = vmatpush1.msra.mxu0 0.0
    %3525 = vmatprep.subr.mxu0 0.0
    %3526 = vmatpush1.msra.mxu0 0.0
    %3527 = vmatprep.subr.mxu0 0.0
    %3528 = vmatpush1.msra.mxu0 0.0
    %3529 = vmatprep.subr.mxu0 0.0
    %3530 = vmatpush1.msra.mxu0 0.0
    %3531 = vmatprep.subr.mxu0 0.0
    %3532 = vmatpush1.msra.mxu0 0.0
    %3533 = vmatprep.subr.mxu0 0.0
    %3534 = vmatpush1.msra.mxu0 0.0
    %3535 = vmatprep.subr.mxu0 0.0
    %3536 = vmatpush1.msra.mxu0 0.0
    %3537 = vmatprep.subr.mxu0 0.0
    %3538 = vmatpush1.msra.mxu0 0.0
    %3539 = vmatprep.subr.mxu0 0.0
    %3540 = vmatpush1.msra.mxu0 %v3500
    %3541 = vmatprep.subr.mxu0 0.0
    %3542 = vmatpush1.msra.mxu0 %v3499
    %3543 = vmatprep.subr.mxu0 0.0
    %3544 = vmatpush1.msra.mxu0 %v3498
    %3545 = vmatprep.subr.mxu0 0.0
    %3546 = vmatpush1.msra.mxu0 %v3497
    %3547 = vmatprep.subr.mxu0 0.0
    %3548 = vmatpush2.msra.mxu0 0.0
    %3549 = vmatprep.subr.mxu0 0.0
    %3550 = vmatpush2.msra.mxu0 0.0
    %3551 = vmatprep.subr.mxu0 0.0
    %3552 = vmatpush2.msra.mxu0 0.0
    %3553 = vmatprep.subr.mxu0 0.0
    %3554 = vmatpush2.msra.mxu0 0.0
    %3555 = vmatprep.subr.mxu0 0.0
    %3556 = vmatpush2.msra.mxu0 0.0
    %3557 = vmatprep.subr.mxu0 0.0
    %3558 = vmatpush2.msra.mxu0 0.0
    %3559 = vmatprep.subr.mxu0 0.0
    %3560 = vmatpush2.msra.mxu0 0.0
    %3561 = vmatprep.subr.mxu0 0.0
    %3562 = vmatpush2.msra.mxu0 0.0
    %3563 = vmatprep.subr.mxu0 0.0
    %3564 = vmatpush2.msra.mxu0 0.0
    %3565 = vmatprep.subr.mxu0 0.0
    %3566 = vmatpush2.msra.mxu0 0.0
    %3567 = vmatprep.subr.mxu0 0.0
    %3568 = vmatpush2.msra.mxu0 0.0
    %3569 = vmatprep.subr.mxu0 0.0
    %3570 = vmatpush2.msra.mxu0 0.0
    %3571 = vmatprep.subr.mxu0 0.0
    %3572 = vmatpush2.msra.mxu0 0.0
    %3573 = vmatprep.subr.mxu0 0.0
    %3574 = vmatpush2.msra.mxu0 0.0
    %3575 = vmatprep.subr.mxu0 0.0
    %3576 = vmatpush2.msra.mxu0 0.0
    %3577 = vmatprep.subr.mxu0 0.0
    %3578 = vmatpush2.msra.mxu0 0.0
    %3579 = vmatprep.mubr.f32.mxu0 0.0
    %3580 = vmatmul.mubr.f32.gmra.mxu0 %v3510
    %v3581 = vpop.f32.mrf.mxu0
    %v3582 = vadd.f32 %v3507, %v3581
    %v3583 = vpop.f32.mrf.mxu0
    %3584 = vmatprep.mubr.f32.mxu0 0.0
    %3585 = vmatmul.mubr.f32.gmra.mxu0 %v3513
    %v3586 = vpop.f32.mrf.mxu0
    %v3587 = vadd.f32 %v3507, %v3586
    %v3588 = vpop.f32.mrf.mxu0
    %3589 = vdwg.mxu0
    %v3590 = vmax.f32 %v3582, 0.0
    %v3591 = vmax.f32 %v3587, 0.0
    %s3592 = scalar_lea.vmem %s10, 64
    %v3593 = vld [vmem:[%s3592] sm:$0xff]
    %v3594 = vld [vmem:[%s3592 + $0x8] sm:$0xff]
    %v3595 = vld [vmem:[%s3592 + $0x10] sm:$0xff]
    %v3596 = vld [vmem:[%s3592 + $0x18] sm:$0xff]
    %v3597 = vld [vmem:[%s3592 + $0x20] sm:$0xff]
    %v3598 = vld [vmem:[%s3592 + $0x28] sm:$0xff]
    %v3599 = vld [vmem:[%s3592 + $0x30] sm:$0xff]
    %v3600 = vld [vmem:[%s3592 + $0x38] sm:$0xff]
    %s3601 = scalar_lea.vmem %s11, 1
    %v3602 = vld [vmem:[%s3601] sm:$0x1]
    %v3604 = vlaneseq
    %v3605 = vshrl.u32 %v3604, 7
    %v3606 = vsub.s32 0, %v3605
    %v3607 = vrot.slane %v3602, %v3606
    %v3610 = vsel %vm1768, %v3590, 0
    %v3613 = vsel %vm1768, %v3591, 0
    %3615 = vmatprep.subr.mxu0 0.0
    %3616 = vmatpush1.msra.mxu0 0.0
    %3617 = vmatprep.subr.mxu0 0.0
    %3618 = vmatpush1.msra.mxu0 0.0
    %3619 = vmatprep.subr.mxu0 0.0
    %3620 = vmatpush1.msra.mxu0 0.0
    %3621 = vmatprep.subr.mxu0 0.0
    %3622 = vmatpush1.msra.mxu0 0.0
    %3623 = vmatprep.subr.mxu0 0.0
    %3624 = vmatpush1.msra.mxu0 0.0
    %3625 = vmatprep.subr.mxu0 0.0
    %3626 = vmatpush1.msra.mxu0 0.0
    %3627 = vmatprep.subr.mxu0 0.0
    %3628 = vmatpush1.msra.mxu0 0.0
    %3629 = vmatprep.subr.mxu0 0.0
    %3630 = vmatpush1.msra.mxu0 0.0
    %3631 = vmatprep.subr.mxu0 0.0
    %3632 = vmatpush1.msra.mxu0 %v3600
    %3633 = vmatprep.subr.mxu0 0.0
    %3634 = vmatpush1.msra.mxu0 %v3599
    %3635 = vmatprep.subr.mxu0 0.0
    %3636 = vmatpush1.msra.mxu0 %v3598
    %3637 = vmatprep.subr.mxu0 0.0
    %3638 = vmatpush1.msra.mxu0 %v3597
    %3639 = vmatprep.subr.mxu0 0.0
    %3640 = vmatpush1.msra.mxu0 %v3596
    %3641 = vmatprep.subr.mxu0 0.0
    %3642 = vmatpush1.msra.mxu0 %v3595
    %3643 = vmatprep.subr.mxu0 0.0
    %3644 = vmatpush1.msra.mxu0 %v3594
    %3645 = vmatprep.subr.mxu0 0.0
    %3646 = vmatpush1.msra.mxu0 %v3593
    %3647 = vmatprep.subr.mxu0 0.0
    %3648 = vmatpush2.msra.mxu0 0.0
    %3649 = vmatprep.subr.mxu0 0.0
    %3650 = vmatpush2.msra.mxu0 0.0
    %3651 = vmatprep.subr.mxu0 0.0
    %3652 = vmatpush2.msra.mxu0 0.0
    %3653 = vmatprep.subr.mxu0 0.0
    %3654 = vmatpush2.msra.mxu0 0.0
    %3655 = vmatprep.subr.mxu0 0.0
    %3656 = vmatpush2.msra.mxu0 0.0
    %3657 = vmatprep.subr.mxu0 0.0
    %3658 = vmatpush2.msra.mxu0 0.0
    %3659 = vmatprep.subr.mxu0 0.0
    %3660 = vmatpush2.msra.mxu0 0.0
    %3661 = vmatprep.subr.mxu0 0.0
    %3662 = vmatpush2.msra.mxu0 0.0
    %3663 = vmatprep.subr.mxu0 0.0
    %3664 = vmatpush2.msra.mxu0 0.0
    %3665 = vmatprep.subr.mxu0 0.0
    %3666 = vmatpush2.msra.mxu0 0.0
    %3667 = vmatprep.subr.mxu0 0.0
    %3668 = vmatpush2.msra.mxu0 0.0
    %3669 = vmatprep.subr.mxu0 0.0
    %3670 = vmatpush2.msra.mxu0 0.0
    %3671 = vmatprep.subr.mxu0 0.0
    %3672 = vmatpush2.msra.mxu0 0.0
    %3673 = vmatprep.subr.mxu0 0.0
    %3674 = vmatpush2.msra.mxu0 0.0
    %3675 = vmatprep.subr.mxu0 0.0
    %3676 = vmatpush2.msra.mxu0 0.0
    %3677 = vmatprep.subr.mxu0 0.0
    %3678 = vmatpush2.msra.mxu0 0.0
    %3679 = vmatprep.mubr.f32.mxu0 0.0
    %3680 = vmatmul.mubr.f32.gmra.mxu0 %v3610
    %v3681 = vpop.f32.mrf.mxu0
    %v3682 = vadd.f32 %v3607, %v3681
    %v3683 = vpop.f32.mrf.mxu0
    %3684 = vmatprep.mubr.f32.mxu0 0.0
    %3685 = vmatmul.mubr.f32.gmra.mxu0 %v3613
    %v3686 = vpop.f32.mrf.mxu0
    %v3687 = vadd.f32 %v3607, %v3686
    %v3688 = vpop.f32.mrf.mxu0
    %3689 = vdwg.mxu0
    %v3690 = vadd.f32 %v3494, %v3682
    %v3691 = vadd.f32 %v3495, %v3687
    %s3692 = scalar_lea.vmem %s12, 1
    %v3693 = vld [vmem:[%s3692] sm:$0x1]
    %s3694 = scalar_lea.vmem %s13, 1
    %v3695 = vld [vmem:[%s3694] sm:$0x1]
    %v3696 = vsel %vm71, %v3690, 0.0
    %3697 = vadd.xlane.f32.xlu0 %v3696
    %v3698 = vpop.xlane.xlu0 %3697
    %v3699 = vsel %vm71, %v3691, 0.0
    %3700 = vadd.xlane.f32.xlu0 %v3699
    %v3701 = vpop.xlane.xlu0 %3700
    %v3702 = vmul.f32 %v3698, %v1622
    %v3703 = vmul.f32 %v3701, %v1622
    %v3704 = vsub.f32 %v3690, %v3702
    %v3705 = vsub.f32 %v3691, %v3703
    %v3706 = vmul.f32 %v3704, %v3704
    %v3707 = vmul.f32 %v3705, %v3705
    %v3708 = vsel %vm71, %v3706, 0.0
    %3709 = vadd.xlane.f32.xlu0 %v3708
    %v3710 = vpop.xlane.xlu0 %3709
    %v3711 = vsel %vm71, %v3707, 0.0
    %3712 = vadd.xlane.f32.xlu0 %v3711
    %v3713 = vpop.xlane.xlu0 %3712
    %v3714 = vmul.f32 %v3710, %v1622
    %v3715 = vmul.f32 %v3713, %v1622
    %v3716 = vadd.f32 %v3714, 1e-05
    %v3717 = vadd.f32 %v3715, 1e-05
    %v3718 = vrsqrt.pop %v3716
    %v3719 = vrsqrt.pop %v3717
    %v3720 = vmul.f32 %v3704, %v3718
    %v3721 = vmul.f32 %v3705, %v3719
    %v3723 = vlaneseq
    %v3724 = vshrl.u32 %v3723, 7
    %v3725 = vsub.s32 0, %v3724
    %v3726 = vrot.slane %v3693, %v3725
    %v3728 = vmul.f32 %v3720, %v3726
    %v3729 = vmul.f32 %v3721, %v3726
    %v3731 = vlaneseq
    %v3732 = vshrl.u32 %v3731, 7
    %v3733 = vsub.s32 0, %v3732
    %v3734 = vrot.slane %v3695, %v3733
    %v3736 = vadd.f32 %v3728, %v3734
    %v3737 = vadd.f32 %v3729, %v3734
    %v3738 = vsel %vm71, %v3736, 0.0
    %v3739 = vrot.slane %v3738, 4
    %v3740 = vadd.f32 %v3738, %v3739
    %v3741 = vrot.slane %v3740, 2
    %v3742 = vadd.f32 %v3740, %v3741
    %v3743 = vrot.slane %v3742, 1
    %v3744 = vadd.f32 %v3742, %v3743
    %v3745 = vsel %vm71, %v3737, 0.0
    %v3746 = vrot.slane %v3745, 4
    %v3747 = vadd.f32 %v3745, %v3746
    %v3748 = vrot.slane %v3747, 2
    %v3749 = vadd.f32 %v3747, %v3748
    %v3750 = vrot.slane %v3749, 1
    %v3751 = vadd.f32 %v3749, %v3750
    %v3752 = vmul.f32 %v3744, 0.125
    %v3753 = vmul.f32 %v3751, 0.125
    %v3754 = vld [vmem:[%s14] sm:$0xff]
    %v3755 = vld [vmem:[%s14 + $0x8] sm:$0xff]
    %v3756 = vld [vmem:[%s14 + $0x10] sm:$0xff]
    %v3757 = vld [vmem:[%s14 + $0x18] sm:$0xff]
    %v3758 = vld [vmem:[%s15] sm:$0x1]
    %v3760 = vlaneseq
    %v3761 = vshrl.u32 %v3760, 7
    %v3762 = vsub.s32 0, %v3761
    %v3763 = vrot.slane %v3758, %v3762
    %vm3767 = vcmask 1041409
    %v3768 = vsel %vm3767, %v3753, %v3752
    %v3769 = vsel %vm71, %v3768, 0
    %3771 = vmatprep.subr.mxu0 0.0
    %3772 = vmatpush1.msra.mxu0 0.0
    %3773 = vmatprep.subr.mxu0 0.0
    %3774 = vmatpush1.msra.mxu0 0.0
    %3775 = vmatprep.subr.mxu0 0.0
    %3776 = vmatpush1.msra.mxu0 0.0
    %3777 = vmatprep.subr.mxu0 0.0
    %3778 = vmatpush1.msra.mxu0 0.0
    %3779 = vmatprep.subr.mxu0 0.0
    %3780 = vmatpush1.msra.mxu0 0.0
    %3781 = vmatprep.subr.mxu0 0.0
    %3782 = vmatpush1.msra.mxu0 0.0
    %3783 = vmatprep.subr.mxu0 0.0
    %3784 = vmatpush1.msra.mxu0 0.0
    %3785 = vmatprep.subr.mxu0 0.0
    %3786 = vmatpush1.msra.mxu0 0.0
    %3787 = vmatprep.subr.mxu0 0.0
    %3788 = vmatpush1.msra.mxu0 0.0
    %3789 = vmatprep.subr.mxu0 0.0
    %3790 = vmatpush1.msra.mxu0 0.0
    %3791 = vmatprep.subr.mxu0 0.0
    %3792 = vmatpush1.msra.mxu0 0.0
    %3793 = vmatprep.subr.mxu0 0.0
    %3794 = vmatpush1.msra.mxu0 0.0
    %3795 = vmatprep.subr.mxu0 0.0
    %3796 = vmatpush1.msra.mxu0 %v3757
    %3797 = vmatprep.subr.mxu0 0.0
    %3798 = vmatpush1.msra.mxu0 %v3756
    %3799 = vmatprep.subr.mxu0 0.0
    %3800 = vmatpush1.msra.mxu0 %v3755
    %3801 = vmatprep.subr.mxu0 0.0
    %3802 = vmatpush1.msra.mxu0 %v3754
    %3803 = vmatprep.subr.mxu0 0.0
    %3804 = vmatpush2.msra.mxu0 0.0
    %3805 = vmatprep.subr.mxu0 0.0
    %3806 = vmatpush2.msra.mxu0 0.0
    %3807 = vmatprep.subr.mxu0 0.0
    %3808 = vmatpush2.msra.mxu0 0.0
    %3809 = vmatprep.subr.mxu0 0.0
    %3810 = vmatpush2.msra.mxu0 0.0
    %3811 = vmatprep.subr.mxu0 0.0
    %3812 = vmatpush2.msra.mxu0 0.0
    %3813 = vmatprep.subr.mxu0 0.0
    %3814 = vmatpush2.msra.mxu0 0.0
    %3815 = vmatprep.subr.mxu0 0.0
    %3816 = vmatpush2.msra.mxu0 0.0
    %3817 = vmatprep.subr.mxu0 0.0
    %3818 = vmatpush2.msra.mxu0 0.0
    %3819 = vmatprep.subr.mxu0 0.0
    %3820 = vmatpush2.msra.mxu0 0.0
    %3821 = vmatprep.subr.mxu0 0.0
    %3822 = vmatpush2.msra.mxu0 0.0
    %3823 = vmatprep.subr.mxu0 0.0
    %3824 = vmatpush2.msra.mxu0 0.0
    %3825 = vmatprep.subr.mxu0 0.0
    %3826 = vmatpush2.msra.mxu0 0.0
    %3827 = vmatprep.subr.mxu0 0.0
    %3828 = vmatpush2.msra.mxu0 0.0
    %3829 = vmatprep.subr.mxu0 0.0
    %3830 = vmatpush2.msra.mxu0 0.0
    %3831 = vmatprep.subr.mxu0 0.0
    %3832 = vmatpush2.msra.mxu0 0.0
    %3833 = vmatprep.subr.mxu0 0.0
    %3834 = vmatpush2.msra.mxu0 0.0
    %3835 = vmatprep.mubr.f32.mxu0 0.0
    %3836 = vmatmul.mubr.f32.gmra.mxu0 %v3769
    %v3837 = vpop.f32.mrf.mxu0
    %v3838 = vadd.f32 %v3763, %v3837
    %v3839 = vpop.f32.mrf.mxu0
    %3840 = vdwg.mxu0
    %vm3841 = vcmask 9216
    %3842 = vst.msk [vmem:[#allocation2] sm:$0x3] %vm3841, %v3838
    // Predicated region
    $region66: #{emotion_model_forward.1} parent=1 // pred_check
      _
    $region67: #{emotion_model_forward.1} parent=1 // pred_check_branch
      %3844 = sbr.rel (0) target = $region69
    $region68: #{emotion_model_forward.1} parent=1 // pred_region
      %s3846 = ssub.s32 32, 32
      %3847 = vsyncadd [#allocation3], %s3846
      %s3849 = sshll.u32 [#allocation2], 4
      %s3850 = int_to_ptr.vmem [resolvable:$true] %s3849
      %3852 = dma.vmem_to_hbm [thread:$0]  %s3850, 32, %s16, [#allocation3]
    $region69: #{emotion_model_forward.1} parent=1 // pred_fallthru
      _
    // Predicated region
    $region70: #{emotion_model_forward.1} parent=1 // pred_check
      _
    $region71: #{emotion_model_forward.1} parent=1 // pred_check_branch
      %3854 = sbr.rel (0) target = $region73
    $region72: #{emotion_model_forward.1} parent=1 // pred_region
      %3855 = dma.done [#allocation3], 32
    $region73: #{emotion_model_forward.1} parent=1 // pred_fallthru
      _
    %3856 = vsyncpa [#allocation3], 1

</llo_original>
